<compile_context>
chip_gen: v7x
topology: tpu7x:2x2x1
jax: 0.10.0
libtpu: 0.0.40
codegen_flags: <defaults>
</compile_context>

<pallas_src>
import functools

import jax
import jax.numpy as jnp
from jax.experimental import pallas as pl
from jax.experimental.pallas import tpu as pltpu


def _round_up(x, m):
    return ((x + m - 1) // m) * m


def _vmem_budget_bytes():
    """Headroomed VMEM budget derived from the actual device."""
    phys = 64 * 1024 * 1024          # conservative default (v7x per-TC VMEM)
    try:
        info = pltpu.get_tpu_info()
        phys = int(getattr(info, "vmem_capacity_bytes", phys))
    except Exception:
        pass
    # ~40 MiB on 64 MiB parts (v7x), ~80 MiB on 128 MiB parts (v5e/v6e),
    # leaving headroom for compiler-internal scratch and double buffering.
    return (phys * 5) // 8


def _block_vmem_bytes(bb, s, e, hd, l):
    """Rough per-grid-step VMEM footprint for a batch block of bb rows."""
    return (2 * bb * s * e * 2        # double-buffered bf16 H input block
            + bb * s * hd * 4         # f32 tanh intermediate m
            + bb * s * e * 4          # f32 pooled broadcast-multiply temp
            + 2 * bb * (s + l) * 4    # double-buffered f32 outputs
            + e * (hd + l) * 2        # bf16 weights
            + (2 * hd + l) * 4)       # f32 biases / attention vector


def _pick_block_b(batch, s_pad, e, hd, l, budget):
    # Target ~512 merged (B_blk*S_pad) MXU rows per grid step: two full
    # 256-row passes on v6e/v7x, four 128-row passes on v5e.
    bb = _round_up(max(1, -(-512 // s_pad)), 8)
    bb = min(bb, _round_up(batch, 8))
    # Keep >= 2 grid blocks when the batch allows it so the "parallel" grid
    # axis can shard across v7x's two TensorCores.
    bb = min(bb, max(8, _round_up(batch, 16) // 2))
    while bb > 8 and _block_vmem_bytes(bb, s_pad, e, hd, l) > budget:
        bb -= 8
    return max(bb, 8)


def bert_attention_kernel(h_ref, w_line_ref, b_line_ref, w_attn_ref,
                          w_cls_ref, b_cls_ref, attn_ref, logits_ref,
                          *, s_valid):
    Bb, S, E = h_ref.shape
    Hd = w_line_ref.shape[1]

    h = h_ref[...]                                              # (Bb,S,E) bf16

    # Line layer: one merged (Bb*S, E) @ (E, Hd) MXU matmul, bf16 in, f32 acc.
    m = jnp.tanh(
        jnp.dot(h.reshape(Bb * S, E), w_line_ref[...],
                preferred_element_type=jnp.float32)
        + b_line_ref[...])                                      # (Bb*S,Hd) f32
    m3 = m.reshape(Bb, S, Hd)

    # Attention scores: VPU multiply + lane reduction over Hd, reusing m's
    # layout (no per-batch transposes or 1-row MXU passes) -> (Bb, S) with
    # batch on sublanes and seq on lanes.
    scores = jnp.sum(m3 * w_attn_ref[...].reshape(1, 1, Hd), axis=-1)

    # Mask out padded sequence positions (S was padded to a multiple of 16).
    if s_valid < S:
        col = jax.lax.broadcasted_iota(jnp.int32, (Bb, S), 1)
        scores = jnp.where(col < s_valid, scores, -1e30)

    # Softmax over seq (lane axis); the divide goes to the EUP approx recip.
    scores = scores - jnp.max(scores, axis=-1, keepdims=True)
    exp_s = jnp.exp(scores)
    attn = exp_s * pl.reciprocal(jnp.sum(exp_s, axis=-1, keepdims=True),
                                 approx=True)
    attn_ref[...] = attn                                        # (Bb, S)

    # pooled = sum_s a * H: VPU broadcast-multiply + sublane reduction over S,
    # reusing the resident H block (dropout is identity at inference).
    pooled = jnp.sum(h.astype(jnp.float32) * attn[:, :, None], axis=1)

    # Classifier: (Bb, E) @ (E, L) on the MXU, bf16 in, f32 acc.
    logits_ref[...] = (
        jnp.dot(pooled.astype(jnp.bfloat16), w_cls_ref[...],
                preferred_element_type=jnp.float32)
        + b_cls_ref[...])                                       # (Bb, L)


def bert_attention_forward(H, w_line, b_line, w_attn, w_cls, b_cls,
                           *, block_b=None):
    B, S, E = H.shape
    Hd = w_line.shape[1]
    L = w_cls.shape[1]

    # Pad seq to a multiple of 16 (bf16 sublane packing) so the in-kernel
    # (Bb,S,E) <-> (Bb*S,E) reshapes are layout-free; padded positions are
    # masked out of the softmax inside the kernel.
    S_pad = _round_up(S, 16)
    if S_pad != S:
        H = jnp.pad(H, ((0, 0), (0, S_pad - S), (0, 0)))

    budget = _vmem_budget_bytes()
    B_blk = block_b if block_b is not None else _pick_block_b(
        B, S_pad, E, Hd, L, budget)
    B_pad = _round_up(max(B, B_blk), B_blk)
    if B_pad != B:
        H = jnp.pad(H, ((0, B_pad - B), (0, 0), (0, 0)))
    n_blocks = B_pad // B_blk

    vmem_limit = int(min(budget,
                         max(2 * _block_vmem_bytes(B_blk, S_pad, E, Hd, L),
                             16 * 1024 * 1024)))

    # bf16 MXU operands (halves HBM traffic for H); f32 biases / attention
    # vector keep the nonlinear math in full precision.
    H_b = H.astype(jnp.bfloat16)
    w_line_b = w_line.astype(jnp.bfloat16)
    w_cls_b = w_cls.astype(jnp.bfloat16)
    b_line2 = b_line.reshape(1, Hd).astype(jnp.float32)
    w_attn2 = w_attn.reshape(1, Hd).astype(jnp.float32)
    b_cls2 = b_cls.reshape(1, L).astype(jnp.float32)

    kernel = functools.partial(bert_attention_kernel, s_valid=S)

    def build(single_buffer_weights):
        w_kw = ({"pipeline_mode": pl.Buffered(1)}
                if single_buffer_weights else {})
        in_specs = [
            pl.BlockSpec((B_blk, S_pad, E), lambda i: (i, 0, 0)),
            pl.BlockSpec((E, Hd), lambda i: (0, 0), **w_kw),
            pl.BlockSpec((1, Hd), lambda i: (0, 0), **w_kw),
            pl.BlockSpec((1, Hd), lambda i: (0, 0), **w_kw),
            pl.BlockSpec((E, L), lambda i: (0, 0), **w_kw),
            pl.BlockSpec((1, L), lambda i: (0, 0), **w_kw),
        ]
        out_specs = (
            pl.BlockSpec((B_blk, S_pad), lambda i: (i, 0)),  # attn, lane-dense
            pl.BlockSpec((B_blk, L), lambda i: (i, 0)),      # logits
        )
        out_shapes = (
            jax.ShapeDtypeStruct((B_pad, S_pad), jnp.float32),
            jax.ShapeDtypeStruct((B_pad, L), jnp.float32),
        )
        return pl.pallas_call(
            kernel,
            out_shape=out_shapes,
            grid=(n_blocks,),
            in_specs=in_specs,
            out_specs=out_specs,
            compiler_params=pltpu.CompilerParams(
                dimension_semantics=("parallel",),
                vmem_limit_bytes=vmem_limit,
            ),
        )

    args = (H_b, w_line_b, b_line2, w_attn2, w_cls_b, b_cls2)
    try:
        attn, logits = build(True)(*args)
    except Exception:
        # Some Pallas versions reject single-buffered BlockSpecs; fall back to
        # default double buffering (identical semantics, a bit more VMEM).
        attn, logits = build(False)(*args)

    # Layout plumbing back to the module's shapes (outside the kernel).
    attn = attn[:B, :S][..., None]                   # (B, S, 1)
    logits = logits[:B]
    best_path = jnp.argmax(logits, axis=-1).astype(jnp.int32)
    return best_path, attn, logits


def reference_forward(H, w_line, b_line, w_attn, w_cls, b_cls):
    m = jnp.tanh(jnp.einsum("bse,eh->bsh", H, w_line) + b_line)
    a = jnp.einsum("bsh,h->bs", m, w_attn)
    a = jax.nn.softmax(a, axis=1)[..., None]
    pooled = jnp.sum(H * a, axis=1)
    logits = pooled @ w_cls + b_cls
    return jnp.argmax(logits, axis=-1).astype(jnp.int32), a, logits


if __name__ == "__main__":
    # Small shapes; E/Hd kept at 128 (lane-aligned), S multiple of 16,
    # B=32 with the derived B_blk=16 gives 2 parallel 256-row grid steps.
    B, S, E, Hd, L = 32, 16, 128, 128, 8

    key = jax.random.PRNGKey(0)
    kH, k1, k2, k3, k4, k5 = jax.random.split(key, 6)

    # "Embedding" = BertModel sequence output, treated as kernel input.
    H = jax.random.normal(kH, (B, S, E), dtype=jnp.float32)

    w_line = jax.random.normal(k1, (E, Hd), dtype=jnp.float32) * 0.1
    b_line = jax.random.normal(k2, (Hd,), dtype=jnp.float32) * 0.1
    w_attn = jax.random.uniform(k3, (Hd,), dtype=jnp.float32)   # torch.rand
    w_cls = jax.random.normal(k4, (E, L), dtype=jnp.float32) * 0.1
    b_cls = jax.random.normal(k5, (L,), dtype=jnp.float32) * 0.1

    best_path, attn, logits = bert_attention_forward(
        H, w_line, b_line, w_attn, w_cls, b_cls)
    jax.block_until_ready((best_path, attn, logits))

    ref_best, ref_attn, ref_logits = reference_forward(
        H, w_line, b_line, w_attn, w_cls, b_cls)

    # bf16 MXU operands -> compare against the f32 reference with loosened
    # tolerances (kernel accumulates in f32).
    assert jnp.allclose(attn, ref_attn, atol=5e-2, rtol=5e-2)
    assert jnp.allclose(logits, ref_logits, atol=1e-1, rtol=5e-2)
    # argmax must agree wherever the reference top-2 margin exceeds bf16 noise.
    sorted_ref = jnp.sort(ref_logits, axis=-1)
    margin = sorted_ref[:, -1] - sorted_ref[:, -2]
    assert bool(jnp.all((best_path == ref_best) | (margin < 0.25)))
    assert bool(jnp.all(best_path == jnp.argmax(logits, axis=-1)))

    print("KERNEL_OK")
</pallas_src>

<mosaic_0001>
module attributes {stable_mosaic.version = 11 : i64} {
  func.func @bert_attention_kernel(%arg0: i32, %arg1: memref<16x16x128xbf16, #tpu.memory_space<vmem>>, %arg2: memref<128x128xbf16, #tpu.memory_space<vmem>>, %arg3: memref<1x128xf32, #tpu.memory_space<vmem>>, %arg4: memref<1x128xf32, #tpu.memory_space<vmem>>, %arg5: memref<128x8xbf16, #tpu.memory_space<vmem>>, %arg6: memref<1x8xf32, #tpu.memory_space<vmem>>, %arg7: memref<16x16xf32, #tpu.memory_space<vmem>>, %arg8: memref<16x8xf32, #tpu.memory_space<vmem>>) attributes {dimension_semantics = [#tpu.dimension_semantics<parallel>], iteration_bounds = array<i64: 2>, scalar_prefetch = 0 : i64, scratch_operands = 0 : i64, tpu.core_type = #tpu.core_type<tc>, window_params = [{transform_indices = @transform_0, window_bounds = array<i64: 16, 16, 128>}, {pipeline_mode = #tpu.pipeline_mode<synchronous>, transform_indices = @transform_1, window_bounds = array<i64: 128, 128>}, {pipeline_mode = #tpu.pipeline_mode<synchronous>, transform_indices = @transform_2, window_bounds = array<i64: 1, 128>}, {pipeline_mode = #tpu.pipeline_mode<synchronous>, transform_indices = @transform_3, window_bounds = array<i64: 1, 128>}, {pipeline_mode = #tpu.pipeline_mode<synchronous>, transform_indices = @transform_4, window_bounds = array<i64: 128, 8>}, {pipeline_mode = #tpu.pipeline_mode<synchronous>, transform_indices = @transform_5, window_bounds = array<i64: 1, 8>}, {transform_indices = @transform_6, window_bounds = array<i64: 16, 16>}, {transform_indices = @transform_7, window_bounds = array<i64: 16, 8>}]} {
    %c0 = arith.constant 0 : index
    %c0_0 = arith.constant 0 : index
    %c0_1 = arith.constant 0 : index
    %0 = vector.load %arg1[%c0, %c0_0, %c0_1] : memref<16x16x128xbf16, #tpu.memory_space<vmem>>, vector<16x16x128xbf16>
    %1 = vector.shape_cast %0 : vector<16x16x128xbf16> to vector<256x128xbf16>
    %c0_2 = arith.constant 0 : index
    %c0_3 = arith.constant 0 : index
    %2 = vector.load %arg2[%c0_2, %c0_3] : memref<128x128xbf16, #tpu.memory_space<vmem>>, vector<128x128xbf16>
    %cst = arith.constant dense<0.000000e+00> : vector<256x128xf32>
    %3 = tpu.matmul %1, %2, %cst {dimension_numbers = #tpu.dot_dimension_numbers<[1], [0], [0], [1], [0, 0, 1, 1], [], []>} : vector<256x128xbf16>, vector<128x128xbf16>, vector<256x128xf32> -> vector<256x128xf32>
    %c0_4 = arith.constant 0 : index
    %c0_5 = arith.constant 0 : index
    %4 = vector.load %arg3[%c0_4, %c0_5] : memref<1x128xf32, #tpu.memory_space<vmem>>, vector<1x128xf32>
    %5 = vector.broadcast %4 : vector<1x128xf32> to vector<256x128xf32>
    %6 = arith.addf %3, %5 : vector<256x128xf32>
    %7 = math.tanh %6 : vector<256x128xf32>
    %8 = vector.shape_cast %7 : vector<256x128xf32> to vector<16x16x128xf32>
    %c0_6 = arith.constant 0 : index
    %c0_7 = arith.constant 0 : index
    %9 = vector.load %arg4[%c0_6, %c0_7] : memref<1x128xf32, #tpu.memory_space<vmem>>, vector<1x128xf32>
    %10 = vector.shape_cast %9 : vector<1x128xf32> to vector<1x1x128xf32>
    %11 = vector.broadcast %10 : vector<1x1x128xf32> to vector<16x16x128xf32>
    %12 = arith.mulf %8, %11 : vector<16x16x128xf32>
    %cst_8 = arith.constant dense<0.000000e+00> : vector<16x16xf32>
    %13 = vector.multi_reduction <add>, %12, %cst_8 [2] : vector<16x16x128xf32> to vector<16x16xf32>
    %cst_9 = arith.constant dense<0xFF800000> : vector<16xf32>
    %14 = vector.multi_reduction <maximumf>, %13, %cst_9 [1] : vector<16x16xf32> to vector<16xf32>
    %15 = vector.shape_cast %14 : vector<16xf32> to vector<16x1xf32>
    %16 = vector.broadcast %15 : vector<16x1xf32> to vector<16x16xf32>
    %17 = arith.subf %13, %16 : vector<16x16xf32>
    %18 = math.exp %17 : vector<16x16xf32>
    %cst_10 = arith.constant dense<0.000000e+00> : vector<16xf32>
    %19 = vector.multi_reduction <add>, %18, %cst_10 [1] : vector<16x16xf32> to vector<16xf32>
    %20 = vector.shape_cast %19 : vector<16xf32> to vector<16x1xf32>
    %21 = tpu.reciprocal %20 {approx = true} : vector<16x1xf32> -> vector<16x1xf32>
    %22 = vector.broadcast %21 : vector<16x1xf32> to vector<16x16xf32>
    %23 = arith.mulf %18, %22 : vector<16x16xf32>
    %c0_11 = arith.constant 0 : index
    %c0_12 = arith.constant 0 : index
    %24 = vector.load %arg7[%c0_11, %c0_12] : memref<16x16xf32, #tpu.memory_space<vmem>>, vector<16x16xf32>
    tpu.vector_store %arg7[%c0_11, %c0_12], %23 {strides = array<i32>} : memref<16x16xf32, #tpu.memory_space<vmem>>, vector<16x16xf32>,
    %25 = arith.extf %0 : vector<16x16x128xbf16> to vector<16x16x128xf32>
    %26 = vector.shape_cast %23 : vector<16x16xf32> to vector<16x16x1xf32>
    %27 = vector.broadcast %26 : vector<16x16x1xf32> to vector<16x16x128xf32>
    %28 = arith.mulf %25, %27 : vector<16x16x128xf32>
    %cst_13 = arith.constant dense<0.000000e+00> : vector<16x128xf32>
    %29 = vector.multi_reduction <add>, %28, %cst_13 [1] : vector<16x16x128xf32> to vector<16x128xf32>
    %30 = arith.truncf %29 : vector<16x128xf32> to vector<16x128xbf16>
    %c0_14 = arith.constant 0 : index
    %c0_15 = arith.constant 0 : index
    %31 = vector.load %arg5[%c0_14, %c0_15] : memref<128x8xbf16, #tpu.memory_space<vmem>>, vector<128x8xbf16>
    %cst_16 = arith.constant dense<0.000000e+00> : vector<16x8xf32>
    %32 = tpu.matmul %30, %31, %cst_16 {dimension_numbers = #tpu.dot_dimension_numbers<[1], [0], [0], [1], [0, 0, 1, 1], [], []>} : vector<16x128xbf16>, vector<128x8xbf16>, vector<16x8xf32> -> vector<16x8xf32>
    %c0_17 = arith.constant 0 : index
    %c0_18 = arith.constant 0 : index
    %33 = vector.load %arg6[%c0_17, %c0_18] : memref<1x8xf32, #tpu.memory_space<vmem>>, vector<1x8xf32>
    %34 = vector.broadcast %33 : vector<1x8xf32> to vector<16x8xf32>
    %35 = arith.addf %32, %34 : vector<16x8xf32>
    %c0_19 = arith.constant 0 : index
    %c0_20 = arith.constant 0 : index
    %36 = vector.load %arg8[%c0_19, %c0_20] : memref<16x8xf32, #tpu.memory_space<vmem>>, vector<16x8xf32>
    tpu.vector_store %arg8[%c0_19, %c0_20], %35 {strides = array<i32>} : memref<16x8xf32, #tpu.memory_space<vmem>>, vector<16x8xf32>,
    return
  }
  func.func @transform_0(%arg0: i32) -> (i32, i32, i32) {
    %c0_i32 = arith.constant 0 : i32
    %c0_i32_0 = arith.constant 0 : i32
    %c0_i32_1 = arith.constant 0 : i32
    return %arg0, %c0_i32, %c0_i32_0 : i32, i32, i32
  }
  func.func @transform_1(%arg0: i32) -> (i32, i32) {
    %c0_i32 = arith.constant 0 : i32
    %c0_i32_0 = arith.constant 0 : i32
    %c0_i32_1 = arith.constant 0 : i32
    return %c0_i32, %c0_i32_0 : i32, i32
  }
  func.func @transform_2(%arg0: i32) -> (i32, i32) {
    %c0_i32 = arith.constant 0 : i32
    %c0_i32_0 = arith.constant 0 : i32
    %c0_i32_1 = arith.constant 0 : i32
    return %c0_i32, %c0_i32_0 : i32, i32
  }
  func.func @transform_3(%arg0: i32) -> (i32, i32) {
    %c0_i32 = arith.constant 0 : i32
    %c0_i32_0 = arith.constant 0 : i32
    %c0_i32_1 = arith.constant 0 : i32
    return %c0_i32, %c0_i32_0 : i32, i32
  }
  func.func @transform_4(%arg0: i32) -> (i32, i32) {
    %c0_i32 = arith.constant 0 : i32
    %c0_i32_0 = arith.constant 0 : i32
    %c0_i32_1 = arith.constant 0 : i32
    return %c0_i32, %c0_i32_0 : i32, i32
  }
  func.func @transform_5(%arg0: i32) -> (i32, i32) {
    %c0_i32 = arith.constant 0 : i32
    %c0_i32_0 = arith.constant 0 : i32
    %c0_i32_1 = arith.constant 0 : i32
    return %c0_i32, %c0_i32_0 : i32, i32
  }
  func.func @transform_6(%arg0: i32) -> (i32, i32) {
    %c0_i32 = arith.constant 0 : i32
    %c0_i32_0 = arith.constant 0 : i32
    return %arg0, %c0_i32 : i32, i32
  }
  func.func @transform_7(%arg0: i32) -> (i32, i32) {
    %c0_i32 = arith.constant 0 : i32
    %c0_i32_0 = arith.constant 0 : i32
    return %arg0, %c0_i32 : i32, i32
  }
}

module attributes {stable_mosaic.version = 11 : i64} {
  func.func @bert_attention_kernel(%arg0: i32, %arg1: memref<16x16x128xbf16, #tpu.memory_space<vmem>>, %arg2: memref<128x128xbf16, #tpu.memory_space<vmem>>, %arg3: memref<1x128xf32, #tpu.memory_space<vmem>>, %arg4: memref<1x128xf32, #tpu.memory_space<vmem>>, %arg5: memref<128x8xbf16, #tpu.memory_space<vmem>>, %arg6: memref<1x8xf32, #tpu.memory_space<vmem>>, %arg7: memref<16x16xf32, #tpu.memory_space<vmem>>, %arg8: memref<16x8xf32, #tpu.memory_space<vmem>>) attributes {dimension_semantics = [#tpu.dimension_semantics<parallel>], iteration_bounds = array<i64: 2>, scalar_prefetch = 0 : i64, scratch_operands = 0 : i64, tpu.core_type = #tpu.core_type<tc>, window_params = [{transform_indices = @transform_0, window_bounds = array<i64: 16, 16, 128>}, {pipeline_mode = #tpu.pipeline_mode<synchronous>, transform_indices = @transform_1, window_bounds = array<i64: 128, 128>}, {pipeline_mode = #tpu.pipeline_mode<synchronous>, transform_indices = @transform_2, window_bounds = array<i64: 1, 128>}, {pipeline_mode = #tpu.pipeline_mode<synchronous>, transform_indices = @transform_3, window_bounds = array<i64: 1, 128>}, {pipeline_mode = #tpu.pipeline_mode<synchronous>, transform_indices = @transform_4, window_bounds = array<i64: 128, 8>}, {pipeline_mode = #tpu.pipeline_mode<synchronous>, transform_indices = @transform_5, window_bounds = array<i64: 1, 8>}, {transform_indices = @transform_6, window_bounds = array<i64: 16, 16>}, {transform_indices = @transform_7, window_bounds = array<i64: 16, 8>}]} {
    %c0 = arith.constant 0 : index
    %c0_0 = arith.constant 0 : index
    %c0_1 = arith.constant 0 : index
    %0 = vector.load %arg1[%c0, %c0_0, %c0_1] : memref<16x16x128xbf16, #tpu.memory_space<vmem>>, vector<16x16x128xbf16>
    %1 = vector.shape_cast %0 : vector<16x16x128xbf16> to vector<256x128xbf16>
    %c0_2 = arith.constant 0 : index
    %c0_3 = arith.constant 0 : index
    %2 = vector.load %arg2[%c0_2, %c0_3] : memref<128x128xbf16, #tpu.memory_space<vmem>>, vector<128x128xbf16>
    %cst = arith.constant dense<0.000000e+00> : vector<256x128xf32>
    %3 = tpu.matmul %1, %2, %cst {dimension_numbers = #tpu.dot_dimension_numbers<[1], [0], [0], [1], [0, 0, 1, 1], [], []>} : vector<256x128xbf16>, vector<128x128xbf16>, vector<256x128xf32> -> vector<256x128xf32>
    %c0_4 = arith.constant 0 : index
    %c0_5 = arith.constant 0 : index
    %4 = vector.load %arg3[%c0_4, %c0_5] : memref<1x128xf32, #tpu.memory_space<vmem>>, vector<1x128xf32>
    %5 = vector.broadcast %4 : vector<1x128xf32> to vector<256x128xf32>
    %6 = arith.addf %3, %5 : vector<256x128xf32>
    %7 = math.tanh %6 : vector<256x128xf32>
    %8 = vector.shape_cast %7 : vector<256x128xf32> to vector<16x16x128xf32>
    %c0_6 = arith.constant 0 : index
    %c0_7 = arith.constant 0 : index
    %9 = vector.load %arg4[%c0_6, %c0_7] : memref<1x128xf32, #tpu.memory_space<vmem>>, vector<1x128xf32>
    %10 = vector.shape_cast %9 : vector<1x128xf32> to vector<1x1x128xf32>
    %11 = vector.broadcast %10 : vector<1x1x128xf32> to vector<16x16x128xf32>
    %12 = arith.mulf %8, %11 : vector<16x16x128xf32>
    %cst_8 = arith.constant dense<0.000000e+00> : vector<16x16xf32>
    %13 = vector.multi_reduction <add>, %12, %cst_8 [2] : vector<16x16x128xf32> to vector<16x16xf32>
    %cst_9 = arith.constant dense<0xFF800000> : vector<16xf32>
    %14 = vector.multi_reduction <maximumf>, %13, %cst_9 [1] : vector<16x16xf32> to vector<16xf32>
    %15 = vector.shape_cast %14 : vector<16xf32> to vector<16x1xf32>
    %16 = vector.broadcast %15 : vector<16x1xf32> to vector<16x16xf32>
    %17 = arith.subf %13, %16 : vector<16x16xf32>
    %18 = math.exp %17 : vector<16x16xf32>
    %cst_10 = arith.constant dense<0.000000e+00> : vector<16xf32>
    %19 = vector.multi_reduction <add>, %18, %cst_10 [1] : vector<16x16xf32> to vector<16xf32>
    %20 = vector.shape_cast %19 : vector<16xf32> to vector<16x1xf32>
    %21 = tpu.reciprocal %20 {approx = true} : vector<16x1xf32> -> vector<16x1xf32>
    %22 = vector.broadcast %21 : vector<16x1xf32> to vector<16x16xf32>
    %23 = arith.mulf %18, %22 : vector<16x16xf32>
    %c0_11 = arith.constant 0 : index
    %c0_12 = arith.constant 0 : index
    %24 = vector.load %arg7[%c0_11, %c0_12] : memref<16x16xf32, #tpu.memory_space<vmem>>, vector<16x16xf32>
    tpu.vector_store %arg7[%c0_11, %c0_12], %23 {strides = array<i32>} : memref<16x16xf32, #tpu.memory_space<vmem>>, vector<16x16xf32>,
    %25 = arith.extf %0 : vector<16x16x128xbf16> to vector<16x16x128xf32>
    %26 = vector.shape_cast %23 : vector<16x16xf32> to vector<16x16x1xf32>
    %27 = vector.broadcast %26 : vector<16x16x1xf32> to vector<16x16x128xf32>
    %28 = arith.mulf %25, %27 : vector<16x16x128xf32>
    %cst_13 = arith.constant dense<0.000000e+00> : vector<16x128xf32>
    %29 = vector.multi_reduction <add>, %28, %cst_13 [1] : vector<16x16x128xf32> to vector<16x128xf32>
    %30 = arith.truncf %29 : vector<16x128xf32> to vector<16x128xbf16>
    %c0_14 = arith.constant 0 : index
    %c0_15 = arith.constant 0 : index
    %31 = vector.load %arg5[%c0_14, %c0_15] : memref<128x8xbf16, #tpu.memory_space<vmem>>, vector<128x8xbf16>
    %cst_16 = arith.constant dense<0.000000e+00> : vector<16x8xf32>
    %32 = tpu.matmul %30, %31, %cst_16 {dimension_numbers = #tpu.dot_dimension_numbers<[1], [0], [0], [1], [0, 0, 1, 1], [], []>} : vector<16x128xbf16>, vector<128x8xbf16>, vector<16x8xf32> -> vector<16x8xf32>
    %c0_17 = arith.constant 0 : index
    %c0_18 = arith.constant 0 : index
    %33 = vector.load %arg6[%c0_17, %c0_18] : memref<1x8xf32, #tpu.memory_space<vmem>>, vector<1x8xf32>
    %34 = vector.broadcast %33 : vector<1x8xf32> to vector<16x8xf32>
    %35 = arith.addf %32, %34 : vector<16x8xf32>
    %c0_19 = arith.constant 0 : index
    %c0_20 = arith.constant 0 : index
    %36 = vector.load %arg8[%c0_19, %c0_20] : memref<16x8xf32, #tpu.memory_space<vmem>>, vector<16x8xf32>
    tpu.vector_store %arg8[%c0_19, %c0_20], %35 {strides = array<i32>} : memref<16x8xf32, #tpu.memory_space<vmem>>, vector<16x8xf32>,
    return
  }
  func.func @transform_0(%arg0: i32) -> (i32, i32, i32) {
    %c0_i32 = arith.constant 0 : i32
    %c0_i32_0 = arith.constant 0 : i32
    %c0_i32_1 = arith.constant 0 : i32
    return %arg0, %c0_i32, %c0_i32_0 : i32, i32, i32
  }
  func.func @transform_1(%arg0: i32) -> (i32, i32) {
    %c0_i32 = arith.constant 0 : i32
    %c0_i32_0 = arith.constant 0 : i32
    %c0_i32_1 = arith.constant 0 : i32
    return %c0_i32, %c0_i32_0 : i32, i32
  }
  func.func @transform_2(%arg0: i32) -> (i32, i32) {
    %c0_i32 = arith.constant 0 : i32
    %c0_i32_0 = arith.constant 0 : i32
    %c0_i32_1 = arith.constant 0 : i32
    return %c0_i32, %c0_i32_0 : i32, i32
  }
  func.func @transform_3(%arg0: i32) -> (i32, i32) {
    %c0_i32 = arith.constant 0 : i32
    %c0_i32_0 = arith.constant 0 : i32
    %c0_i32_1 = arith.constant 0 : i32
    return %c0_i32, %c0_i32_0 : i32, i32
  }
  func.func @transform_4(%arg0: i32) -> (i32, i32) {
    %c0_i32 = arith.constant 0 : i32
    %c0_i32_0 = arith.constant 0 : i32
    %c0_i32_1 = arith.constant 0 : i32
    return %c0_i32, %c0_i32_0 : i32, i32
  }
  func.func @transform_5(%arg0: i32) -> (i32, i32) {
    %c0_i32 = arith.constant 0 : i32
    %c0_i32_0 = arith.constant 0 : i32
    %c0_i32_1 = arith.constant 0 : i32
    return %c0_i32, %c0_i32_0 : i32, i32
  }
  func.func @transform_6(%arg0: i32) -> (i32, i32) {
    %c0_i32 = arith.constant 0 : i32
    %c0_i32_0 = arith.constant 0 : i32
    return %arg0, %c0_i32 : i32, i32
  }
  func.func @transform_7(%arg0: i32) -> (i32, i32) {
    %c0_i32 = arith.constant 0 : i32
    %c0_i32_0 = arith.constant 0 : i32
    return %arg0, %c0_i32 : i32, i32
  }
}

</mosaic_0001>

<llo_original>
// kernel: tpu_custom_call.1
$region0: #{tpu_custom_call.1}
  #allocation0 [shape = 'u32[]', space=smem, size = 0x4, offset = 0x4, fixed_abs, tag = 'smem constant byte address 0x4 - core index']
  #allocation1 [shape = 'u32[144,128]{1,0:T(1,128)}', space=vmem, size = 0x12000, scoped, tag = 'internal scratch']
  %s0 = inlined_call_operand.hbm [shape: bf16[32,16,128], index: 0, kind: input, shape index: {}]
  %s1 = inlined_call_operand.vmem [shape: bf16[128,128], index: 1, kind: input, shape index: {}]
  %s2 = inlined_call_operand.vmem [shape: f32[1,128], index: 2, kind: input, shape index: {}]
  %s3 = inlined_call_operand.vmem [shape: f32[1,128], index: 3, kind: input, shape index: {}]
  %s4 = inlined_call_operand.vmem [shape: bf16[128,8], index: 4, kind: input, shape index: {}]
  %s5 = inlined_call_operand.vmem [shape: f32[1,8], index: 5, kind: input, shape index: {}]
  %s6 = inlined_call_operand.vmem [shape: f32[32,16], index: 6, kind: output, shape index: {0}]
  %s7 = inlined_call_operand.vmem [shape: f32[32,8], index: 7, kind: output, shape index: {1}]
  %8 = xla_tuple %s6, %s7
  %s9 = sld [smem:[#allocation0]]
  $region69: #{tpu_custom_call.1} parent=0
    _
  %s11 = ssub.s32 1, %s9
  %s12 = scalar_select 0, %s11, %s9
  $region1: #{tpu_custom_call.1} parent=0
    #allocation2 [shape = 'u8[131072]{0}', space=vmem, size = 0x20000, scoped, tag = 'input window, operand 0']
    #allocation3 [shape = 's32[2]{0}', space=sflag, size = 0x8, scoped, tag = 'scoped memory for tpu_custom_call.1']
    %13 = vsyncpa [#allocation3], 0
    %s14 = scalar_lea.sflag [#allocation3], 1
    %15 = vsyncpa %s14, 0
    loop: start=0, step=1, limit=4
    $region2: #{tpu_custom_call.1} parent=1 // loop_pre_header
      _
    $region3: #{tpu_custom_call.1} parent=1 // loop_header
      %s17 = sphi 0, %s21
      %p18 = scmp.ge.s32.totalorder %s17, 4
      %s27 = sphi 0, %s29
      %s30 = sphi 0, %s27
      %s31 = sphi 0, %s30
      %s47 = sphi 0, %s31
      %s51 = sphi 0, %s51
      %s53 = sphi 0, %s51
      %s54 = sphi 0, %s53
      %s68 = sphi 0, %s54
      %s72 = sphi 0, %s72
      %s74 = sphi 0, %s72
      %s75 = sphi 0, %s74
      %s89 = sphi 0, %s75
      %s93 = sphi 0, %s93
      %s95 = sphi 0, %s93
      %s96 = sphi 0, %s95
      %s110 = sphi 0, %s96
      %s114 = sphi 0, %s114
      %s116 = sphi 0, %s114
      %s117 = sphi 0, %s116
      %s131 = sphi 0, %s117
      %s135 = sphi 0, %s135
      %s137 = sphi 0, %s135
      %s138 = sphi 0, %s137
      %s152 = sphi 0, %s138
      %s158 = sphi 0, %s160
      %s161 = sphi 0, %s158
      %s162 = sphi 0, %s161
      %s178 = sphi 0, %s162
      %s184 = sphi 0, %s186
      %s187 = sphi 0, %s184
      %s188 = sphi 0, %s187
      %s204 = sphi 0, %s188
    $region4: #{tpu_custom_call.1} parent=1 // loop_header_branch
      %20 = sbr.rel (%p18) target = $region8
    $region5: #{tpu_custom_call.1} parent=1 // loop_body
      %s22 = ssub.s32 %s17, 1
      %s23 = ssub.s32 %s17, 2
      %s24 = sadd.s32 %s17, 1
      %s25 = ssub.s32 %s17, %s24
      %p26 = scmp.eq.s32.totalorder %s25, 0
      %s28 = sadd.s32 %s27, 1
      %s29 = scalar_select %p26, %s27, %s28
      %p32 = pneg %p26
      %p33 = scmp.eq.s32.totalorder %s17, 1
      %p34 = por %p32, %p33
      %p35 = scmp.ne.s32.totalorder %s27, %s30
      %p36 = scmp.eq.s32.totalorder %s17, 0
      %p37 = por %p35, %p36
      %p38 = scmp.ne.s32.totalorder %s27, %s30
      %p39 = scmp.eq.s32.totalorder %s22, 1
      %p40 = por %p38, %p39
      %p41 = scmp.ne.s32.totalorder %s30, %s31
      %p42 = scmp.eq.s32.totalorder %s22, 0
      %p43 = por %p41, %p42
      %p44 = scmp.ne.s32.totalorder %s30, %s31
      %p45 = scmp.eq.s32.totalorder %s23, 1
      %p46 = por %p44, %p45
      %p48 = scmp.ne.s32.totalorder %s31, %s47
      %p49 = scmp.eq.s32.totalorder %s23, 0
      %p50 = por %p48, %p49
      %s52 = sadd.s32 %s51, 1
      %p55 = scmp.eq.s32.totalorder %s17, 1
      %p56 = scmp.ne.s32.totalorder %s51, %s53
      %p57 = scmp.eq.s32.totalorder %s17, 0
      %p58 = por %p56, %p57
      %p59 = scmp.ne.s32.totalorder %s51, %s53
      %p60 = scmp.eq.s32.totalorder %s22, 1
      %p61 = por %p59, %p60
      %p62 = scmp.ne.s32.totalorder %s53, %s54
      %p63 = scmp.eq.s32.totalorder %s22, 0
      %p64 = por %p62, %p63
      %p65 = scmp.ne.s32.totalorder %s53, %s54
      %p66 = scmp.eq.s32.totalorder %s23, 1
      %p67 = por %p65, %p66
      %p69 = scmp.ne.s32.totalorder %s54, %s68
      %p70 = scmp.eq.s32.totalorder %s23, 0
      %p71 = por %p69, %p70
      %s73 = sadd.s32 %s72, 1
      %p76 = scmp.eq.s32.totalorder %s17, 1
      %p77 = scmp.ne.s32.totalorder %s72, %s74
      %p78 = scmp.eq.s32.totalorder %s17, 0
      %p79 = por %p77, %p78
      %p80 = scmp.ne.s32.totalorder %s72, %s74
      %p81 = scmp.eq.s32.totalorder %s22, 1
      %p82 = por %p80, %p81
      %p83 = scmp.ne.s32.totalorder %s74, %s75
      %p84 = scmp.eq.s32.totalorder %s22, 0
      %p85 = por %p83, %p84
      %p86 = scmp.ne.s32.totalorder %s74, %s75
      %p87 = scmp.eq.s32.totalorder %s23, 1
      %p88 = por %p86, %p87
      %p90 = scmp.ne.s32.totalorder %s75, %s89
      %p91 = scmp.eq.s32.totalorder %s23, 0
      %p92 = por %p90, %p91
      %s94 = sadd.s32 %s93, 1
      %p97 = scmp.eq.s32.totalorder %s17, 1
      %p98 = scmp.ne.s32.totalorder %s93, %s95
      %p99 = scmp.eq.s32.totalorder %s17, 0
      %p100 = por %p98, %p99
      %p101 = scmp.ne.s32.totalorder %s93, %s95
      %p102 = scmp.eq.s32.totalorder %s22, 1
      %p103 = por %p101, %p102
      %p104 = scmp.ne.s32.totalorder %s95, %s96
      %p105 = scmp.eq.s32.totalorder %s22, 0
      %p106 = por %p104, %p105
      %p107 = scmp.ne.s32.totalorder %s95, %s96
      %p108 = scmp.eq.s32.totalorder %s23, 1
      %p109 = por %p107, %p108
      %p111 = scmp.ne.s32.totalorder %s96, %s110
      %p112 = scmp.eq.s32.totalorder %s23, 0
      %p113 = por %p111, %p112
      %s115 = sadd.s32 %s114, 1
      %p118 = scmp.eq.s32.totalorder %s17, 1
      %p119 = scmp.ne.s32.totalorder %s114, %s116
      %p120 = scmp.eq.s32.totalorder %s17, 0
      %p121 = por %p119, %p120
      %p122 = scmp.ne.s32.totalorder %s114, %s116
      %p123 = scmp.eq.s32.totalorder %s22, 1
      %p124 = por %p122, %p123
      %p125 = scmp.ne.s32.totalorder %s116, %s117
      %p126 = scmp.eq.s32.totalorder %s22, 0
      %p127 = por %p125, %p126
      %p128 = scmp.ne.s32.totalorder %s116, %s117
      %p129 = scmp.eq.s32.totalorder %s23, 1
      %p130 = por %p128, %p129
      %p132 = scmp.ne.s32.totalorder %s117, %s131
      %p133 = scmp.eq.s32.totalorder %s23, 0
      %p134 = por %p132, %p133
      %s136 = sadd.s32 %s135, 1
      %p139 = scmp.eq.s32.totalorder %s17, 1
      %p140 = scmp.ne.s32.totalorder %s135, %s137
      %p141 = scmp.eq.s32.totalorder %s17, 0
      %p142 = por %p140, %p141
      %p143 = scmp.ne.s32.totalorder %s135, %s137
      %p144 = scmp.eq.s32.totalorder %s22, 1
      %p145 = por %p143, %p144
      %p146 = scmp.ne.s32.totalorder %s137, %s138
      %p147 = scmp.eq.s32.totalorder %s22, 0
      %p148 = por %p146, %p147
      %p149 = scmp.ne.s32.totalorder %s137, %s138
      %p150 = scmp.eq.s32.totalorder %s23, 1
      %p151 = por %p149, %p150
      %p153 = scmp.ne.s32.totalorder %s138, %s152
      %p154 = scmp.eq.s32.totalorder %s23, 0
      %p155 = por %p153, %p154
      %s156 = ssub.s32 %s17, %s24
      %p157 = scmp.eq.s32.totalorder %s156, 0
      %s159 = sadd.s32 %s158, 1
      %s160 = scalar_select %p157, %s158, %s159
      %p163 = pneg %p157
      %p164 = scmp.eq.s32.totalorder %s17, 1
      %p165 = por %p163, %p164
      %p166 = scmp.ne.s32.totalorder %s158, %s161
      %p167 = scmp.eq.s32.totalorder %s17, 0
      %p168 = por %p166, %p167
      %p169 = scmp.ne.s32.totalorder %s158, %s161
      %p170 = scmp.eq.s32.totalorder %s22, 1
      %p171 = por %p169, %p170
      %p172 = scmp.ne.s32.totalorder %s161, %s162
      %p173 = scmp.eq.s32.totalorder %s22, 0
      %p174 = por %p172, %p173
      %p175 = scmp.ne.s32.totalorder %s161, %s162
      %p176 = scmp.eq.s32.totalorder %s23, 1
      %p177 = por %p175, %p176
      %p179 = scmp.ne.s32.totalorder %s162, %s178
      %p180 = scmp.eq.s32.totalorder %s23, 0
      %p181 = por %p179, %p180
      %s182 = ssub.s32 %s17, %s24
      %p183 = scmp.eq.s32.totalorder %s182, 0
      %s185 = sadd.s32 %s184, 1
      %s186 = scalar_select %p183, %s184, %s185
      %p189 = pneg %p183
      %p190 = scmp.eq.s32.totalorder %s17, 1
      %p191 = por %p189, %p190
      %p192 = scmp.ne.s32.totalorder %s184, %s187
      %p193 = scmp.eq.s32.totalorder %s17, 0
      %p194 = por %p192, %p193
      %p195 = scmp.ne.s32.totalorder %s184, %s187
      %p196 = scmp.eq.s32.totalorder %s22, 1
      %p197 = por %p195, %p196
      %p198 = scmp.ne.s32.totalorder %s187, %s188
      %p199 = scmp.eq.s32.totalorder %s22, 0
      %p200 = por %p198, %p199
      %p201 = scmp.ne.s32.totalorder %s187, %s188
      %p202 = scmp.eq.s32.totalorder %s23, 1
      %p203 = por %p201, %p202
      %p205 = scmp.ne.s32.totalorder %s188, %s204
      %p206 = scmp.eq.s32.totalorder %s23, 0
      %p207 = por %p205, %p206
      %p208 = scmp.le.s32.totalorder 1, %s17
      %p209 = scmp.lt.s32.totalorder %s17, 3
      %p210 = pnand %p208, %p209
      %p211 = pneg %p210
      // Predicated region
      $region9: #{tpu_custom_call.1} parent=5 // pred_check
        _
      $region10: #{tpu_custom_call.1} parent=5 // pred_check_branch
        %213 = sbr.rel (%p210) target = $region12
      $region11: #{tpu_custom_call.1} parent=5 // pred_region
        %s214 = ssub.s32 %s17, 1
        // Predicated region
        $region13: #{tpu_custom_call.1} parent=11 // pred_check
          %p215 = pneg %p64
        $region14: #{tpu_custom_call.1} parent=11 // pred_check_branch
          %217 = sbr.rel (%p215) target = $region16
        $region15: #{tpu_custom_call.1} parent=11 // pred_region
          _
        $region16: #{tpu_custom_call.1} parent=11 // pred_fallthru
          _
        // Predicated region
        $region17: #{tpu_custom_call.1} parent=11 // pred_check
          %p218 = pneg %p85
        $region18: #{tpu_custom_call.1} parent=11 // pred_check_branch
          %220 = sbr.rel (%p218) target = $region20
        $region19: #{tpu_custom_call.1} parent=11 // pred_region
          _
        $region20: #{tpu_custom_call.1} parent=11 // pred_fallthru
          _
        // Predicated region
        $region21: #{tpu_custom_call.1} parent=11 // pred_check
          %p221 = pneg %p106
        $region22: #{tpu_custom_call.1} parent=11 // pred_check_branch
          %223 = sbr.rel (%p221) target = $region24
        $region23: #{tpu_custom_call.1} parent=11 // pred_region
          _
        $region24: #{tpu_custom_call.1} parent=11 // pred_fallthru
          _
        // Predicated region
        $region25: #{tpu_custom_call.1} parent=11 // pred_check
          %p224 = pneg %p127
        $region26: #{tpu_custom_call.1} parent=11 // pred_check_branch
          %226 = sbr.rel (%p224) target = $region28
        $region27: #{tpu_custom_call.1} parent=11 // pred_region
          _
        $region28: #{tpu_custom_call.1} parent=11 // pred_fallthru
          _
        // Predicated region
        $region29: #{tpu_custom_call.1} parent=11 // pred_check
          %p227 = pneg %p148
        $region30: #{tpu_custom_call.1} parent=11 // pred_check_branch
          %229 = sbr.rel (%p227) target = $region32
        $region31: #{tpu_custom_call.1} parent=11 // pred_region
          _
        $region32: #{tpu_custom_call.1} parent=11 // pred_fallthru
          _
      $region12: #{tpu_custom_call.1} parent=5 // pred_fallthru
        _
      %p230 = scmp.lt.s32.totalorder %s17, 2
      // Predicated region
      $region33: #{tpu_custom_call.1} parent=5 // pred_check
        %p231 = pneg %p230
      $region34: #{tpu_custom_call.1} parent=5 // pred_check_branch
        %233 = sbr.rel (%p231) target = $region36
      $region35: #{tpu_custom_call.1} parent=5 // pred_region
        // Predicated region
        $region37: #{tpu_custom_call.1} parent=35 // pred_check
          %p234 = pneg %p37
        $region38: #{tpu_custom_call.1} parent=35 // pred_check_branch
          %236 = sbr.rel (%p234) target = $region40
        $region39: #{tpu_custom_call.1} parent=35 // pred_region
          %s237 = sand.u32 %s27, 1
          %s238 = scalar_lea.sflag [#allocation3], %s237
          %s239 = sand.u32 %s27, 1
          %s240 = smul.addr %s239, 128
          %s241 = scalar_lea.vmem [#allocation2], %s240
          %s242 = smul.u32 16, %s17
          %s244 = ssub.s32 2048, 2048
          %245 = vsyncadd %s238, %s244
          %s246 = smul.addr %s242, 2
          %s247 = smul.addr %s246, 64
          %s248 = scalar_lea.hbm %s0, %s247
          %s249 = sshll.u32 %s241, 4
          %s250 = int_to_ptr.vmem [resolvable:$true] %s249
          %255 = dma.hbm_to_vmem [thread:$0]  %s248, 2048, %s250, %s238, 64, 64, 4
        $region40: #{tpu_custom_call.1} parent=35 // pred_fallthru
          _
      $region36: #{tpu_custom_call.1} parent=5 // pred_fallthru
        _
      %p256 = scmp.le.s32.totalorder 1, %s17
      %p257 = scmp.lt.s32.totalorder %s17, 3
      %p258 = pnand %p256, %p257
      %p259 = pneg %p258
      // Predicated region
      $region41: #{tpu_custom_call.1} parent=5 // pred_check
        _
      $region42: #{tpu_custom_call.1} parent=5 // pred_check_branch
        %261 = sbr.rel (%p258) target = $region44
      $region43: #{tpu_custom_call.1} parent=5 // pred_region
        %s262 = ssub.s32 %s17, 1
        %s263 = sand.u32 %s30, 1
        %s264 = scalar_lea.sflag [#allocation3], %s263
        %s265 = sand.u32 %s30, 1
        %s266 = smul.addr %s265, 128
        %s267 = scalar_lea.vmem [#allocation2], %s266
        // Predicated region
        $region45: #{tpu_custom_call.1} parent=43 // pred_check
          %p268 = pneg %p43
        $region46: #{tpu_custom_call.1} parent=43 // pred_check_branch
          %270 = sbr.rel (%p268) target = $region48
        $region47: #{tpu_custom_call.1} parent=43 // pred_region
          %271 = dma.done %s264, 2048
        $region48: #{tpu_custom_call.1} parent=43 // pred_fallthru
          _
        %s272 = sand.u32 %s30, 1
        %s273 = scalar_lea.sflag [#allocation3], %s272
        %s274 = sand.u32 %s30, 1
        %s275 = smul.addr %s274, 128
        %s276 = scalar_lea.vmem [#allocation2], %s275
        %p277 = pneg %p43
        %p278 = pneg %p40
        %p279 = pneg %p64
        %p280 = pneg %p61
        %p281 = pneg %p85
        %p282 = pneg %p82
        %p283 = pneg %p106
        %p284 = pneg %p103
        %p285 = pneg %p127
        %p286 = pneg %p124
        %p287 = pneg %p148
        %p288 = pneg %p145
        %p289 = pneg %p174
        %p290 = pneg %p171
        %s291 = smul.u32 2, %s22
        %p292 = scmp.lt.s32.totalorder %s291, 3
        %s293 = scalar_select %p292, %s291, 3
        %s294 = smul.addr %s293, 8
        %s295 = scalar_lea.vmem %s6, %s294
        %p296 = pneg %p200
        %p297 = pneg %p197
        %s298 = smul.u32 2, %s22
        %p299 = scmp.lt.s32.totalorder %s298, 3
        %s300 = scalar_select %p299, %s298, 3
        %s301 = smul.addr %s300, 8
        %s302 = scalar_lea.vmem %s7, %s301
        %s303 = smul.u32 16, %s22
        %s304 = smul.u32 2, %s22
        %p305 = scmp.lt.s32.totalorder %s304, 3
        %s306 = scalar_select %p305, %s304, 3
        %s307 = smul.addr %s306, 8
        %s308 = scalar_lea.vmem %s6, %s307
        %s309 = smul.u32 2, %s22
        %s310 = smul.u32 2, %s22
        %p311 = scmp.lt.s32.totalorder %s310, 3
        %s312 = scalar_select %p311, %s310, 3
        %s313 = smul.addr %s312, 8
        %s314 = scalar_lea.vmem %s7, %s313
        %s315 = smul.u32 2, %s22
        %v317 = vld [vmem:[%s267] sm:$0xf]
        %v318 = vld [vmem:[%s267 + $0x4] sm:$0xf]
        %v319 = vld [vmem:[%s267 + $0x8] sm:$0xf]
        %v320 = vld [vmem:[%s267 + $0xc] sm:$0xf]
        %v321 = vld [vmem:[%s267 + $0x10] sm:$0xf]
        %v322 = vld [vmem:[%s267 + $0x14] sm:$0xf]
        %v323 = vld [vmem:[%s267 + $0x18] sm:$0xf]
        %v324 = vld [vmem:[%s267 + $0x1c] sm:$0xf]
        %v325 = vld [vmem:[%s267 + $0x20] sm:$0xf]
        %v326 = vld [vmem:[%s267 + $0x24] sm:$0xf]
        %v327 = vld [vmem:[%s267 + $0x28] sm:$0xf]
        %v328 = vld [vmem:[%s267 + $0x2c] sm:$0xf]
        %v329 = vld [vmem:[%s267 + $0x30] sm:$0xf]
        %v330 = vld [vmem:[%s267 + $0x34] sm:$0xf]
        %v331 = vld [vmem:[%s267 + $0x38] sm:$0xf]
        %v332 = vld [vmem:[%s267 + $0x3c] sm:$0xf]
        %v333 = vld [vmem:[%s267 + $0x40] sm:$0xf]
        %v334 = vld [vmem:[%s267 + $0x44] sm:$0xf]
        %v335 = vld [vmem:[%s267 + $0x48] sm:$0xf]
        %v336 = vld [vmem:[%s267 + $0x4c] sm:$0xf]
        %v337 = vld [vmem:[%s267 + $0x50] sm:$0xf]
        %v338 = vld [vmem:[%s267 + $0x54] sm:$0xf]
        %v339 = vld [vmem:[%s267 + $0x58] sm:$0xf]
        %v340 = vld [vmem:[%s267 + $0x5c] sm:$0xf]
        %v341 = vld [vmem:[%s267 + $0x60] sm:$0xf]
        %v342 = vld [vmem:[%s267 + $0x64] sm:$0xf]
        %v343 = vld [vmem:[%s267 + $0x68] sm:$0xf]
        %v344 = vld [vmem:[%s267 + $0x6c] sm:$0xf]
        %v345 = vld [vmem:[%s267 + $0x70] sm:$0xf]
        %v346 = vld [vmem:[%s267 + $0x74] sm:$0xf]
        %v347 = vld [vmem:[%s267 + $0x78] sm:$0xf]
        %v348 = vld [vmem:[%s267 + $0x7c] sm:$0xf]
        %v349 = vld [vmem:[%s1] sm:$0xf]
        %v350 = vld [vmem:[%s1 + $0x4] sm:$0xf]
        %v351 = vld [vmem:[%s1 + $0x8] sm:$0xf]
        %v352 = vld [vmem:[%s1 + $0xc] sm:$0xf]
        %v353 = vld [vmem:[%s1 + $0x10] sm:$0xf]
        %v354 = vld [vmem:[%s1 + $0x14] sm:$0xf]
        %v355 = vld [vmem:[%s1 + $0x18] sm:$0xf]
        %v356 = vld [vmem:[%s1 + $0x1c] sm:$0xf]
        %v357 = vld [vmem:[%s1 + $0x20] sm:$0xf]
        %v358 = vld [vmem:[%s1 + $0x24] sm:$0xf]
        %v359 = vld [vmem:[%s1 + $0x28] sm:$0xf]
        %v360 = vld [vmem:[%s1 + $0x2c] sm:$0xf]
        %v361 = vld [vmem:[%s1 + $0x30] sm:$0xf]
        %v362 = vld [vmem:[%s1 + $0x34] sm:$0xf]
        %v363 = vld [vmem:[%s1 + $0x38] sm:$0xf]
        %v364 = vld [vmem:[%s1 + $0x3c] sm:$0xf]
        %v365 = vld [vmem:[%s2] sm:$0x1]
        %v367 = vlaneseq
        %v368 = vshrl.u32 %v367, 7
        %v369 = vsub.s32 0, %v368
        %v370 = vrot.slane %v365, %v369
        %v404 = vunpack.c.l.b16 %v317
        %v405 = vunpack.c.l.b16 %v318
        %v406 = vunpack.c.l.b16 %v319
        %v407 = vunpack.c.l.b16 %v320
        %v408 = vunpack.c.l.b16 %v321
        %v409 = vunpack.c.l.b16 %v322
        %v410 = vunpack.c.l.b16 %v323
        %v411 = vunpack.c.l.b16 %v324
        %v412 = vunpack.c.l.b16 %v325
        %v413 = vunpack.c.l.b16 %v326
        %v414 = vunpack.c.l.b16 %v327
        %v415 = vunpack.c.l.b16 %v328
        %v416 = vunpack.c.l.b16 %v329
        %v417 = vunpack.c.l.b16 %v330
        %v418 = vunpack.c.l.b16 %v331
        %v419 = vunpack.c.l.b16 %v332
        %v420 = vunpack.c.l.b16 %v333
        %v421 = vunpack.c.l.b16 %v334
        %v422 = vunpack.c.l.b16 %v335
        %v423 = vunpack.c.l.b16 %v336
        %v424 = vunpack.c.l.b16 %v337
        %v425 = vunpack.c.l.b16 %v338
        %v426 = vunpack.c.l.b16 %v339
        %v427 = vunpack.c.l.b16 %v340
        %v428 = vunpack.c.l.b16 %v341
        %v429 = vunpack.c.l.b16 %v342
        %v430 = vunpack.c.l.b16 %v343
        %v431 = vunpack.c.l.b16 %v344
        %v432 = vunpack.c.l.b16 %v345
        %v433 = vunpack.c.l.b16 %v346
        %v434 = vunpack.c.l.b16 %v347
        %v435 = vunpack.c.l.b16 %v348
        %v436 = vpack.c.b16 %v405, %v404
        %v437 = vpack.c.b16 %v407, %v406
        %v438 = vpack.c.b16 %v409, %v408
        %v439 = vpack.c.b16 %v411, %v410
        %v440 = vpack.c.b16 %v413, %v412
        %v441 = vpack.c.b16 %v415, %v414
        %v442 = vpack.c.b16 %v417, %v416
        %v443 = vpack.c.b16 %v419, %v418
        %v444 = vpack.c.b16 %v421, %v420
        %v445 = vpack.c.b16 %v423, %v422
        %v446 = vpack.c.b16 %v425, %v424
        %v447 = vpack.c.b16 %v427, %v426
        %v448 = vpack.c.b16 %v429, %v428
        %v449 = vpack.c.b16 %v431, %v430
        %v450 = vpack.c.b16 %v433, %v432
        %v451 = vpack.c.b16 %v435, %v434
        %v484 = vunpack.c.l.b16 %v349
        %v485 = vunpack.c.l.b16 %v350
        %v486 = vunpack.c.l.b16 %v351
        %v487 = vunpack.c.l.b16 %v352
        %v488 = vunpack.c.l.b16 %v353
        %v489 = vunpack.c.l.b16 %v354
        %v490 = vunpack.c.l.b16 %v355
        %v491 = vunpack.c.l.b16 %v356
        %v492 = vunpack.c.l.b16 %v357
        %v493 = vunpack.c.l.b16 %v358
        %v494 = vunpack.c.l.b16 %v359
        %v495 = vunpack.c.l.b16 %v360
        %v496 = vunpack.c.l.b16 %v361
        %v497 = vunpack.c.l.b16 %v362
        %v498 = vunpack.c.l.b16 %v363
        %v499 = vunpack.c.l.b16 %v364
        %v500 = vpack.c.b16 %v485, %v484
        %v501 = vpack.c.b16 %v487, %v486
        %v502 = vpack.c.b16 %v489, %v488
        %v503 = vpack.c.b16 %v491, %v490
        %v504 = vpack.c.b16 %v493, %v492
        %v505 = vpack.c.b16 %v495, %v494
        %v506 = vpack.c.b16 %v497, %v496
        %v507 = vpack.c.b16 %v499, %v498
        %516 = vmatprep.subr.bf16.mxu0 0
        %517 = vmatpush1.bf16.msra.mxu0 %v500
        %518 = vmatprep.subr.bf16.mxu0 0
        %519 = vmatpush1.bf16.msra.mxu0 %v501
        %520 = vmatprep.subr.bf16.mxu0 0
        %521 = vmatpush1.bf16.msra.mxu0 %v502
        %522 = vmatprep.subr.bf16.mxu0 0
        %523 = vmatpush1.bf16.msra.mxu0 %v503
        %524 = vmatprep.subr.bf16.mxu0 0
        %525 = vmatpush1.bf16.msra.mxu0 %v504
        %526 = vmatprep.subr.bf16.mxu0 0
        %527 = vmatpush1.bf16.msra.mxu0 %v505
        %528 = vmatprep.subr.bf16.mxu0 0
        %529 = vmatpush1.bf16.msra.mxu0 %v506
        %530 = vmatprep.subr.bf16.mxu0 0
        %531 = vmatpush1.bf16.msra.mxu0 %v507
        %532 = vmatprep.subr.bf16.mxu0 0
        %533 = vmatpush1.bf16.msra.mxu0 0
        %534 = vmatprep.subr.bf16.mxu0 0
        %535 = vmatpush1.bf16.msra.mxu0 0
        %536 = vmatprep.subr.bf16.mxu0 0
        %537 = vmatpush1.bf16.msra.mxu0 0
        %538 = vmatprep.subr.bf16.mxu0 0
        %539 = vmatpush1.bf16.msra.mxu0 0
        %540 = vmatprep.subr.bf16.mxu0 0
        %541 = vmatpush1.bf16.msra.mxu0 0
        %542 = vmatprep.subr.bf16.mxu0 0
        %543 = vmatpush1.bf16.msra.mxu0 0
        %544 = vmatprep.subr.bf16.mxu0 0
        %545 = vmatpush1.bf16.msra.mxu0 0
        %546 = vmatprep.subr.bf16.mxu0 0
        %547 = vmatpush1.bf16.msra.mxu0 0
        %548 = vmatprep.mubr.bf16.mxu0 0
        %549 = vmatmul.mubr.bf16.gmra.mrb[0].mxu0 %v436
        %v550 = vpop.f32.mrb[0].mxu0
        %v551 = vadd.f32 %v370, %v550
        %v552 = vpop.f32.mrb[0].mxu0
        %v553 = vpop.f32.mrb[0].mxu0
        %v554 = vadd.f32 %v370, %v553
        %v555 = vpop.f32.mrb[0].mxu0
        %556 = vmatprep.mubr.bf16.mxu0 0
        %557 = vmatmul.mubr.bf16.gmra.mrb[0].mxu0 %v437
        %v558 = vpop.f32.mrb[0].mxu0
        %v559 = vadd.f32 %v370, %v558
        %v560 = vpop.f32.mrb[0].mxu0
        %v561 = vpop.f32.mrb[0].mxu0
        %v562 = vadd.f32 %v370, %v561
        %v563 = vpop.f32.mrb[0].mxu0
        %564 = vmatprep.mubr.bf16.mxu0 0
        %565 = vmatmul.mubr.bf16.gmra.mrb[0].mxu0 %v438
        %v566 = vpop.f32.mrb[0].mxu0
        %v567 = vadd.f32 %v370, %v566
        %v568 = vpop.f32.mrb[0].mxu0
        %v569 = vpop.f32.mrb[0].mxu0
        %v570 = vadd.f32 %v370, %v569
        %v571 = vpop.f32.mrb[0].mxu0
        %572 = vmatprep.mubr.bf16.mxu0 0
        %573 = vmatmul.mubr.bf16.gmra.mrb[0].mxu0 %v439
        %v574 = vpop.f32.mrb[0].mxu0
        %v575 = vadd.f32 %v370, %v574
        %v576 = vpop.f32.mrb[0].mxu0
        %v577 = vpop.f32.mrb[0].mxu0
        %v578 = vadd.f32 %v370, %v577
        %v579 = vpop.f32.mrb[0].mxu0
        %580 = vmatprep.mubr.bf16.mxu0 0
        %581 = vmatmul.mubr.bf16.gmra.mrb[0].mxu0 %v440
        %v582 = vpop.f32.mrb[0].mxu0
        %v583 = vadd.f32 %v370, %v582
        %v584 = vpop.f32.mrb[0].mxu0
        %v585 = vpop.f32.mrb[0].mxu0
        %v586 = vadd.f32 %v370, %v585
        %v587 = vpop.f32.mrb[0].mxu0
        %588 = vmatprep.mubr.bf16.mxu0 0
        %589 = vmatmul.mubr.bf16.gmra.mrb[0].mxu0 %v441
        %v590 = vpop.f32.mrb[0].mxu0
        %v591 = vadd.f32 %v370, %v590
        %v592 = vpop.f32.mrb[0].mxu0
        %v593 = vpop.f32.mrb[0].mxu0
        %v594 = vadd.f32 %v370, %v593
        %v595 = vpop.f32.mrb[0].mxu0
        %596 = vmatprep.mubr.bf16.mxu0 0
        %597 = vmatmul.mubr.bf16.gmra.mrb[0].mxu0 %v442
        %v598 = vpop.f32.mrb[0].mxu0
        %v599 = vadd.f32 %v370, %v598
        %v600 = vpop.f32.mrb[0].mxu0
        %v601 = vpop.f32.mrb[0].mxu0
        %v602 = vadd.f32 %v370, %v601
        %v603 = vpop.f32.mrb[0].mxu0
        %604 = vmatprep.mubr.bf16.mxu0 0
        %605 = vmatmul.mubr.bf16.gmra.mrb[0].mxu0 %v443
        %v606 = vpop.f32.mrb[0].mxu0
        %v607 = vadd.f32 %v370, %v606
        %v608 = vpop.f32.mrb[0].mxu0
        %v609 = vpop.f32.mrb[0].mxu0
        %v610 = vadd.f32 %v370, %v609
        %v611 = vpop.f32.mrb[0].mxu0
        %612 = vmatprep.mubr.bf16.mxu0 0
        %613 = vmatmul.mubr.bf16.gmra.mrb[0].mxu0 %v444
        %v614 = vpop.f32.mrb[0].mxu0
        %v615 = vadd.f32 %v370, %v614
        %v616 = vpop.f32.mrb[0].mxu0
        %v617 = vpop.f32.mrb[0].mxu0
        %v618 = vadd.f32 %v370, %v617
        %v619 = vpop.f32.mrb[0].mxu0
        %620 = vmatprep.mubr.bf16.mxu0 0
        %621 = vmatmul.mubr.bf16.gmra.mrb[0].mxu0 %v445
        %v622 = vpop.f32.mrb[0].mxu0
        %v623 = vadd.f32 %v370, %v622
        %v624 = vpop.f32.mrb[0].mxu0
        %v625 = vpop.f32.mrb[0].mxu0
        %v626 = vadd.f32 %v370, %v625
        %v627 = vpop.f32.mrb[0].mxu0
        %628 = vmatprep.mubr.bf16.mxu0 0
        %629 = vmatmul.mubr.bf16.gmra.mrb[0].mxu0 %v446
        %v630 = vpop.f32.mrb[0].mxu0
        %v631 = vadd.f32 %v370, %v630
        %v632 = vpop.f32.mrb[0].mxu0
        %v633 = vpop.f32.mrb[0].mxu0
        %v634 = vadd.f32 %v370, %v633
        %v635 = vpop.f32.mrb[0].mxu0
        %636 = vmatprep.mubr.bf16.mxu0 0
        %637 = vmatmul.mubr.bf16.gmra.mrb[0].mxu0 %v447
        %v638 = vpop.f32.mrb[0].mxu0
        %v639 = vadd.f32 %v370, %v638
        %v640 = vpop.f32.mrb[0].mxu0
        %v641 = vpop.f32.mrb[0].mxu0
        %v642 = vadd.f32 %v370, %v641
        %v643 = vpop.f32.mrb[0].mxu0
        %644 = vmatprep.mubr.bf16.mxu0 0
        %645 = vmatmul.mubr.bf16.gmra.mrb[0].mxu0 %v448
        %v646 = vpop.f32.mrb[0].mxu0
        %v647 = vadd.f32 %v370, %v646
        %v648 = vpop.f32.mrb[0].mxu0
        %v649 = vpop.f32.mrb[0].mxu0
        %v650 = vadd.f32 %v370, %v649
        %v651 = vpop.f32.mrb[0].mxu0
        %652 = vmatprep.mubr.bf16.mxu0 0
        %653 = vmatmul.mubr.bf16.gmra.mrb[0].mxu0 %v449
        %v654 = vpop.f32.mrb[0].mxu0
        %v655 = vadd.f32 %v370, %v654
        %v656 = vpop.f32.mrb[0].mxu0
        %v657 = vpop.f32.mrb[0].mxu0
        %v658 = vadd.f32 %v370, %v657
        %v659 = vpop.f32.mrb[0].mxu0
        %660 = vmatprep.mubr.bf16.mxu0 0
        %661 = vmatmul.mubr.bf16.gmra.mrb[0].mxu0 %v450
        %v662 = vpop.f32.mrb[0].mxu0
        %v663 = vadd.f32 %v370, %v662
        %v664 = vpop.f32.mrb[0].mxu0
        %v665 = vpop.f32.mrb[0].mxu0
        %v666 = vadd.f32 %v370, %v665
        %v667 = vpop.f32.mrb[0].mxu0
        %668 = vmatprep.mubr.bf16.mxu0 0
        %669 = vmatmul.mubr.bf16.gmra.mrb[0].mxu0 %v451
        %v670 = vpop.f32.mrb[0].mxu0
        %v671 = vadd.f32 %v370, %v670
        %v672 = vpop.f32.mrb[0].mxu0
        %v673 = vpop.f32.mrb[0].mxu0
        %v674 = vadd.f32 %v370, %v673
        %v675 = vpop.f32.mrb[0].mxu0
        %676 = vdwg.mxu0
        %v677 = vtanh.pop %v551
        %v678 = vtanh.pop %v554
        %v679 = vtanh.pop %v559
        %v680 = vtanh.pop %v562
        %v681 = vtanh.pop %v567
        %v682 = vtanh.pop %v570
        %v683 = vtanh.pop %v575
        %v684 = vtanh.pop %v578
        %v685 = vtanh.pop %v583
        %v686 = vtanh.pop %v586
        %v687 = vtanh.pop %v591
        %v688 = vtanh.pop %v594
        %v689 = vtanh.pop %v599
        %v690 = vtanh.pop %v602
        %v691 = vtanh.pop %v607
        %v692 = vtanh.pop %v610
        %v693 = vtanh.pop %v615
        %v694 = vtanh.pop %v618
        %v695 = vtanh.pop %v623
        %v696 = vtanh.pop %v626
        %v697 = vtanh.pop %v631
        %v698 = vtanh.pop %v634
        %v699 = vtanh.pop %v639
        %v700 = vtanh.pop %v642
        %v701 = vtanh.pop %v647
        %v702 = vtanh.pop %v650
        %v703 = vtanh.pop %v655
        %v704 = vtanh.pop %v658
        %v705 = vtanh.pop %v663
        %v706 = vtanh.pop %v666
        %v707 = vtanh.pop %v671
        %v708 = vtanh.pop %v674
        %v709 = vld [vmem:[%s3] sm:$0x1]
        %v711 = vlaneseq
        %v712 = vshrl.u32 %v711, 7
        %v713 = vsub.s32 0, %v712
        %v714 = vrot.slane %v709, %v713
        %v716 = vmul.f32 %v677, %v714
        %v717 = vmul.f32 %v678, %v714
        %v718 = vmul.f32 %v679, %v714
        %v719 = vmul.f32 %v680, %v714
        %v720 = vmul.f32 %v681, %v714
        %v721 = vmul.f32 %v682, %v714
        %v722 = vmul.f32 %v683, %v714
        %v723 = vmul.f32 %v684, %v714
        %v724 = vmul.f32 %v685, %v714
        %v725 = vmul.f32 %v686, %v714
        %v726 = vmul.f32 %v687, %v714
        %v727 = vmul.f32 %v688, %v714
        %v728 = vmul.f32 %v689, %v714
        %v729 = vmul.f32 %v690, %v714
        %v730 = vmul.f32 %v691, %v714
        %v731 = vmul.f32 %v692, %v714
        %v732 = vmul.f32 %v693, %v714
        %v733 = vmul.f32 %v694, %v714
        %v734 = vmul.f32 %v695, %v714
        %v735 = vmul.f32 %v696, %v714
        %v736 = vmul.f32 %v697, %v714
        %v737 = vmul.f32 %v698, %v714
        %v738 = vmul.f32 %v699, %v714
        %v739 = vmul.f32 %v700, %v714
        %v740 = vmul.f32 %v701, %v714
        %v741 = vmul.f32 %v702, %v714
        %v742 = vmul.f32 %v703, %v714
        %v743 = vmul.f32 %v704, %v714
        %v744 = vmul.f32 %v705, %v714
        %v745 = vmul.f32 %v706, %v714
        %v746 = vmul.f32 %v707, %v714
        %v747 = vmul.f32 %v708, %v714
        %748 = vadd.xlane.f32.xlu0 %v716
        %v749 = vpop.xlane.xlu0 %748
        %750 = vadd.xlane.f32.xlu0 %v717
        %v751 = vpop.xlane.xlu0 %750
        %752 = vadd.xlane.f32.xlu0 %v718
        %v753 = vpop.xlane.xlu0 %752
        %754 = vadd.xlane.f32.xlu0 %v719
        %v755 = vpop.xlane.xlu0 %754
        %756 = vadd.xlane.f32.xlu0 %v720
        %v757 = vpop.xlane.xlu0 %756
        %758 = vadd.xlane.f32.xlu0 %v721
        %v759 = vpop.xlane.xlu0 %758
        %760 = vadd.xlane.f32.xlu0 %v722
        %v761 = vpop.xlane.xlu0 %760
        %762 = vadd.xlane.f32.xlu0 %v723
        %v763 = vpop.xlane.xlu0 %762
        %764 = vadd.xlane.f32.xlu0 %v724
        %v765 = vpop.xlane.xlu0 %764
        %766 = vadd.xlane.f32.xlu0 %v725
        %v767 = vpop.xlane.xlu0 %766
        %768 = vadd.xlane.f32.xlu0 %v726
        %v769 = vpop.xlane.xlu0 %768
        %770 = vadd.xlane.f32.xlu0 %v727
        %v771 = vpop.xlane.xlu0 %770
        %772 = vadd.xlane.f32.xlu0 %v728
        %v773 = vpop.xlane.xlu0 %772
        %774 = vadd.xlane.f32.xlu0 %v729
        %v775 = vpop.xlane.xlu0 %774
        %776 = vadd.xlane.f32.xlu0 %v730
        %v777 = vpop.xlane.xlu0 %776
        %778 = vadd.xlane.f32.xlu0 %v731
        %v779 = vpop.xlane.xlu0 %778
        %780 = vadd.xlane.f32.xlu0 %v732
        %v781 = vpop.xlane.xlu0 %780
        %782 = vadd.xlane.f32.xlu0 %v733
        %v783 = vpop.xlane.xlu0 %782
        %784 = vadd.xlane.f32.xlu0 %v734
        %v785 = vpop.xlane.xlu0 %784
        %786 = vadd.xlane.f32.xlu0 %v735
        %v787 = vpop.xlane.xlu0 %786
        %788 = vadd.xlane.f32.xlu0 %v736
        %v789 = vpop.xlane.xlu0 %788
        %790 = vadd.xlane.f32.xlu0 %v737
        %v791 = vpop.xlane.xlu0 %790
        %792 = vadd.xlane.f32.xlu0 %v738
        %v793 = vpop.xlane.xlu0 %792
        %794 = vadd.xlane.f32.xlu0 %v739
        %v795 = vpop.xlane.xlu0 %794
        %796 = vadd.xlane.f32.xlu0 %v740
        %v797 = vpop.xlane.xlu0 %796
        %798 = vadd.xlane.f32.xlu0 %v741
        %v799 = vpop.xlane.xlu0 %798
        %800 = vadd.xlane.f32.xlu0 %v742
        %v801 = vpop.xlane.xlu0 %800
        %802 = vadd.xlane.f32.xlu0 %v743
        %v803 = vpop.xlane.xlu0 %802
        %804 = vadd.xlane.f32.xlu0 %v744
        %v805 = vpop.xlane.xlu0 %804
        %806 = vadd.xlane.f32.xlu0 %v745
        %v807 = vpop.xlane.xlu0 %806
        %808 = vadd.xlane.f32.xlu0 %v746
        %v809 = vpop.xlane.xlu0 %808
        %810 = vadd.xlane.f32.xlu0 %v747
        %v811 = vpop.xlane.xlu0 %810
        %v844 = vlaneseq
        %v845 = vand.u32 %v844, 127
        %v846 = vlaneseq
        %v847 = vshrl.u32 %v846, 7
        %v848 = vsub.s32 %v845, %v847
        %v849 = vrot.slane %v749, %v848
        %v850 = vadd.s32 %v845, 4294967288
        %v851 = vlaneseq
        %v852 = vshrl.u32 %v851, 7
        %v853 = vsub.s32 %v850, %v852
        %v854 = vrot.slane %v751, %v853
        %vm855 = vcmask 130112
        %v856 = vsel %vm855, %v854, %v849
        %v857 = vlaneseq
        %v858 = vshrl.u32 %v857, 7
        %v859 = vsub.s32 %v845, %v858
        %v860 = vrot.slane %v753, %v859
        %v861 = vlaneseq
        %v862 = vshrl.u32 %v861, 7
        %v863 = vsub.s32 %v850, %v862
        %v864 = vrot.slane %v755, %v863
        %v865 = vsel %vm855, %v864, %v860
        %v866 = vlaneseq
        %v867 = vshrl.u32 %v866, 7
        %v868 = vsub.s32 %v845, %v867
        %v869 = vrot.slane %v757, %v868
        %v870 = vlaneseq
        %v871 = vshrl.u32 %v870, 7
        %v872 = vsub.s32 %v850, %v871
        %v873 = vrot.slane %v759, %v872
        %v874 = vsel %vm855, %v873, %v869
        %v875 = vlaneseq
        %v876 = vshrl.u32 %v875, 7
        %v877 = vsub.s32 %v845, %v876
        %v878 = vrot.slane %v761, %v877
        %v879 = vlaneseq
        %v880 = vshrl.u32 %v879, 7
        %v881 = vsub.s32 %v850, %v880
        %v882 = vrot.slane %v763, %v881
        %v883 = vsel %vm855, %v882, %v878
        %v884 = vlaneseq
        %v885 = vshrl.u32 %v884, 7
        %v886 = vsub.s32 %v845, %v885
        %v887 = vrot.slane %v765, %v886
        %v888 = vlaneseq
        %v889 = vshrl.u32 %v888, 7
        %v890 = vsub.s32 %v850, %v889
        %v891 = vrot.slane %v767, %v890
        %v892 = vsel %vm855, %v891, %v887
        %v893 = vlaneseq
        %v894 = vshrl.u32 %v893, 7
        %v895 = vsub.s32 %v845, %v894
        %v896 = vrot.slane %v769, %v895
        %v897 = vlaneseq
        %v898 = vshrl.u32 %v897, 7
        %v899 = vsub.s32 %v850, %v898
        %v900 = vrot.slane %v771, %v899
        %v901 = vsel %vm855, %v900, %v896
        %v902 = vlaneseq
        %v903 = vshrl.u32 %v902, 7
        %v904 = vsub.s32 %v845, %v903
        %v905 = vrot.slane %v773, %v904
        %v906 = vlaneseq
        %v907 = vshrl.u32 %v906, 7
        %v908 = vsub.s32 %v850, %v907
        %v909 = vrot.slane %v775, %v908
        %v910 = vsel %vm855, %v909, %v905
        %v911 = vlaneseq
        %v912 = vshrl.u32 %v911, 7
        %v913 = vsub.s32 %v845, %v912
        %v914 = vrot.slane %v777, %v913
        %v915 = vlaneseq
        %v916 = vshrl.u32 %v915, 7
        %v917 = vsub.s32 %v850, %v916
        %v918 = vrot.slane %v779, %v917
        %v919 = vsel %vm855, %v918, %v914
        %v920 = vlaneseq
        %v921 = vshrl.u32 %v920, 7
        %v922 = vsub.s32 %v845, %v921
        %v923 = vrot.slane %v781, %v922
        %v924 = vlaneseq
        %v925 = vshrl.u32 %v924, 7
        %v926 = vsub.s32 %v850, %v925
        %v927 = vrot.slane %v783, %v926
        %v928 = vsel %vm855, %v927, %v923
        %v929 = vlaneseq
        %v930 = vshrl.u32 %v929, 7
        %v931 = vsub.s32 %v845, %v930
        %v932 = vrot.slane %v785, %v931
        %v933 = vlaneseq
        %v934 = vshrl.u32 %v933, 7
        %v935 = vsub.s32 %v850, %v934
        %v936 = vrot.slane %v787, %v935
        %v937 = vsel %vm855, %v936, %v932
        %v938 = vlaneseq
        %v939 = vshrl.u32 %v938, 7
        %v940 = vsub.s32 %v845, %v939
        %v941 = vrot.slane %v789, %v940
        %v942 = vlaneseq
        %v943 = vshrl.u32 %v942, 7
        %v944 = vsub.s32 %v850, %v943
        %v945 = vrot.slane %v791, %v944
        %v946 = vsel %vm855, %v945, %v941
        %v947 = vlaneseq
        %v948 = vshrl.u32 %v947, 7
        %v949 = vsub.s32 %v845, %v948
        %v950 = vrot.slane %v793, %v949
        %v951 = vlaneseq
        %v952 = vshrl.u32 %v951, 7
        %v953 = vsub.s32 %v850, %v952
        %v954 = vrot.slane %v795, %v953
        %v955 = vsel %vm855, %v954, %v950
        %v956 = vlaneseq
        %v957 = vshrl.u32 %v956, 7
        %v958 = vsub.s32 %v845, %v957
        %v959 = vrot.slane %v797, %v958
        %v960 = vlaneseq
        %v961 = vshrl.u32 %v960, 7
        %v962 = vsub.s32 %v850, %v961
        %v963 = vrot.slane %v799, %v962
        %v964 = vsel %vm855, %v963, %v959
        %v965 = vlaneseq
        %v966 = vshrl.u32 %v965, 7
        %v967 = vsub.s32 %v845, %v966
        %v968 = vrot.slane %v801, %v967
        %v969 = vlaneseq
        %v970 = vshrl.u32 %v969, 7
        %v971 = vsub.s32 %v850, %v970
        %v972 = vrot.slane %v803, %v971
        %v973 = vsel %vm855, %v972, %v968
        %v974 = vlaneseq
        %v975 = vshrl.u32 %v974, 7
        %v976 = vsub.s32 %v845, %v975
        %v977 = vrot.slane %v805, %v976
        %v978 = vlaneseq
        %v979 = vshrl.u32 %v978, 7
        %v980 = vsub.s32 %v850, %v979
        %v981 = vrot.slane %v807, %v980
        %v982 = vsel %vm855, %v981, %v977
        %v983 = vlaneseq
        %v984 = vshrl.u32 %v983, 7
        %v985 = vsub.s32 %v845, %v984
        %v986 = vrot.slane %v809, %v985
        %v987 = vlaneseq
        %v988 = vshrl.u32 %v987, 7
        %v989 = vsub.s32 %v850, %v988
        %v990 = vrot.slane %v811, %v989
        %v991 = vsel %vm855, %v990, %v986
        %vm992 = vcmask 1041409
        %v993 = vsel %vm992, %v865, %v856
        %vm994 = vcmask 1042434
        %v995 = vsel %vm994, %v874, %v993
        %vm996 = vcmask 1043459
        %v997 = vsel %vm996, %v883, %v995
        %vm998 = vcmask 1044484
        %v999 = vsel %vm998, %v892, %v997
        %vm1000 = vcmask 1045509
        %v1001 = vsel %vm1000, %v901, %v999
        %vm1002 = vcmask 1046534
        %v1003 = vsel %vm1002, %v910, %v1001
        %vm1004 = vcmask 1047559
        %v1005 = vsel %vm1004, %v919, %v1003
        %v1006 = vsel %vm992, %v937, %v928
        %v1007 = vsel %vm994, %v946, %v1006
        %v1008 = vsel %vm996, %v955, %v1007
        %v1009 = vsel %vm998, %v964, %v1008
        %v1010 = vsel %vm1000, %v973, %v1009
        %v1011 = vsel %vm1002, %v982, %v1010
        %v1012 = vsel %vm1004, %v991, %v1011
        %vm1015 = vcmask 130048
        %v1016 = vsel %vm1015, %v1005, -inf
        %1017 = vmax.xlane.f32.xlu0 %v1016
        %v1018 = vpop.xlane.xlu0 %1017
        %v1019 = vsel %vm1015, %v1012, -inf
        %1020 = vmax.xlane.f32.xlu0 %v1019
        %v1021 = vpop.xlane.xlu0 %1020
        %v1024 = vlaneseq
        %v1025 = vshrl.u32 %v1024, 7
        %v1026 = vsub.s32 0, %v1025
        %v1027 = vrot.slane %v1018, %v1026
        %v1028 = vlaneseq
        %v1029 = vshrl.u32 %v1028, 7
        %v1030 = vsub.s32 1, %v1029
        %v1031 = vrot.slane %v1018, %v1030
        %v1032 = vlaneseq
        %v1033 = vshrl.u32 %v1032, 7
        %v1034 = vsub.s32 2, %v1033
        %v1035 = vrot.slane %v1018, %v1034
        %v1036 = vlaneseq
        %v1037 = vshrl.u32 %v1036, 7
        %v1038 = vsub.s32 3, %v1037
        %v1039 = vrot.slane %v1018, %v1038
        %v1040 = vlaneseq
        %v1041 = vshrl.u32 %v1040, 7
        %v1042 = vsub.s32 4, %v1041
        %v1043 = vrot.slane %v1018, %v1042
        %v1044 = vlaneseq
        %v1045 = vshrl.u32 %v1044, 7
        %v1046 = vsub.s32 5, %v1045
        %v1047 = vrot.slane %v1018, %v1046
        %v1048 = vlaneseq
        %v1049 = vshrl.u32 %v1048, 7
        %v1050 = vsub.s32 6, %v1049
        %v1051 = vrot.slane %v1018, %v1050
        %v1052 = vlaneseq
        %v1053 = vshrl.u32 %v1052, 7
        %v1054 = vsub.s32 7, %v1053
        %v1055 = vrot.slane %v1018, %v1054
        %v1056 = vlaneseq
        %v1057 = vshrl.u32 %v1056, 7
        %v1058 = vsub.s32 0, %v1057
        %v1059 = vrot.slane %v1021, %v1058
        %v1060 = vlaneseq
        %v1061 = vshrl.u32 %v1060, 7
        %v1062 = vsub.s32 1, %v1061
        %v1063 = vrot.slane %v1021, %v1062
        %v1064 = vlaneseq
        %v1065 = vshrl.u32 %v1064, 7
        %v1066 = vsub.s32 2, %v1065
        %v1067 = vrot.slane %v1021, %v1066
        %v1068 = vlaneseq
        %v1069 = vshrl.u32 %v1068, 7
        %v1070 = vsub.s32 3, %v1069
        %v1071 = vrot.slane %v1021, %v1070
        %v1072 = vlaneseq
        %v1073 = vshrl.u32 %v1072, 7
        %v1074 = vsub.s32 4, %v1073
        %v1075 = vrot.slane %v1021, %v1074
        %v1076 = vlaneseq
        %v1077 = vshrl.u32 %v1076, 7
        %v1078 = vsub.s32 5, %v1077
        %v1079 = vrot.slane %v1021, %v1078
        %v1080 = vlaneseq
        %v1081 = vshrl.u32 %v1080, 7
        %v1082 = vsub.s32 6, %v1081
        %v1083 = vrot.slane %v1021, %v1082
        %v1084 = vlaneseq
        %v1085 = vshrl.u32 %v1084, 7
        %v1086 = vsub.s32 7, %v1085
        %v1087 = vrot.slane %v1021, %v1086
        %v1104 = vsub.f32 %v749, %v1027
        %v1105 = vsub.f32 %v751, %v1027
        %v1106 = vsub.f32 %v753, %v1031
        %v1107 = vsub.f32 %v755, %v1031
        %v1108 = vsub.f32 %v757, %v1035
        %v1109 = vsub.f32 %v759, %v1035
        %v1110 = vsub.f32 %v761, %v1039
        %v1111 = vsub.f32 %v763, %v1039
        %v1112 = vsub.f32 %v765, %v1043
        %v1113 = vsub.f32 %v767, %v1043
        %v1114 = vsub.f32 %v769, %v1047
        %v1115 = vsub.f32 %v771, %v1047
        %v1116 = vsub.f32 %v773, %v1051
        %v1117 = vsub.f32 %v775, %v1051
        %v1118 = vsub.f32 %v777, %v1055
        %v1119 = vsub.f32 %v779, %v1055
        %v1120 = vsub.f32 %v781, %v1059
        %v1121 = vsub.f32 %v783, %v1059
        %v1122 = vsub.f32 %v785, %v1063
        %v1123 = vsub.f32 %v787, %v1063
        %v1124 = vsub.f32 %v789, %v1067
        %v1125 = vsub.f32 %v791, %v1067
        %v1126 = vsub.f32 %v793, %v1071
        %v1127 = vsub.f32 %v795, %v1071
        %v1128 = vsub.f32 %v797, %v1075
        %v1129 = vsub.f32 %v799, %v1075
        %v1130 = vsub.f32 %v801, %v1079
        %v1131 = vsub.f32 %v803, %v1079
        %v1132 = vsub.f32 %v805, %v1083
        %v1133 = vsub.f32 %v807, %v1083
        %v1134 = vsub.f32 %v809, %v1087
        %v1135 = vsub.f32 %v811, %v1087
        %v1136 = vmul.f32 %v1104, 1.442695
        %v1137 = vpow.pop %v1136
        %v1138 = vmul.f32 %v1105, 1.442695
        %v1139 = vpow.pop %v1138
        %v1140 = vmul.f32 %v1106, 1.442695
        %v1141 = vpow.pop %v1140
        %v1142 = vmul.f32 %v1107, 1.442695
        %v1143 = vpow.pop %v1142
        %v1144 = vmul.f32 %v1108, 1.442695
        %v1145 = vpow.pop %v1144
        %v1146 = vmul.f32 %v1109, 1.442695
        %v1147 = vpow.pop %v1146
        %v1148 = vmul.f32 %v1110, 1.442695
        %v1149 = vpow.pop %v1148
        %v1150 = vmul.f32 %v1111, 1.442695
        %v1151 = vpow.pop %v1150
        %v1152 = vmul.f32 %v1112, 1.442695
        %v1153 = vpow.pop %v1152
        %v1154 = vmul.f32 %v1113, 1.442695
        %v1155 = vpow.pop %v1154
        %v1156 = vmul.f32 %v1114, 1.442695
        %v1157 = vpow.pop %v1156
        %v1158 = vmul.f32 %v1115, 1.442695
        %v1159 = vpow.pop %v1158
        %v1160 = vmul.f32 %v1116, 1.442695
        %v1161 = vpow.pop %v1160
        %v1162 = vmul.f32 %v1117, 1.442695
        %v1163 = vpow.pop %v1162
        %v1164 = vmul.f32 %v1118, 1.442695
        %v1165 = vpow.pop %v1164
        %v1166 = vmul.f32 %v1119, 1.442695
        %v1167 = vpow.pop %v1166
        %v1168 = vmul.f32 %v1120, 1.442695
        %v1169 = vpow.pop %v1168
        %v1170 = vmul.f32 %v1121, 1.442695
        %v1171 = vpow.pop %v1170
        %v1172 = vmul.f32 %v1122, 1.442695
        %v1173 = vpow.pop %v1172
        %v1174 = vmul.f32 %v1123, 1.442695
        %v1175 = vpow.pop %v1174
        %v1176 = vmul.f32 %v1124, 1.442695
        %v1177 = vpow.pop %v1176
        %v1178 = vmul.f32 %v1125, 1.442695
        %v1179 = vpow.pop %v1178
        %v1180 = vmul.f32 %v1126, 1.442695
        %v1181 = vpow.pop %v1180
        %v1182 = vmul.f32 %v1127, 1.442695
        %v1183 = vpow.pop %v1182
        %v1184 = vmul.f32 %v1128, 1.442695
        %v1185 = vpow.pop %v1184
        %v1186 = vmul.f32 %v1129, 1.442695
        %v1187 = vpow.pop %v1186
        %v1188 = vmul.f32 %v1130, 1.442695
        %v1189 = vpow.pop %v1188
        %v1190 = vmul.f32 %v1131, 1.442695
        %v1191 = vpow.pop %v1190
        %v1192 = vmul.f32 %v1132, 1.442695
        %v1193 = vpow.pop %v1192
        %v1194 = vmul.f32 %v1133, 1.442695
        %v1195 = vpow.pop %v1194
        %v1196 = vmul.f32 %v1134, 1.442695
        %v1197 = vpow.pop %v1196
        %v1198 = vmul.f32 %v1135, 1.442695
        %v1199 = vpow.pop %v1198
        %1232 = vset.pattern.permute.xlu0 0
        %1233 = vperm.xlu0 %1232, %v1137
        %v1234 = vpop.permute.xlu0 %1233
        %1235 = vset.pattern.permute.xlu0 0
        %1236 = vperm.xlu0 %1235, %v1139
        %v1237 = vpop.permute.xlu0 %1236
        %1238 = vset.pattern.permute.xlu0 0
        %1239 = vperm.xlu0 %1238, %v1141
        %v1240 = vpop.permute.xlu0 %1239
        %1241 = vset.pattern.permute.xlu0 0
        %1242 = vperm.xlu0 %1241, %v1143
        %v1243 = vpop.permute.xlu0 %1242
        %1244 = vset.pattern.permute.xlu0 0
        %1245 = vperm.xlu0 %1244, %v1145
        %v1246 = vpop.permute.xlu0 %1245
        %1247 = vset.pattern.permute.xlu0 0
        %1248 = vperm.xlu0 %1247, %v1147
        %v1249 = vpop.permute.xlu0 %1248
        %1250 = vset.pattern.permute.xlu0 0
        %1251 = vperm.xlu0 %1250, %v1149
        %v1252 = vpop.permute.xlu0 %1251
        %1253 = vset.pattern.permute.xlu0 0
        %1254 = vperm.xlu0 %1253, %v1151
        %v1255 = vpop.permute.xlu0 %1254
        %1256 = vset.pattern.permute.xlu0 0
        %1257 = vperm.xlu0 %1256, %v1153
        %v1258 = vpop.permute.xlu0 %1257
        %1259 = vset.pattern.permute.xlu0 0
        %1260 = vperm.xlu0 %1259, %v1155
        %v1261 = vpop.permute.xlu0 %1260
        %1262 = vset.pattern.permute.xlu0 0
        %1263 = vperm.xlu0 %1262, %v1157
        %v1264 = vpop.permute.xlu0 %1263
        %1265 = vset.pattern.permute.xlu0 0
        %1266 = vperm.xlu0 %1265, %v1159
        %v1267 = vpop.permute.xlu0 %1266
        %1268 = vset.pattern.permute.xlu0 0
        %1269 = vperm.xlu0 %1268, %v1161
        %v1270 = vpop.permute.xlu0 %1269
        %1271 = vset.pattern.permute.xlu0 0
        %1272 = vperm.xlu0 %1271, %v1163
        %v1273 = vpop.permute.xlu0 %1272
        %1274 = vset.pattern.permute.xlu0 0
        %1275 = vperm.xlu0 %1274, %v1165
        %v1276 = vpop.permute.xlu0 %1275
        %1277 = vset.pattern.permute.xlu0 0
        %1278 = vperm.xlu0 %1277, %v1167
        %v1279 = vpop.permute.xlu0 %1278
        %1280 = vset.pattern.permute.xlu0 0
        %1281 = vperm.xlu0 %1280, %v1169
        %v1282 = vpop.permute.xlu0 %1281
        %1283 = vset.pattern.permute.xlu0 0
        %1284 = vperm.xlu0 %1283, %v1171
        %v1285 = vpop.permute.xlu0 %1284
        %1286 = vset.pattern.permute.xlu0 0
        %1287 = vperm.xlu0 %1286, %v1173
        %v1288 = vpop.permute.xlu0 %1287
        %1289 = vset.pattern.permute.xlu0 0
        %1290 = vperm.xlu0 %1289, %v1175
        %v1291 = vpop.permute.xlu0 %1290
        %1292 = vset.pattern.permute.xlu0 0
        %1293 = vperm.xlu0 %1292, %v1177
        %v1294 = vpop.permute.xlu0 %1293
        %1295 = vset.pattern.permute.xlu0 0
        %1296 = vperm.xlu0 %1295, %v1179
        %v1297 = vpop.permute.xlu0 %1296
        %1298 = vset.pattern.permute.xlu0 0
        %1299 = vperm.xlu0 %1298, %v1181
        %v1300 = vpop.permute.xlu0 %1299
        %1301 = vset.pattern.permute.xlu0 0
        %1302 = vperm.xlu0 %1301, %v1183
        %v1303 = vpop.permute.xlu0 %1302
        %1304 = vset.pattern.permute.xlu0 0
        %1305 = vperm.xlu0 %1304, %v1185
        %v1306 = vpop.permute.xlu0 %1305
        %1307 = vset.pattern.permute.xlu0 0
        %1308 = vperm.xlu0 %1307, %v1187
        %v1309 = vpop.permute.xlu0 %1308
        %1310 = vset.pattern.permute.xlu0 0
        %1311 = vperm.xlu0 %1310, %v1189
        %v1312 = vpop.permute.xlu0 %1311
        %1313 = vset.pattern.permute.xlu0 0
        %1314 = vperm.xlu0 %1313, %v1191
        %v1315 = vpop.permute.xlu0 %1314
        %1316 = vset.pattern.permute.xlu0 0
        %1317 = vperm.xlu0 %1316, %v1193
        %v1318 = vpop.permute.xlu0 %1317
        %1319 = vset.pattern.permute.xlu0 0
        %1320 = vperm.xlu0 %1319, %v1195
        %v1321 = vpop.permute.xlu0 %1320
        %1322 = vset.pattern.permute.xlu0 0
        %1323 = vperm.xlu0 %1322, %v1197
        %v1324 = vpop.permute.xlu0 %1323
        %1325 = vset.pattern.permute.xlu0 0
        %1326 = vperm.xlu0 %1325, %v1199
        %v1327 = vpop.permute.xlu0 %1326
        %v1328 = vlaneseq
        %v1329 = vshrl.u32 %v1328, 7
        %v1330 = vsub.s32 %v845, %v1329
        %v1331 = vrot.slane %v1234, %v1330
        %v1332 = vlaneseq
        %v1333 = vshrl.u32 %v1332, 7
        %v1334 = vsub.s32 %v850, %v1333
        %v1335 = vrot.slane %v1237, %v1334
        %v1336 = vsel %vm855, %v1335, %v1331
        %v1337 = vlaneseq
        %v1338 = vshrl.u32 %v1337, 7
        %v1339 = vsub.s32 %v845, %v1338
        %v1340 = vrot.slane %v1240, %v1339
        %v1341 = vlaneseq
        %v1342 = vshrl.u32 %v1341, 7
        %v1343 = vsub.s32 %v850, %v1342
        %v1344 = vrot.slane %v1243, %v1343
        %v1345 = vsel %vm855, %v1344, %v1340
        %v1346 = vlaneseq
        %v1347 = vshrl.u32 %v1346, 7
        %v1348 = vsub.s32 %v845, %v1347
        %v1349 = vrot.slane %v1246, %v1348
        %v1350 = vlaneseq
        %v1351 = vshrl.u32 %v1350, 7
        %v1352 = vsub.s32 %v850, %v1351
        %v1353 = vrot.slane %v1249, %v1352
        %v1354 = vsel %vm855, %v1353, %v1349
        %v1355 = vlaneseq
        %v1356 = vshrl.u32 %v1355, 7
        %v1357 = vsub.s32 %v845, %v1356
        %v1358 = vrot.slane %v1252, %v1357
        %v1359 = vlaneseq
        %v1360 = vshrl.u32 %v1359, 7
        %v1361 = vsub.s32 %v850, %v1360
        %v1362 = vrot.slane %v1255, %v1361
        %v1363 = vsel %vm855, %v1362, %v1358
        %v1364 = vlaneseq
        %v1365 = vshrl.u32 %v1364, 7
        %v1366 = vsub.s32 %v845, %v1365
        %v1367 = vrot.slane %v1258, %v1366
        %v1368 = vlaneseq
        %v1369 = vshrl.u32 %v1368, 7
        %v1370 = vsub.s32 %v850, %v1369
        %v1371 = vrot.slane %v1261, %v1370
        %v1372 = vsel %vm855, %v1371, %v1367
        %v1373 = vlaneseq
        %v1374 = vshrl.u32 %v1373, 7
        %v1375 = vsub.s32 %v845, %v1374
        %v1376 = vrot.slane %v1264, %v1375
        %v1377 = vlaneseq
        %v1378 = vshrl.u32 %v1377, 7
        %v1379 = vsub.s32 %v850, %v1378
        %v1380 = vrot.slane %v1267, %v1379
        %v1381 = vsel %vm855, %v1380, %v1376
        %v1382 = vlaneseq
        %v1383 = vshrl.u32 %v1382, 7
        %v1384 = vsub.s32 %v845, %v1383
        %v1385 = vrot.slane %v1270, %v1384
        %v1386 = vlaneseq
        %v1387 = vshrl.u32 %v1386, 7
        %v1388 = vsub.s32 %v850, %v1387
        %v1389 = vrot.slane %v1273, %v1388
        %v1390 = vsel %vm855, %v1389, %v1385
        %v1391 = vlaneseq
        %v1392 = vshrl.u32 %v1391, 7
        %v1393 = vsub.s32 %v845, %v1392
        %v1394 = vrot.slane %v1276, %v1393
        %v1395 = vlaneseq
        %v1396 = vshrl.u32 %v1395, 7
        %v1397 = vsub.s32 %v850, %v1396
        %v1398 = vrot.slane %v1279, %v1397
        %v1399 = vsel %vm855, %v1398, %v1394
        %v1400 = vlaneseq
        %v1401 = vshrl.u32 %v1400, 7
        %v1402 = vsub.s32 %v845, %v1401
        %v1403 = vrot.slane %v1282, %v1402
        %v1404 = vlaneseq
        %v1405 = vshrl.u32 %v1404, 7
        %v1406 = vsub.s32 %v850, %v1405
        %v1407 = vrot.slane %v1285, %v1406
        %v1408 = vsel %vm855, %v1407, %v1403
        %v1409 = vlaneseq
        %v1410 = vshrl.u32 %v1409, 7
        %v1411 = vsub.s32 %v845, %v1410
        %v1412 = vrot.slane %v1288, %v1411
        %v1413 = vlaneseq
        %v1414 = vshrl.u32 %v1413, 7
        %v1415 = vsub.s32 %v850, %v1414
        %v1416 = vrot.slane %v1291, %v1415
        %v1417 = vsel %vm855, %v1416, %v1412
        %v1418 = vlaneseq
        %v1419 = vshrl.u32 %v1418, 7
        %v1420 = vsub.s32 %v845, %v1419
        %v1421 = vrot.slane %v1294, %v1420
        %v1422 = vlaneseq
        %v1423 = vshrl.u32 %v1422, 7
        %v1424 = vsub.s32 %v850, %v1423
        %v1425 = vrot.slane %v1297, %v1424
        %v1426 = vsel %vm855, %v1425, %v1421
        %v1427 = vlaneseq
        %v1428 = vshrl.u32 %v1427, 7
        %v1429 = vsub.s32 %v845, %v1428
        %v1430 = vrot.slane %v1300, %v1429
        %v1431 = vlaneseq
        %v1432 = vshrl.u32 %v1431, 7
        %v1433 = vsub.s32 %v850, %v1432
        %v1434 = vrot.slane %v1303, %v1433
        %v1435 = vsel %vm855, %v1434, %v1430
        %v1436 = vlaneseq
        %v1437 = vshrl.u32 %v1436, 7
        %v1438 = vsub.s32 %v845, %v1437
        %v1439 = vrot.slane %v1306, %v1438
        %v1440 = vlaneseq
        %v1441 = vshrl.u32 %v1440, 7
        %v1442 = vsub.s32 %v850, %v1441
        %v1443 = vrot.slane %v1309, %v1442
        %v1444 = vsel %vm855, %v1443, %v1439
        %v1445 = vlaneseq
        %v1446 = vshrl.u32 %v1445, 7
        %v1447 = vsub.s32 %v845, %v1446
        %v1448 = vrot.slane %v1312, %v1447
        %v1449 = vlaneseq
        %v1450 = vshrl.u32 %v1449, 7
        %v1451 = vsub.s32 %v850, %v1450
        %v1452 = vrot.slane %v1315, %v1451
        %v1453 = vsel %vm855, %v1452, %v1448
        %v1454 = vlaneseq
        %v1455 = vshrl.u32 %v1454, 7
        %v1456 = vsub.s32 %v845, %v1455
        %v1457 = vrot.slane %v1318, %v1456
        %v1458 = vlaneseq
        %v1459 = vshrl.u32 %v1458, 7
        %v1460 = vsub.s32 %v850, %v1459
        %v1461 = vrot.slane %v1321, %v1460
        %v1462 = vsel %vm855, %v1461, %v1457
        %v1463 = vlaneseq
        %v1464 = vshrl.u32 %v1463, 7
        %v1465 = vsub.s32 %v845, %v1464
        %v1466 = vrot.slane %v1324, %v1465
        %v1467 = vlaneseq
        %v1468 = vshrl.u32 %v1467, 7
        %v1469 = vsub.s32 %v850, %v1468
        %v1470 = vrot.slane %v1327, %v1469
        %v1471 = vsel %vm855, %v1470, %v1466
        %v1472 = vsel %vm992, %v1345, %v1336
        %v1473 = vsel %vm994, %v1354, %v1472
        %v1474 = vsel %vm996, %v1363, %v1473
        %v1475 = vsel %vm998, %v1372, %v1474
        %v1476 = vsel %vm1000, %v1381, %v1475
        %v1477 = vsel %vm1002, %v1390, %v1476
        %v1478 = vsel %vm1004, %v1399, %v1477
        %v1479 = vsel %vm992, %v1417, %v1408
        %v1480 = vsel %vm994, %v1426, %v1479
        %v1481 = vsel %vm996, %v1435, %v1480
        %v1482 = vsel %vm998, %v1444, %v1481
        %v1483 = vsel %vm1000, %v1453, %v1482
        %v1484 = vsel %vm1002, %v1462, %v1483
        %v1485 = vsel %vm1004, %v1471, %v1484
        %v1488 = vsel %vm1015, %v1478, 0.0
        %1489 = vadd.xlane.f32.xlu0 %v1488
        %v1490 = vpop.xlane.xlu0 %1489
        %v1491 = vsel %vm1015, %v1485, 0.0
        %1492 = vadd.xlane.f32.xlu0 %v1491
        %v1493 = vpop.xlane.xlu0 %1492
        %v1494 = vrcp.pop %v1490
        %v1495 = vrcp.pop %v1493
        %v1498 = vlaneseq
        %v1499 = vshrl.u32 %v1498, 7
        %v1500 = vsub.s32 0, %v1499
        %v1501 = vrot.slane %v1494, %v1500
        %v1502 = vlaneseq
        %v1503 = vshrl.u32 %v1502, 7
        %v1504 = vsub.s32 1, %v1503
        %v1505 = vrot.slane %v1494, %v1504
        %v1506 = vlaneseq
        %v1507 = vshrl.u32 %v1506, 7
        %v1508 = vsub.s32 2, %v1507
        %v1509 = vrot.slane %v1494, %v1508
        %v1510 = vlaneseq
        %v1511 = vshrl.u32 %v1510, 7
        %v1512 = vsub.s32 3, %v1511
        %v1513 = vrot.slane %v1494, %v1512
        %v1514 = vlaneseq
        %v1515 = vshrl.u32 %v1514, 7
        %v1516 = vsub.s32 4, %v1515
        %v1517 = vrot.slane %v1494, %v1516
        %v1518 = vlaneseq
        %v1519 = vshrl.u32 %v1518, 7
        %v1520 = vsub.s32 5, %v1519
        %v1521 = vrot.slane %v1494, %v1520
        %v1522 = vlaneseq
        %v1523 = vshrl.u32 %v1522, 7
        %v1524 = vsub.s32 6, %v1523
        %v1525 = vrot.slane %v1494, %v1524
        %v1526 = vlaneseq
        %v1527 = vshrl.u32 %v1526, 7
        %v1528 = vsub.s32 7, %v1527
        %v1529 = vrot.slane %v1494, %v1528
        %v1530 = vlaneseq
        %v1531 = vshrl.u32 %v1530, 7
        %v1532 = vsub.s32 0, %v1531
        %v1533 = vrot.slane %v1495, %v1532
        %v1534 = vlaneseq
        %v1535 = vshrl.u32 %v1534, 7
        %v1536 = vsub.s32 1, %v1535
        %v1537 = vrot.slane %v1495, %v1536
        %v1538 = vlaneseq
        %v1539 = vshrl.u32 %v1538, 7
        %v1540 = vsub.s32 2, %v1539
        %v1541 = vrot.slane %v1495, %v1540
        %v1542 = vlaneseq
        %v1543 = vshrl.u32 %v1542, 7
        %v1544 = vsub.s32 3, %v1543
        %v1545 = vrot.slane %v1495, %v1544
        %v1546 = vlaneseq
        %v1547 = vshrl.u32 %v1546, 7
        %v1548 = vsub.s32 4, %v1547
        %v1549 = vrot.slane %v1495, %v1548
        %v1550 = vlaneseq
        %v1551 = vshrl.u32 %v1550, 7
        %v1552 = vsub.s32 5, %v1551
        %v1553 = vrot.slane %v1495, %v1552
        %v1554 = vlaneseq
        %v1555 = vshrl.u32 %v1554, 7
        %v1556 = vsub.s32 6, %v1555
        %v1557 = vrot.slane %v1495, %v1556
        %v1558 = vlaneseq
        %v1559 = vshrl.u32 %v1558, 7
        %v1560 = vsub.s32 7, %v1559
        %v1561 = vrot.slane %v1495, %v1560
        %v1578 = vmul.f32 %v1137, %v1501
        %v1579 = vmul.f32 %v1139, %v1501
        %v1580 = vmul.f32 %v1141, %v1505
        %v1581 = vmul.f32 %v1143, %v1505
        %v1582 = vmul.f32 %v1145, %v1509
        %v1583 = vmul.f32 %v1147, %v1509
        %v1584 = vmul.f32 %v1149, %v1513
        %v1585 = vmul.f32 %v1151, %v1513
        %v1586 = vmul.f32 %v1153, %v1517
        %v1587 = vmul.f32 %v1155, %v1517
        %v1588 = vmul.f32 %v1157, %v1521
        %v1589 = vmul.f32 %v1159, %v1521
        %v1590 = vmul.f32 %v1161, %v1525
        %v1591 = vmul.f32 %v1163, %v1525
        %v1592 = vmul.f32 %v1165, %v1529
        %v1593 = vmul.f32 %v1167, %v1529
        %v1594 = vmul.f32 %v1169, %v1533
        %v1595 = vmul.f32 %v1171, %v1533
        %v1596 = vmul.f32 %v1173, %v1537
        %v1597 = vmul.f32 %v1175, %v1537
        %v1598 = vmul.f32 %v1177, %v1541
        %v1599 = vmul.f32 %v1179, %v1541
        %v1600 = vmul.f32 %v1181, %v1545
        %v1601 = vmul.f32 %v1183, %v1545
        %v1602 = vmul.f32 %v1185, %v1549
        %v1603 = vmul.f32 %v1187, %v1549
        %v1604 = vmul.f32 %v1189, %v1553
        %v1605 = vmul.f32 %v1191, %v1553
        %v1606 = vmul.f32 %v1193, %v1557
        %v1607 = vmul.f32 %v1195, %v1557
        %v1608 = vmul.f32 %v1197, %v1561
        %v1609 = vmul.f32 %v1199, %v1561
        %1642 = vset.pattern.permute.xlu0 0
        %1643 = vperm.xlu0 %1642, %v1578
        %v1644 = vpop.permute.xlu0 %1643
        %1645 = vset.pattern.permute.xlu0 0
        %1646 = vperm.xlu0 %1645, %v1579
        %v1647 = vpop.permute.xlu0 %1646
        %1648 = vset.pattern.permute.xlu0 0
        %1649 = vperm.xlu0 %1648, %v1580
        %v1650 = vpop.permute.xlu0 %1649
        %1651 = vset.pattern.permute.xlu0 0
        %1652 = vperm.xlu0 %1651, %v1581
        %v1653 = vpop.permute.xlu0 %1652
        %1654 = vset.pattern.permute.xlu0 0
        %1655 = vperm.xlu0 %1654, %v1582
        %v1656 = vpop.permute.xlu0 %1655
        %1657 = vset.pattern.permute.xlu0 0
        %1658 = vperm.xlu0 %1657, %v1583
        %v1659 = vpop.permute.xlu0 %1658
        %1660 = vset.pattern.permute.xlu0 0
        %1661 = vperm.xlu0 %1660, %v1584
        %v1662 = vpop.permute.xlu0 %1661
        %1663 = vset.pattern.permute.xlu0 0
        %1664 = vperm.xlu0 %1663, %v1585
        %v1665 = vpop.permute.xlu0 %1664
        %1666 = vset.pattern.permute.xlu0 0
        %1667 = vperm.xlu0 %1666, %v1586
        %v1668 = vpop.permute.xlu0 %1667
        %1669 = vset.pattern.permute.xlu0 0
        %1670 = vperm.xlu0 %1669, %v1587
        %v1671 = vpop.permute.xlu0 %1670
        %1672 = vset.pattern.permute.xlu0 0
        %1673 = vperm.xlu0 %1672, %v1588
        %v1674 = vpop.permute.xlu0 %1673
        %1675 = vset.pattern.permute.xlu0 0
        %1676 = vperm.xlu0 %1675, %v1589
        %v1677 = vpop.permute.xlu0 %1676
        %1678 = vset.pattern.permute.xlu0 0
        %1679 = vperm.xlu0 %1678, %v1590
        %v1680 = vpop.permute.xlu0 %1679
        %1681 = vset.pattern.permute.xlu0 0
        %1682 = vperm.xlu0 %1681, %v1591
        %v1683 = vpop.permute.xlu0 %1682
        %1684 = vset.pattern.permute.xlu0 0
        %1685 = vperm.xlu0 %1684, %v1592
        %v1686 = vpop.permute.xlu0 %1685
        %1687 = vset.pattern.permute.xlu0 0
        %1688 = vperm.xlu0 %1687, %v1593
        %v1689 = vpop.permute.xlu0 %1688
        %1690 = vset.pattern.permute.xlu0 0
        %1691 = vperm.xlu0 %1690, %v1594
        %v1692 = vpop.permute.xlu0 %1691
        %1693 = vset.pattern.permute.xlu0 0
        %1694 = vperm.xlu0 %1693, %v1595
        %v1695 = vpop.permute.xlu0 %1694
        %1696 = vset.pattern.permute.xlu0 0
        %1697 = vperm.xlu0 %1696, %v1596
        %v1698 = vpop.permute.xlu0 %1697
        %1699 = vset.pattern.permute.xlu0 0
        %1700 = vperm.xlu0 %1699, %v1597
        %v1701 = vpop.permute.xlu0 %1700
        %1702 = vset.pattern.permute.xlu0 0
        %1703 = vperm.xlu0 %1702, %v1598
        %v1704 = vpop.permute.xlu0 %1703
        %1705 = vset.pattern.permute.xlu0 0
        %1706 = vperm.xlu0 %1705, %v1599
        %v1707 = vpop.permute.xlu0 %1706
        %1708 = vset.pattern.permute.xlu0 0
        %1709 = vperm.xlu0 %1708, %v1600
        %v1710 = vpop.permute.xlu0 %1709
        %1711 = vset.pattern.permute.xlu0 0
        %1712 = vperm.xlu0 %1711, %v1601
        %v1713 = vpop.permute.xlu0 %1712
        %1714 = vset.pattern.permute.xlu0 0
        %1715 = vperm.xlu0 %1714, %v1602
        %v1716 = vpop.permute.xlu0 %1715
        %1717 = vset.pattern.permute.xlu0 0
        %1718 = vperm.xlu0 %1717, %v1603
        %v1719 = vpop.permute.xlu0 %1718
        %1720 = vset.pattern.permute.xlu0 0
        %1721 = vperm.xlu0 %1720, %v1604
        %v1722 = vpop.permute.xlu0 %1721
        %1723 = vset.pattern.permute.xlu0 0
        %1724 = vperm.xlu0 %1723, %v1605
        %v1725 = vpop.permute.xlu0 %1724
        %1726 = vset.pattern.permute.xlu0 0
        %1727 = vperm.xlu0 %1726, %v1606
        %v1728 = vpop.permute.xlu0 %1727
        %1729 = vset.pattern.permute.xlu0 0
        %1730 = vperm.xlu0 %1729, %v1607
        %v1731 = vpop.permute.xlu0 %1730
        %1732 = vset.pattern.permute.xlu0 0
        %1733 = vperm.xlu0 %1732, %v1608
        %v1734 = vpop.permute.xlu0 %1733
        %1735 = vset.pattern.permute.xlu0 0
        %1736 = vperm.xlu0 %1735, %v1609
        %v1737 = vpop.permute.xlu0 %1736
        %v1738 = vlaneseq
        %v1739 = vshrl.u32 %v1738, 7
        %v1740 = vsub.s32 %v845, %v1739
        %v1741 = vrot.slane %v1644, %v1740
        %v1742 = vlaneseq
        %v1743 = vshrl.u32 %v1742, 7
        %v1744 = vsub.s32 %v850, %v1743
        %v1745 = vrot.slane %v1647, %v1744
        %v1746 = vsel %vm855, %v1745, %v1741
        %v1747 = vlaneseq
        %v1748 = vshrl.u32 %v1747, 7
        %v1749 = vsub.s32 %v845, %v1748
        %v1750 = vrot.slane %v1650, %v1749
        %v1751 = vlaneseq
        %v1752 = vshrl.u32 %v1751, 7
        %v1753 = vsub.s32 %v850, %v1752
        %v1754 = vrot.slane %v1653, %v1753
        %v1755 = vsel %vm855, %v1754, %v1750
        %v1756 = vlaneseq
        %v1757 = vshrl.u32 %v1756, 7
        %v1758 = vsub.s32 %v845, %v1757
        %v1759 = vrot.slane %v1656, %v1758
        %v1760 = vlaneseq
        %v1761 = vshrl.u32 %v1760, 7
        %v1762 = vsub.s32 %v850, %v1761
        %v1763 = vrot.slane %v1659, %v1762
        %v1764 = vsel %vm855, %v1763, %v1759
        %v1765 = vlaneseq
        %v1766 = vshrl.u32 %v1765, 7
        %v1767 = vsub.s32 %v845, %v1766
        %v1768 = vrot.slane %v1662, %v1767
        %v1769 = vlaneseq
        %v1770 = vshrl.u32 %v1769, 7
        %v1771 = vsub.s32 %v850, %v1770
        %v1772 = vrot.slane %v1665, %v1771
        %v1773 = vsel %vm855, %v1772, %v1768
        %v1774 = vlaneseq
        %v1775 = vshrl.u32 %v1774, 7
        %v1776 = vsub.s32 %v845, %v1775
        %v1777 = vrot.slane %v1668, %v1776
        %v1778 = vlaneseq
        %v1779 = vshrl.u32 %v1778, 7
        %v1780 = vsub.s32 %v850, %v1779
        %v1781 = vrot.slane %v1671, %v1780
        %v1782 = vsel %vm855, %v1781, %v1777
        %v1783 = vlaneseq
        %v1784 = vshrl.u32 %v1783, 7
        %v1785 = vsub.s32 %v845, %v1784
        %v1786 = vrot.slane %v1674, %v1785
        %v1787 = vlaneseq
        %v1788 = vshrl.u32 %v1787, 7
        %v1789 = vsub.s32 %v850, %v1788
        %v1790 = vrot.slane %v1677, %v1789
        %v1791 = vsel %vm855, %v1790, %v1786
        %v1792 = vlaneseq
        %v1793 = vshrl.u32 %v1792, 7
        %v1794 = vsub.s32 %v845, %v1793
        %v1795 = vrot.slane %v1680, %v1794
        %v1796 = vlaneseq
        %v1797 = vshrl.u32 %v1796, 7
        %v1798 = vsub.s32 %v850, %v1797
        %v1799 = vrot.slane %v1683, %v1798
        %v1800 = vsel %vm855, %v1799, %v1795
        %v1801 = vlaneseq
        %v1802 = vshrl.u32 %v1801, 7
        %v1803 = vsub.s32 %v845, %v1802
        %v1804 = vrot.slane %v1686, %v1803
        %v1805 = vlaneseq
        %v1806 = vshrl.u32 %v1805, 7
        %v1807 = vsub.s32 %v850, %v1806
        %v1808 = vrot.slane %v1689, %v1807
        %v1809 = vsel %vm855, %v1808, %v1804
        %v1810 = vlaneseq
        %v1811 = vshrl.u32 %v1810, 7
        %v1812 = vsub.s32 %v845, %v1811
        %v1813 = vrot.slane %v1692, %v1812
        %v1814 = vlaneseq
        %v1815 = vshrl.u32 %v1814, 7
        %v1816 = vsub.s32 %v850, %v1815
        %v1817 = vrot.slane %v1695, %v1816
        %v1818 = vsel %vm855, %v1817, %v1813
        %v1819 = vlaneseq
        %v1820 = vshrl.u32 %v1819, 7
        %v1821 = vsub.s32 %v845, %v1820
        %v1822 = vrot.slane %v1698, %v1821
        %v1823 = vlaneseq
        %v1824 = vshrl.u32 %v1823, 7
        %v1825 = vsub.s32 %v850, %v1824
        %v1826 = vrot.slane %v1701, %v1825
        %v1827 = vsel %vm855, %v1826, %v1822
        %v1828 = vlaneseq
        %v1829 = vshrl.u32 %v1828, 7
        %v1830 = vsub.s32 %v845, %v1829
        %v1831 = vrot.slane %v1704, %v1830
        %v1832 = vlaneseq
        %v1833 = vshrl.u32 %v1832, 7
        %v1834 = vsub.s32 %v850, %v1833
        %v1835 = vrot.slane %v1707, %v1834
        %v1836 = vsel %vm855, %v1835, %v1831
        %v1837 = vlaneseq
        %v1838 = vshrl.u32 %v1837, 7
        %v1839 = vsub.s32 %v845, %v1838
        %v1840 = vrot.slane %v1710, %v1839
        %v1841 = vlaneseq
        %v1842 = vshrl.u32 %v1841, 7
        %v1843 = vsub.s32 %v850, %v1842
        %v1844 = vrot.slane %v1713, %v1843
        %v1845 = vsel %vm855, %v1844, %v1840
        %v1846 = vlaneseq
        %v1847 = vshrl.u32 %v1846, 7
        %v1848 = vsub.s32 %v845, %v1847
        %v1849 = vrot.slane %v1716, %v1848
        %v1850 = vlaneseq
        %v1851 = vshrl.u32 %v1850, 7
        %v1852 = vsub.s32 %v850, %v1851
        %v1853 = vrot.slane %v1719, %v1852
        %v1854 = vsel %vm855, %v1853, %v1849
        %v1855 = vlaneseq
        %v1856 = vshrl.u32 %v1855, 7
        %v1857 = vsub.s32 %v845, %v1856
        %v1858 = vrot.slane %v1722, %v1857
        %v1859 = vlaneseq
        %v1860 = vshrl.u32 %v1859, 7
        %v1861 = vsub.s32 %v850, %v1860
        %v1862 = vrot.slane %v1725, %v1861
        %v1863 = vsel %vm855, %v1862, %v1858
        %v1864 = vlaneseq
        %v1865 = vshrl.u32 %v1864, 7
        %v1866 = vsub.s32 %v845, %v1865
        %v1867 = vrot.slane %v1728, %v1866
        %v1868 = vlaneseq
        %v1869 = vshrl.u32 %v1868, 7
        %v1870 = vsub.s32 %v850, %v1869
        %v1871 = vrot.slane %v1731, %v1870
        %v1872 = vsel %vm855, %v1871, %v1867
        %v1873 = vlaneseq
        %v1874 = vshrl.u32 %v1873, 7
        %v1875 = vsub.s32 %v845, %v1874
        %v1876 = vrot.slane %v1734, %v1875
        %v1877 = vlaneseq
        %v1878 = vshrl.u32 %v1877, 7
        %v1879 = vsub.s32 %v850, %v1878
        %v1880 = vrot.slane %v1737, %v1879
        %v1881 = vsel %vm855, %v1880, %v1876
        %v1882 = vsel %vm992, %v1755, %v1746
        %v1883 = vsel %vm994, %v1764, %v1882
        %v1884 = vsel %vm996, %v1773, %v1883
        %v1885 = vsel %vm998, %v1782, %v1884
        %v1886 = vsel %vm1000, %v1791, %v1885
        %v1887 = vsel %vm1002, %v1800, %v1886
        %v1888 = vsel %vm1004, %v1809, %v1887
        %v1889 = vsel %vm992, %v1827, %v1818
        %v1890 = vsel %vm994, %v1836, %v1889
        %v1891 = vsel %vm996, %v1845, %v1890
        %v1892 = vsel %vm998, %v1854, %v1891
        %v1893 = vsel %vm1000, %v1863, %v1892
        %v1894 = vsel %vm1002, %v1872, %v1893
        %v1895 = vsel %vm1004, %v1881, %v1894
        %1898 = vst.msk [vmem:[%s308] sm:$0xff] %vm1015, %v1888
        %1899 = vst.msk [vmem:[%s308 + $0x8] sm:$0xff] %vm1015, %v1895
        %v1900 = vunpack.c.l.bf16 %v317
        %v1901 = vunpack.c.l.bf16 %v318
        %v1902 = vunpack.c.l.bf16 %v319
        %v1903 = vunpack.c.l.bf16 %v320
        %v1904 = vunpack.c.l.bf16 %v321
        %v1905 = vunpack.c.l.bf16 %v322
        %v1906 = vunpack.c.l.bf16 %v323
        %v1907 = vunpack.c.l.bf16 %v324
        %v1908 = vunpack.c.l.bf16 %v325
        %v1909 = vunpack.c.l.bf16 %v326
        %v1910 = vunpack.c.l.bf16 %v327
        %v1911 = vunpack.c.l.bf16 %v328
        %v1912 = vunpack.c.l.bf16 %v329
        %v1913 = vunpack.c.l.bf16 %v330
        %v1914 = vunpack.c.l.bf16 %v331
        %v1915 = vunpack.c.l.bf16 %v332
        %v1916 = vunpack.c.l.bf16 %v333
        %v1917 = vunpack.c.l.bf16 %v334
        %v1918 = vunpack.c.l.bf16 %v335
        %v1919 = vunpack.c.l.bf16 %v336
        %v1920 = vunpack.c.l.bf16 %v337
        %v1921 = vunpack.c.l.bf16 %v338
        %v1922 = vunpack.c.l.bf16 %v339
        %v1923 = vunpack.c.l.bf16 %v340
        %v1924 = vunpack.c.l.bf16 %v341
        %v1925 = vunpack.c.l.bf16 %v342
        %v1926 = vunpack.c.l.bf16 %v343
        %v1927 = vunpack.c.l.bf16 %v344
        %v1928 = vunpack.c.l.bf16 %v345
        %v1929 = vunpack.c.l.bf16 %v346
        %v1930 = vunpack.c.l.bf16 %v347
        %v1931 = vunpack.c.l.bf16 %v348
        %v1964 = vmul.f32 %v1900, %v1644
        %v1965 = vmul.f32 %v1901, %v1647
        %v1966 = vmul.f32 %v1902, %v1650
        %v1967 = vmul.f32 %v1903, %v1653
        %v1968 = vmul.f32 %v1904, %v1656
        %v1969 = vmul.f32 %v1905, %v1659
        %v1970 = vmul.f32 %v1906, %v1662
        %v1971 = vmul.f32 %v1907, %v1665
        %v1972 = vmul.f32 %v1908, %v1668
        %v1973 = vmul.f32 %v1909, %v1671
        %v1974 = vmul.f32 %v1910, %v1674
        %v1975 = vmul.f32 %v1911, %v1677
        %v1976 = vmul.f32 %v1912, %v1680
        %v1977 = vmul.f32 %v1913, %v1683
        %v1978 = vmul.f32 %v1914, %v1686
        %v1979 = vmul.f32 %v1915, %v1689
        %v1980 = vmul.f32 %v1916, %v1692
        %v1981 = vmul.f32 %v1917, %v1695
        %v1982 = vmul.f32 %v1918, %v1698
        %v1983 = vmul.f32 %v1919, %v1701
        %v1984 = vmul.f32 %v1920, %v1704
        %v1985 = vmul.f32 %v1921, %v1707
        %v1986 = vmul.f32 %v1922, %v1710
        %v1987 = vmul.f32 %v1923, %v1713
        %v1988 = vmul.f32 %v1924, %v1716
        %v1989 = vmul.f32 %v1925, %v1719
        %v1990 = vmul.f32 %v1926, %v1722
        %v1991 = vmul.f32 %v1927, %v1725
        %v1992 = vmul.f32 %v1928, %v1728
        %v1993 = vmul.f32 %v1929, %v1731
        %v1994 = vmul.f32 %v1930, %v1734
        %v1995 = vmul.f32 %v1931, %v1737
        %v1996 = vadd.f32 %v1964, %v1965
        %v1997 = vrot.slane %v1996, 4
        %v1998 = vadd.f32 %v1996, %v1997
        %v1999 = vrot.slane %v1998, 2
        %v2000 = vadd.f32 %v1998, %v1999
        %v2001 = vrot.slane %v2000, 1
        %v2002 = vadd.f32 %v2000, %v2001
        %v2003 = vadd.f32 %v1966, %v1967
        %v2004 = vrot.slane %v2003, 4
        %v2005 = vadd.f32 %v2003, %v2004
        %v2006 = vrot.slane %v2005, 2
        %v2007 = vadd.f32 %v2005, %v2006
        %v2008 = vrot.slane %v2007, 1
        %v2009 = vadd.f32 %v2007, %v2008
        %v2010 = vadd.f32 %v1968, %v1969
        %v2011 = vrot.slane %v2010, 4
        %v2012 = vadd.f32 %v2010, %v2011
        %v2013 = vrot.slane %v2012, 2
        %v2014 = vadd.f32 %v2012, %v2013
        %v2015 = vrot.slane %v2014, 1
        %v2016 = vadd.f32 %v2014, %v2015
        %v2017 = vadd.f32 %v1970, %v1971
        %v2018 = vrot.slane %v2017, 4
        %v2019 = vadd.f32 %v2017, %v2018
        %v2020 = vrot.slane %v2019, 2
        %v2021 = vadd.f32 %v2019, %v2020
        %v2022 = vrot.slane %v2021, 1
        %v2023 = vadd.f32 %v2021, %v2022
        %v2024 = vadd.f32 %v1972, %v1973
        %v2025 = vrot.slane %v2024, 4
        %v2026 = vadd.f32 %v2024, %v2025
        %v2027 = vrot.slane %v2026, 2
        %v2028 = vadd.f32 %v2026, %v2027
        %v2029 = vrot.slane %v2028, 1
        %v2030 = vadd.f32 %v2028, %v2029
        %v2031 = vadd.f32 %v1974, %v1975
        %v2032 = vrot.slane %v2031, 4
        %v2033 = vadd.f32 %v2031, %v2032
        %v2034 = vrot.slane %v2033, 2
        %v2035 = vadd.f32 %v2033, %v2034
        %v2036 = vrot.slane %v2035, 1
        %v2037 = vadd.f32 %v2035, %v2036
        %v2038 = vadd.f32 %v1976, %v1977
        %v2039 = vrot.slane %v2038, 4
        %v2040 = vadd.f32 %v2038, %v2039
        %v2041 = vrot.slane %v2040, 2
        %v2042 = vadd.f32 %v2040, %v2041
        %v2043 = vrot.slane %v2042, 1
        %v2044 = vadd.f32 %v2042, %v2043
        %v2045 = vadd.f32 %v1978, %v1979
        %v2046 = vrot.slane %v2045, 4
        %v2047 = vadd.f32 %v2045, %v2046
        %v2048 = vrot.slane %v2047, 2
        %v2049 = vadd.f32 %v2047, %v2048
        %v2050 = vrot.slane %v2049, 1
        %v2051 = vadd.f32 %v2049, %v2050
        %v2052 = vadd.f32 %v1980, %v1981
        %v2053 = vrot.slane %v2052, 4
        %v2054 = vadd.f32 %v2052, %v2053
        %v2055 = vrot.slane %v2054, 2
        %v2056 = vadd.f32 %v2054, %v2055
        %v2057 = vrot.slane %v2056, 1
        %v2058 = vadd.f32 %v2056, %v2057
        %v2059 = vadd.f32 %v1982, %v1983
        %v2060 = vrot.slane %v2059, 4
        %v2061 = vadd.f32 %v2059, %v2060
        %v2062 = vrot.slane %v2061, 2
        %v2063 = vadd.f32 %v2061, %v2062
        %v2064 = vrot.slane %v2063, 1
        %v2065 = vadd.f32 %v2063, %v2064
        %v2066 = vadd.f32 %v1984, %v1985
        %v2067 = vrot.slane %v2066, 4
        %v2068 = vadd.f32 %v2066, %v2067
        %v2069 = vrot.slane %v2068, 2
        %v2070 = vadd.f32 %v2068, %v2069
        %v2071 = vrot.slane %v2070, 1
        %v2072 = vadd.f32 %v2070, %v2071
        %v2073 = vadd.f32 %v1986, %v1987
        %v2074 = vrot.slane %v2073, 4
        %v2075 = vadd.f32 %v2073, %v2074
        %v2076 = vrot.slane %v2075, 2
        %v2077 = vadd.f32 %v2075, %v2076
        %v2078 = vrot.slane %v2077, 1
        %v2079 = vadd.f32 %v2077, %v2078
        %v2080 = vadd.f32 %v1988, %v1989
        %v2081 = vrot.slane %v2080, 4
        %v2082 = vadd.f32 %v2080, %v2081
        %v2083 = vrot.slane %v2082, 2
        %v2084 = vadd.f32 %v2082, %v2083
        %v2085 = vrot.slane %v2084, 1
        %v2086 = vadd.f32 %v2084, %v2085
        %v2087 = vadd.f32 %v1990, %v1991
        %v2088 = vrot.slane %v2087, 4
        %v2089 = vadd.f32 %v2087, %v2088
        %v2090 = vrot.slane %v2089, 2
        %v2091 = vadd.f32 %v2089, %v2090
        %v2092 = vrot.slane %v2091, 1
        %v2093 = vadd.f32 %v2091, %v2092
        %v2094 = vadd.f32 %v1992, %v1993
        %v2095 = vrot.slane %v2094, 4
        %v2096 = vadd.f32 %v2094, %v2095
        %v2097 = vrot.slane %v2096, 2
        %v2098 = vadd.f32 %v2096, %v2097
        %v2099 = vrot.slane %v2098, 1
        %v2100 = vadd.f32 %v2098, %v2099
        %v2101 = vadd.f32 %v1994, %v1995
        %v2102 = vrot.slane %v2101, 4
        %v2103 = vadd.f32 %v2101, %v2102
        %v2104 = vrot.slane %v2103, 2
        %v2105 = vadd.f32 %v2103, %v2104
        %v2106 = vrot.slane %v2105, 1
        %v2107 = vadd.f32 %v2105, %v2106
        %v2108 = vpack.c.bf16 %v2002, %v2002
        %v2109 = vpack.c.bf16 %v2009, %v2009
        %v2110 = vpack.c.bf16 %v2016, %v2016
        %v2111 = vpack.c.bf16 %v2023, %v2023
        %v2112 = vpack.c.bf16 %v2030, %v2030
        %v2113 = vpack.c.bf16 %v2037, %v2037
        %v2114 = vpack.c.bf16 %v2044, %v2044
        %v2115 = vpack.c.bf16 %v2051, %v2051
        %v2116 = vpack.c.bf16 %v2058, %v2058
        %v2117 = vpack.c.bf16 %v2065, %v2065
        %v2118 = vpack.c.bf16 %v2072, %v2072
        %v2119 = vpack.c.bf16 %v2079, %v2079
        %v2120 = vpack.c.bf16 %v2086, %v2086
        %v2121 = vpack.c.bf16 %v2093, %v2093
        %v2122 = vpack.c.bf16 %v2100, %v2100
        %v2123 = vpack.c.bf16 %v2107, %v2107
        %v2124 = vld [vmem:[%s4] sm:$0xf]
        %v2125 = vld [vmem:[%s4 + $0x4] sm:$0xf]
        %v2126 = vld [vmem:[%s4 + $0x8] sm:$0xf]
        %v2127 = vld [vmem:[%s4 + $0xc] sm:$0xf]
        %v2128 = vld [vmem:[%s4 + $0x10] sm:$0xf]
        %v2129 = vld [vmem:[%s4 + $0x14] sm:$0xf]
        %v2130 = vld [vmem:[%s4 + $0x18] sm:$0xf]
        %v2131 = vld [vmem:[%s4 + $0x1c] sm:$0xf]
        %v2132 = vld [vmem:[%s4 + $0x20] sm:$0xf]
        %v2133 = vld [vmem:[%s4 + $0x24] sm:$0xf]
        %v2134 = vld [vmem:[%s4 + $0x28] sm:$0xf]
        %v2135 = vld [vmem:[%s4 + $0x2c] sm:$0xf]
        %v2136 = vld [vmem:[%s4 + $0x30] sm:$0xf]
        %v2137 = vld [vmem:[%s4 + $0x34] sm:$0xf]
        %v2138 = vld [vmem:[%s4 + $0x38] sm:$0xf]
        %v2139 = vld [vmem:[%s4 + $0x3c] sm:$0xf]
        %v2140 = vld [vmem:[%s5] sm:$0x1]
        %v2142 = vlaneseq
        %v2143 = vshrl.u32 %v2142, 7
        %v2144 = vsub.s32 0, %v2143
        %v2145 = vrot.slane %v2140, %v2144
        %v2163 = vunpack.c.l.b16 %v2108
        %v2164 = vunpack.c.l.b16 %v2109
        %v2165 = vunpack.c.l.b16 %v2110
        %v2166 = vunpack.c.l.b16 %v2111
        %v2167 = vunpack.c.l.b16 %v2112
        %v2168 = vunpack.c.l.b16 %v2113
        %v2169 = vunpack.c.l.b16 %v2114
        %v2170 = vunpack.c.l.b16 %v2115
        %v2171 = vunpack.c.l.b16 %v2116
        %v2172 = vunpack.c.l.b16 %v2117
        %v2173 = vunpack.c.l.b16 %v2118
        %v2174 = vunpack.c.l.b16 %v2119
        %v2175 = vunpack.c.l.b16 %v2120
        %v2176 = vunpack.c.l.b16 %v2121
        %v2177 = vunpack.c.l.b16 %v2122
        %v2178 = vunpack.c.l.b16 %v2123
        %v2179 = vsel %vm992, %v2164, %v2163
        %v2180 = vsel %vm994, %v2165, %v2179
        %v2181 = vsel %vm996, %v2166, %v2180
        %v2182 = vsel %vm998, %v2167, %v2181
        %v2183 = vsel %vm1000, %v2168, %v2182
        %v2184 = vsel %vm1002, %v2169, %v2183
        %v2185 = vsel %vm1004, %v2170, %v2184
        %v2186 = vsel %vm992, %v2172, %v2171
        %v2187 = vsel %vm994, %v2173, %v2186
        %v2188 = vsel %vm996, %v2174, %v2187
        %v2189 = vsel %vm998, %v2175, %v2188
        %v2190 = vsel %vm1000, %v2176, %v2189
        %v2191 = vsel %vm1002, %v2177, %v2190
        %v2192 = vsel %vm1004, %v2178, %v2191
        %v2193 = vpack.c.b16 %v2192, %v2185
        %v2211 = vunpack.c.l.b16 %v2124
        %v2212 = vunpack.c.l.b16 %v2125
        %v2213 = vunpack.c.l.b16 %v2126
        %v2214 = vunpack.c.l.b16 %v2127
        %v2215 = vunpack.c.l.b16 %v2128
        %v2216 = vunpack.c.l.b16 %v2129
        %v2217 = vunpack.c.l.b16 %v2130
        %v2218 = vunpack.c.l.b16 %v2131
        %v2219 = vunpack.c.l.b16 %v2132
        %v2220 = vunpack.c.l.b16 %v2133
        %v2221 = vunpack.c.l.b16 %v2134
        %v2222 = vunpack.c.l.b16 %v2135
        %v2223 = vunpack.c.l.b16 %v2136
        %v2224 = vunpack.c.l.b16 %v2137
        %v2225 = vunpack.c.l.b16 %v2138
        %v2226 = vunpack.c.l.b16 %v2139
        %v2227 = vpack.c.b16 %v2212, %v2211
        %v2228 = vpack.c.b16 %v2214, %v2213
        %v2229 = vpack.c.b16 %v2216, %v2215
        %v2230 = vpack.c.b16 %v2218, %v2217
        %v2231 = vpack.c.b16 %v2220, %v2219
        %v2232 = vpack.c.b16 %v2222, %v2221
        %v2233 = vpack.c.b16 %v2224, %v2223
        %v2234 = vpack.c.b16 %v2226, %v2225
        %2243 = vmatprep.subr.bf16.mxu0 0
        %2244 = vmatpush1.bf16.msra.mxu0 %v2227
        %2245 = vmatprep.subr.bf16.mxu0 0
        %2246 = vmatpush1.bf16.msra.mxu0 %v2228
        %2247 = vmatprep.subr.bf16.mxu0 0
        %2248 = vmatpush1.bf16.msra.mxu0 %v2229
        %2249 = vmatprep.subr.bf16.mxu0 0
        %2250 = vmatpush1.bf16.msra.mxu0 %v2230
        %2251 = vmatprep.subr.bf16.mxu0 0
        %2252 = vmatpush1.bf16.msra.mxu0 %v2231
        %2253 = vmatprep.subr.bf16.mxu0 0
        %2254 = vmatpush1.bf16.msra.mxu0 %v2232
        %2255 = vmatprep.subr.bf16.mxu0 0
        %2256 = vmatpush1.bf16.msra.mxu0 %v2233
        %2257 = vmatprep.subr.bf16.mxu0 0
        %2258 = vmatpush1.bf16.msra.mxu0 %v2234
        %2259 = vmatprep.subr.bf16.mxu0 0
        %2260 = vmatpush1.bf16.msra.mxu0 0
        %2261 = vmatprep.subr.bf16.mxu0 0
        %2262 = vmatpush1.bf16.msra.mxu0 0
        %2263 = vmatprep.subr.bf16.mxu0 0
        %2264 = vmatpush1.bf16.msra.mxu0 0
        %2265 = vmatprep.subr.bf16.mxu0 0
        %2266 = vmatpush1.bf16.msra.mxu0 0
        %2267 = vmatprep.subr.bf16.mxu0 0
        %2268 = vmatpush1.bf16.msra.mxu0 0
        %2269 = vmatprep.subr.bf16.mxu0 0
        %2270 = vmatpush1.bf16.msra.mxu0 0
        %2271 = vmatprep.subr.bf16.mxu0 0
        %2272 = vmatpush1.bf16.msra.mxu0 0
        %2273 = vmatprep.subr.bf16.mxu0 0
        %2274 = vmatpush1.bf16.msra.mxu0 0
        %2275 = vmatprep.mubr.bf16.mxu0 0
        %2276 = vmatmul.mubr.bf16.gmra.mrb[0].mxu0 %v2193
        %v2277 = vpop.f32.mrb[0].mxu0
        %v2278 = vadd.f32 %v2145, %v2277
        %v2279 = vpop.f32.mrb[0].mxu0
        %v2280 = vpop.f32.mrb[0].mxu0
        %v2281 = vadd.f32 %v2145, %v2280
        %v2282 = vpop.f32.mrb[0].mxu0
        %2283 = vdwg.mxu0
        %vm2284 = vcmask 64512
        %2285 = vst.msk [vmem:[%s314] sm:$0xff] %vm2284, %v2278
        %2286 = vst.msk [vmem:[%s314 + $0x8] sm:$0xff] %vm2284, %v2281
        %s2287 = smul.u32 2, %s22
        %p2288 = scmp.lt.s32.totalorder %s2287, 3
        %s2289 = scalar_select %p2288, %s2287, 3
        %s2290 = smul.addr %s2289, 8
        %s2291 = scalar_lea.vmem %s6, %s2290
        %s2292 = smul.u32 2, %s22
        %p2293 = scmp.lt.s32.totalorder %s2292, 3
        %s2294 = scalar_select %p2293, %s2292, 3
        %s2295 = smul.addr %s2294, 8
        %s2296 = scalar_lea.vmem %s7, %s2295
        // Predicated region
        $region49: #{tpu_custom_call.1} parent=43 // pred_check
          %p2297 = pneg %p171
        $region50: #{tpu_custom_call.1} parent=43 // pred_check_branch
          %2299 = sbr.rel (%p2297) target = $region52
        $region51: #{tpu_custom_call.1} parent=43 // pred_region
          %s2300 = smul.u32 2, %s22
        $region52: #{tpu_custom_call.1} parent=43 // pred_fallthru
          _
        // Predicated region
        $region53: #{tpu_custom_call.1} parent=43 // pred_check
          %p2301 = pneg %p197
        $region54: #{tpu_custom_call.1} parent=43 // pred_check_branch
          %2303 = sbr.rel (%p2301) target = $region56
        $region55: #{tpu_custom_call.1} parent=43 // pred_region
          %s2304 = smul.u32 2, %s22
        $region56: #{tpu_custom_call.1} parent=43 // pred_fallthru
          _
      $region44: #{tpu_custom_call.1} parent=5 // pred_fallthru
        _
      %p2305 = scmp.le.s32.totalorder 2, %s17
      // Predicated region
      $region57: #{tpu_custom_call.1} parent=5 // pred_check
        %p2306 = pneg %p2305
      $region58: #{tpu_custom_call.1} parent=5 // pred_check_branch
        %2308 = sbr.rel (%p2306) target = $region60
      $region59: #{tpu_custom_call.1} parent=5 // pred_region
        %s2309 = ssub.s32 %s17, 2
        // Predicated region
        $region61: #{tpu_custom_call.1} parent=59 // pred_check
          %p2310 = pneg %p177
        $region62: #{tpu_custom_call.1} parent=59 // pred_check_branch
          %2312 = sbr.rel (%p2310) target = $region64
        $region63: #{tpu_custom_call.1} parent=59 // pred_region
          %s2313 = smul.u32 2, %s23
          %p2314 = scmp.lt.s32.totalorder %s2313, 3
          %s2315 = scalar_select %p2314, %s2313, 3
          %s2316 = smul.addr %s2315, 8
          %s2317 = scalar_lea.vmem %s6, %s2316
        $region64: #{tpu_custom_call.1} parent=59 // pred_fallthru
          _
        // Predicated region
        $region65: #{tpu_custom_call.1} parent=59 // pred_check
          %p2318 = pneg %p203
        $region66: #{tpu_custom_call.1} parent=59 // pred_check_branch
          %2320 = sbr.rel (%p2318) target = $region68
        $region67: #{tpu_custom_call.1} parent=59 // pred_region
          %s2321 = smul.u32 2, %s23
          %p2322 = scmp.lt.s32.totalorder %s2321, 3
          %s2323 = scalar_select %p2322, %s2321, 3
          %s2324 = smul.addr %s2323, 8
          %s2325 = scalar_lea.vmem %s7, %s2324
        $region68: #{tpu_custom_call.1} parent=59 // pred_fallthru
          _
      $region60: #{tpu_custom_call.1} parent=5 // pred_fallthru
        _
    $region6: #{tpu_custom_call.1} parent=1 // loop_footer
      %s21 = sadd.s32 1, %s17
    $region7: #{tpu_custom_call.1} parent=1 // loop_footer_branch
      %16 = sbr.rel target = $region3
    $region8: #{tpu_custom_call.1} parent=1 // loop_exit
      _
    %2326 = vsyncpa [#allocation3], 1
    %s2327 = scalar_lea.sflag [#allocation3], 1
    %2328 = vsyncpa %s2327, 1

// kernel: tpu_custom_call.1
$region0: #{tpu_custom_call.1}
  #allocation0 [shape = 'u32[]', space=smem, size = 0x4, offset = 0x4, fixed_abs, tag = 'smem constant byte address 0x4 - core index']
  #allocation1 [shape = 'u32[144,128]{1,0:T(1,128)}', space=vmem, size = 0x12000, scoped, tag = 'internal scratch']
  %s0 = inlined_call_operand.hbm [shape: bf16[32,16,128], index: 0, kind: input, shape index: {}]
  %s1 = inlined_call_operand.vmem [shape: bf16[128,128], index: 1, kind: input, shape index: {}]
  %s2 = inlined_call_operand.vmem [shape: f32[1,128], index: 2, kind: input, shape index: {}]
  %s3 = inlined_call_operand.vmem [shape: f32[1,128], index: 3, kind: input, shape index: {}]
  %s4 = inlined_call_operand.vmem [shape: bf16[128,8], index: 4, kind: input, shape index: {}]
  %s5 = inlined_call_operand.vmem [shape: f32[1,8], index: 5, kind: input, shape index: {}]
  %s6 = inlined_call_operand.vmem [shape: f32[32,16], index: 6, kind: output, shape index: {0}]
  %s7 = inlined_call_operand.vmem [shape: f32[32,8], index: 7, kind: output, shape index: {1}]
  %8 = xla_tuple %s6, %s7
  %s9 = sld [smem:[#allocation0]]
  $region69: #{tpu_custom_call.1} parent=0
    _
  %s11 = ssub.s32 1, %s9
  %s12 = scalar_select 0, %s11, %s9
  $region1: #{tpu_custom_call.1} parent=0
    #allocation2 [shape = 'u8[131072]{0}', space=vmem, size = 0x20000, scoped, tag = 'input window, operand 0']
    #allocation3 [shape = 's32[2]{0}', space=sflag, size = 0x8, scoped, tag = 'scoped memory for tpu_custom_call.1']
    %13 = vsyncpa [#allocation3], 0
    %s14 = scalar_lea.sflag [#allocation3], 1
    %15 = vsyncpa %s14, 0
    loop: start=0, step=1, limit=4
    $region2: #{tpu_custom_call.1} parent=1 // loop_pre_header
      _
    $region3: #{tpu_custom_call.1} parent=1 // loop_header
      %s17 = sphi 0, %s21
      %p18 = scmp.ge.s32.totalorder %s17, 4
      %s27 = sphi 0, %s29
      %s30 = sphi 0, %s27
      %s31 = sphi 0, %s30
      %s47 = sphi 0, %s31
      %s51 = sphi 0, %s51
      %s53 = sphi 0, %s51
      %s54 = sphi 0, %s53
      %s68 = sphi 0, %s54
      %s72 = sphi 0, %s72
      %s74 = sphi 0, %s72
      %s75 = sphi 0, %s74
      %s89 = sphi 0, %s75
      %s93 = sphi 0, %s93
      %s95 = sphi 0, %s93
      %s96 = sphi 0, %s95
      %s110 = sphi 0, %s96
      %s114 = sphi 0, %s114
      %s116 = sphi 0, %s114
      %s117 = sphi 0, %s116
      %s131 = sphi 0, %s117
      %s135 = sphi 0, %s135
      %s137 = sphi 0, %s135
      %s138 = sphi 0, %s137
      %s152 = sphi 0, %s138
      %s158 = sphi 0, %s160
      %s161 = sphi 0, %s158
      %s162 = sphi 0, %s161
      %s178 = sphi 0, %s162
      %s184 = sphi 0, %s186
      %s187 = sphi 0, %s184
      %s188 = sphi 0, %s187
      %s204 = sphi 0, %s188
    $region4: #{tpu_custom_call.1} parent=1 // loop_header_branch
      %20 = sbr.rel (%p18) target = $region8
    $region5: #{tpu_custom_call.1} parent=1 // loop_body
      %s22 = ssub.s32 %s17, 1
      %s23 = ssub.s32 %s17, 2
      %s24 = sadd.s32 %s17, 1
      %s25 = ssub.s32 %s17, %s24
      %p26 = scmp.eq.s32.totalorder %s25, 0
      %s28 = sadd.s32 %s27, 1
      %s29 = scalar_select %p26, %s27, %s28
      %p32 = pneg %p26
      %p33 = scmp.eq.s32.totalorder %s17, 1
      %p34 = por %p32, %p33
      %p35 = scmp.ne.s32.totalorder %s27, %s30
      %p36 = scmp.eq.s32.totalorder %s17, 0
      %p37 = por %p35, %p36
      %p38 = scmp.ne.s32.totalorder %s27, %s30
      %p39 = scmp.eq.s32.totalorder %s22, 1
      %p40 = por %p38, %p39
      %p41 = scmp.ne.s32.totalorder %s30, %s31
      %p42 = scmp.eq.s32.totalorder %s22, 0
      %p43 = por %p41, %p42
      %p44 = scmp.ne.s32.totalorder %s30, %s31
      %p45 = scmp.eq.s32.totalorder %s23, 1
      %p46 = por %p44, %p45
      %p48 = scmp.ne.s32.totalorder %s31, %s47
      %p49 = scmp.eq.s32.totalorder %s23, 0
      %p50 = por %p48, %p49
      %s52 = sadd.s32 %s51, 1
      %p55 = scmp.eq.s32.totalorder %s17, 1
      %p56 = scmp.ne.s32.totalorder %s51, %s53
      %p57 = scmp.eq.s32.totalorder %s17, 0
      %p58 = por %p56, %p57
      %p59 = scmp.ne.s32.totalorder %s51, %s53
      %p60 = scmp.eq.s32.totalorder %s22, 1
      %p61 = por %p59, %p60
      %p62 = scmp.ne.s32.totalorder %s53, %s54
      %p63 = scmp.eq.s32.totalorder %s22, 0
      %p64 = por %p62, %p63
      %p65 = scmp.ne.s32.totalorder %s53, %s54
      %p66 = scmp.eq.s32.totalorder %s23, 1
      %p67 = por %p65, %p66
      %p69 = scmp.ne.s32.totalorder %s54, %s68
      %p70 = scmp.eq.s32.totalorder %s23, 0
      %p71 = por %p69, %p70
      %s73 = sadd.s32 %s72, 1
      %p76 = scmp.eq.s32.totalorder %s17, 1
      %p77 = scmp.ne.s32.totalorder %s72, %s74
      %p78 = scmp.eq.s32.totalorder %s17, 0
      %p79 = por %p77, %p78
      %p80 = scmp.ne.s32.totalorder %s72, %s74
      %p81 = scmp.eq.s32.totalorder %s22, 1
      %p82 = por %p80, %p81
      %p83 = scmp.ne.s32.totalorder %s74, %s75
      %p84 = scmp.eq.s32.totalorder %s22, 0
      %p85 = por %p83, %p84
      %p86 = scmp.ne.s32.totalorder %s74, %s75
      %p87 = scmp.eq.s32.totalorder %s23, 1
      %p88 = por %p86, %p87
      %p90 = scmp.ne.s32.totalorder %s75, %s89
      %p91 = scmp.eq.s32.totalorder %s23, 0
      %p92 = por %p90, %p91
      %s94 = sadd.s32 %s93, 1
      %p97 = scmp.eq.s32.totalorder %s17, 1
      %p98 = scmp.ne.s32.totalorder %s93, %s95
      %p99 = scmp.eq.s32.totalorder %s17, 0
      %p100 = por %p98, %p99
      %p101 = scmp.ne.s32.totalorder %s93, %s95
      %p102 = scmp.eq.s32.totalorder %s22, 1
      %p103 = por %p101, %p102
      %p104 = scmp.ne.s32.totalorder %s95, %s96
      %p105 = scmp.eq.s32.totalorder %s22, 0
      %p106 = por %p104, %p105
      %p107 = scmp.ne.s32.totalorder %s95, %s96
      %p108 = scmp.eq.s32.totalorder %s23, 1
      %p109 = por %p107, %p108
      %p111 = scmp.ne.s32.totalorder %s96, %s110
      %p112 = scmp.eq.s32.totalorder %s23, 0
      %p113 = por %p111, %p112
      %s115 = sadd.s32 %s114, 1
      %p118 = scmp.eq.s32.totalorder %s17, 1
      %p119 = scmp.ne.s32.totalorder %s114, %s116
      %p120 = scmp.eq.s32.totalorder %s17, 0
      %p121 = por %p119, %p120
      %p122 = scmp.ne.s32.totalorder %s114, %s116
      %p123 = scmp.eq.s32.totalorder %s22, 1
      %p124 = por %p122, %p123
      %p125 = scmp.ne.s32.totalorder %s116, %s117
      %p126 = scmp.eq.s32.totalorder %s22, 0
      %p127 = por %p125, %p126
      %p128 = scmp.ne.s32.totalorder %s116, %s117
      %p129 = scmp.eq.s32.totalorder %s23, 1
      %p130 = por %p128, %p129
      %p132 = scmp.ne.s32.totalorder %s117, %s131
      %p133 = scmp.eq.s32.totalorder %s23, 0
      %p134 = por %p132, %p133
      %s136 = sadd.s32 %s135, 1
      %p139 = scmp.eq.s32.totalorder %s17, 1
      %p140 = scmp.ne.s32.totalorder %s135, %s137
      %p141 = scmp.eq.s32.totalorder %s17, 0
      %p142 = por %p140, %p141
      %p143 = scmp.ne.s32.totalorder %s135, %s137
      %p144 = scmp.eq.s32.totalorder %s22, 1
      %p145 = por %p143, %p144
      %p146 = scmp.ne.s32.totalorder %s137, %s138
      %p147 = scmp.eq.s32.totalorder %s22, 0
      %p148 = por %p146, %p147
      %p149 = scmp.ne.s32.totalorder %s137, %s138
      %p150 = scmp.eq.s32.totalorder %s23, 1
      %p151 = por %p149, %p150
      %p153 = scmp.ne.s32.totalorder %s138, %s152
      %p154 = scmp.eq.s32.totalorder %s23, 0
      %p155 = por %p153, %p154
      %s156 = ssub.s32 %s17, %s24
      %p157 = scmp.eq.s32.totalorder %s156, 0
      %s159 = sadd.s32 %s158, 1
      %s160 = scalar_select %p157, %s158, %s159
      %p163 = pneg %p157
      %p164 = scmp.eq.s32.totalorder %s17, 1
      %p165 = por %p163, %p164
      %p166 = scmp.ne.s32.totalorder %s158, %s161
      %p167 = scmp.eq.s32.totalorder %s17, 0
      %p168 = por %p166, %p167
      %p169 = scmp.ne.s32.totalorder %s158, %s161
      %p170 = scmp.eq.s32.totalorder %s22, 1
      %p171 = por %p169, %p170
      %p172 = scmp.ne.s32.totalorder %s161, %s162
      %p173 = scmp.eq.s32.totalorder %s22, 0
      %p174 = por %p172, %p173
      %p175 = scmp.ne.s32.totalorder %s161, %s162
      %p176 = scmp.eq.s32.totalorder %s23, 1
      %p177 = por %p175, %p176
      %p179 = scmp.ne.s32.totalorder %s162, %s178
      %p180 = scmp.eq.s32.totalorder %s23, 0
      %p181 = por %p179, %p180
      %s182 = ssub.s32 %s17, %s24
      %p183 = scmp.eq.s32.totalorder %s182, 0
      %s185 = sadd.s32 %s184, 1
      %s186 = scalar_select %p183, %s184, %s185
      %p189 = pneg %p183
      %p190 = scmp.eq.s32.totalorder %s17, 1
      %p191 = por %p189, %p190
      %p192 = scmp.ne.s32.totalorder %s184, %s187
      %p193 = scmp.eq.s32.totalorder %s17, 0
      %p194 = por %p192, %p193
      %p195 = scmp.ne.s32.totalorder %s184, %s187
      %p196 = scmp.eq.s32.totalorder %s22, 1
      %p197 = por %p195, %p196
      %p198 = scmp.ne.s32.totalorder %s187, %s188
      %p199 = scmp.eq.s32.totalorder %s22, 0
      %p200 = por %p198, %p199
      %p201 = scmp.ne.s32.totalorder %s187, %s188
      %p202 = scmp.eq.s32.totalorder %s23, 1
      %p203 = por %p201, %p202
      %p205 = scmp.ne.s32.totalorder %s188, %s204
      %p206 = scmp.eq.s32.totalorder %s23, 0
      %p207 = por %p205, %p206
      %p208 = scmp.le.s32.totalorder 1, %s17
      %p209 = scmp.lt.s32.totalorder %s17, 3
      %p210 = pnand %p208, %p209
      %p211 = pneg %p210
      // Predicated region
      $region9: #{tpu_custom_call.1} parent=5 // pred_check
        _
      $region10: #{tpu_custom_call.1} parent=5 // pred_check_branch
        %213 = sbr.rel (%p210) target = $region12
      $region11: #{tpu_custom_call.1} parent=5 // pred_region
        %s214 = ssub.s32 %s17, 1
        // Predicated region
        $region13: #{tpu_custom_call.1} parent=11 // pred_check
          %p215 = pneg %p64
        $region14: #{tpu_custom_call.1} parent=11 // pred_check_branch
          %217 = sbr.rel (%p215) target = $region16
        $region15: #{tpu_custom_call.1} parent=11 // pred_region
          _
        $region16: #{tpu_custom_call.1} parent=11 // pred_fallthru
          _
        // Predicated region
        $region17: #{tpu_custom_call.1} parent=11 // pred_check
          %p218 = pneg %p85
        $region18: #{tpu_custom_call.1} parent=11 // pred_check_branch
          %220 = sbr.rel (%p218) target = $region20
        $region19: #{tpu_custom_call.1} parent=11 // pred_region
          _
        $region20: #{tpu_custom_call.1} parent=11 // pred_fallthru
          _
        // Predicated region
        $region21: #{tpu_custom_call.1} parent=11 // pred_check
          %p221 = pneg %p106
        $region22: #{tpu_custom_call.1} parent=11 // pred_check_branch
          %223 = sbr.rel (%p221) target = $region24
        $region23: #{tpu_custom_call.1} parent=11 // pred_region
          _
        $region24: #{tpu_custom_call.1} parent=11 // pred_fallthru
          _
        // Predicated region
        $region25: #{tpu_custom_call.1} parent=11 // pred_check
          %p224 = pneg %p127
        $region26: #{tpu_custom_call.1} parent=11 // pred_check_branch
          %226 = sbr.rel (%p224) target = $region28
        $region27: #{tpu_custom_call.1} parent=11 // pred_region
          _
        $region28: #{tpu_custom_call.1} parent=11 // pred_fallthru
          _
        // Predicated region
        $region29: #{tpu_custom_call.1} parent=11 // pred_check
          %p227 = pneg %p148
        $region30: #{tpu_custom_call.1} parent=11 // pred_check_branch
          %229 = sbr.rel (%p227) target = $region32
        $region31: #{tpu_custom_call.1} parent=11 // pred_region
          _
        $region32: #{tpu_custom_call.1} parent=11 // pred_fallthru
          _
      $region12: #{tpu_custom_call.1} parent=5 // pred_fallthru
        _
      %p230 = scmp.lt.s32.totalorder %s17, 2
      // Predicated region
      $region33: #{tpu_custom_call.1} parent=5 // pred_check
        %p231 = pneg %p230
      $region34: #{tpu_custom_call.1} parent=5 // pred_check_branch
        %233 = sbr.rel (%p231) target = $region36
      $region35: #{tpu_custom_call.1} parent=5 // pred_region
        // Predicated region
        $region37: #{tpu_custom_call.1} parent=35 // pred_check
          %p234 = pneg %p37
        $region38: #{tpu_custom_call.1} parent=35 // pred_check_branch
          %236 = sbr.rel (%p234) target = $region40
        $region39: #{tpu_custom_call.1} parent=35 // pred_region
          %s237 = sand.u32 %s27, 1
          %s238 = scalar_lea.sflag [#allocation3], %s237
          %s239 = sand.u32 %s27, 1
          %s240 = smul.addr %s239, 128
          %s241 = scalar_lea.vmem [#allocation2], %s240
          %s242 = smul.u32 16, %s17
          %s244 = ssub.s32 2048, 2048
          %245 = vsyncadd %s238, %s244
          %s246 = smul.addr %s242, 2
          %s247 = smul.addr %s246, 64
          %s248 = scalar_lea.hbm %s0, %s247
          %s249 = sshll.u32 %s241, 4
          %s250 = int_to_ptr.vmem [resolvable:$true] %s249
          %255 = dma.hbm_to_vmem [thread:$0]  %s248, 2048, %s250, %s238, 64, 64, 4
        $region40: #{tpu_custom_call.1} parent=35 // pred_fallthru
          _
      $region36: #{tpu_custom_call.1} parent=5 // pred_fallthru
        _
      %p256 = scmp.le.s32.totalorder 1, %s17
      %p257 = scmp.lt.s32.totalorder %s17, 3
      %p258 = pnand %p256, %p257
      %p259 = pneg %p258
      // Predicated region
      $region41: #{tpu_custom_call.1} parent=5 // pred_check
        _
      $region42: #{tpu_custom_call.1} parent=5 // pred_check_branch
        %261 = sbr.rel (%p258) target = $region44
      $region43: #{tpu_custom_call.1} parent=5 // pred_region
        %s262 = ssub.s32 %s17, 1
        %s263 = sand.u32 %s30, 1
        %s264 = scalar_lea.sflag [#allocation3], %s263
        %s265 = sand.u32 %s30, 1
        %s266 = smul.addr %s265, 128
        %s267 = scalar_lea.vmem [#allocation2], %s266
        // Predicated region
        $region45: #{tpu_custom_call.1} parent=43 // pred_check
          %p268 = pneg %p43
        $region46: #{tpu_custom_call.1} parent=43 // pred_check_branch
          %270 = sbr.rel (%p268) target = $region48
        $region47: #{tpu_custom_call.1} parent=43 // pred_region
          %271 = dma.done %s264, 2048
        $region48: #{tpu_custom_call.1} parent=43 // pred_fallthru
          _
        %s272 = sand.u32 %s30, 1
        %s273 = scalar_lea.sflag [#allocation3], %s272
        %s274 = sand.u32 %s30, 1
        %s275 = smul.addr %s274, 128
        %s276 = scalar_lea.vmem [#allocation2], %s275
        %p277 = pneg %p43
        %p278 = pneg %p40
        %p279 = pneg %p64
        %p280 = pneg %p61
        %p281 = pneg %p85
        %p282 = pneg %p82
        %p283 = pneg %p106
        %p284 = pneg %p103
        %p285 = pneg %p127
        %p286 = pneg %p124
        %p287 = pneg %p148
        %p288 = pneg %p145
        %p289 = pneg %p174
        %p290 = pneg %p171
        %s291 = smul.u32 2, %s22
        %p292 = scmp.lt.s32.totalorder %s291, 3
        %s293 = scalar_select %p292, %s291, 3
        %s294 = smul.addr %s293, 8
        %s295 = scalar_lea.vmem %s6, %s294
        %p296 = pneg %p200
        %p297 = pneg %p197
        %s298 = smul.u32 2, %s22
        %p299 = scmp.lt.s32.totalorder %s298, 3
        %s300 = scalar_select %p299, %s298, 3
        %s301 = smul.addr %s300, 8
        %s302 = scalar_lea.vmem %s7, %s301
        %s303 = smul.u32 16, %s22
        %s304 = smul.u32 2, %s22
        %p305 = scmp.lt.s32.totalorder %s304, 3
        %s306 = scalar_select %p305, %s304, 3
        %s307 = smul.addr %s306, 8
        %s308 = scalar_lea.vmem %s6, %s307
        %s309 = smul.u32 2, %s22
        %s310 = smul.u32 2, %s22
        %p311 = scmp.lt.s32.totalorder %s310, 3
        %s312 = scalar_select %p311, %s310, 3
        %s313 = smul.addr %s312, 8
        %s314 = scalar_lea.vmem %s7, %s313
        %s315 = smul.u32 2, %s22
        %v317 = vld [vmem:[%s267] sm:$0xf]
        %v318 = vld [vmem:[%s267 + $0x4] sm:$0xf]
        %v319 = vld [vmem:[%s267 + $0x8] sm:$0xf]
        %v320 = vld [vmem:[%s267 + $0xc] sm:$0xf]
        %v321 = vld [vmem:[%s267 + $0x10] sm:$0xf]
        %v322 = vld [vmem:[%s267 + $0x14] sm:$0xf]
        %v323 = vld [vmem:[%s267 + $0x18] sm:$0xf]
        %v324 = vld [vmem:[%s267 + $0x1c] sm:$0xf]
        %v325 = vld [vmem:[%s267 + $0x20] sm:$0xf]
        %v326 = vld [vmem:[%s267 + $0x24] sm:$0xf]
        %v327 = vld [vmem:[%s267 + $0x28] sm:$0xf]
        %v328 = vld [vmem:[%s267 + $0x2c] sm:$0xf]
        %v329 = vld [vmem:[%s267 + $0x30] sm:$0xf]
        %v330 = vld [vmem:[%s267 + $0x34] sm:$0xf]
        %v331 = vld [vmem:[%s267 + $0x38] sm:$0xf]
        %v332 = vld [vmem:[%s267 + $0x3c] sm:$0xf]
        %v333 = vld [vmem:[%s267 + $0x40] sm:$0xf]
        %v334 = vld [vmem:[%s267 + $0x44] sm:$0xf]
        %v335 = vld [vmem:[%s267 + $0x48] sm:$0xf]
        %v336 = vld [vmem:[%s267 + $0x4c] sm:$0xf]
        %v337 = vld [vmem:[%s267 + $0x50] sm:$0xf]
        %v338 = vld [vmem:[%s267 + $0x54] sm:$0xf]
        %v339 = vld [vmem:[%s267 + $0x58] sm:$0xf]
        %v340 = vld [vmem:[%s267 + $0x5c] sm:$0xf]
        %v341 = vld [vmem:[%s267 + $0x60] sm:$0xf]
        %v342 = vld [vmem:[%s267 + $0x64] sm:$0xf]
        %v343 = vld [vmem:[%s267 + $0x68] sm:$0xf]
        %v344 = vld [vmem:[%s267 + $0x6c] sm:$0xf]
        %v345 = vld [vmem:[%s267 + $0x70] sm:$0xf]
        %v346 = vld [vmem:[%s267 + $0x74] sm:$0xf]
        %v347 = vld [vmem:[%s267 + $0x78] sm:$0xf]
        %v348 = vld [vmem:[%s267 + $0x7c] sm:$0xf]
        %v349 = vld [vmem:[%s1] sm:$0xf]
        %v350 = vld [vmem:[%s1 + $0x4] sm:$0xf]
        %v351 = vld [vmem:[%s1 + $0x8] sm:$0xf]
        %v352 = vld [vmem:[%s1 + $0xc] sm:$0xf]
        %v353 = vld [vmem:[%s1 + $0x10] sm:$0xf]
        %v354 = vld [vmem:[%s1 + $0x14] sm:$0xf]
        %v355 = vld [vmem:[%s1 + $0x18] sm:$0xf]
        %v356 = vld [vmem:[%s1 + $0x1c] sm:$0xf]
        %v357 = vld [vmem:[%s1 + $0x20] sm:$0xf]
        %v358 = vld [vmem:[%s1 + $0x24] sm:$0xf]
        %v359 = vld [vmem:[%s1 + $0x28] sm:$0xf]
        %v360 = vld [vmem:[%s1 + $0x2c] sm:$0xf]
        %v361 = vld [vmem:[%s1 + $0x30] sm:$0xf]
        %v362 = vld [vmem:[%s1 + $0x34] sm:$0xf]
        %v363 = vld [vmem:[%s1 + $0x38] sm:$0xf]
        %v364 = vld [vmem:[%s1 + $0x3c] sm:$0xf]
        %v365 = vld [vmem:[%s2] sm:$0x1]
        %v367 = vlaneseq
        %v368 = vshrl.u32 %v367, 7
        %v369 = vsub.s32 0, %v368
        %v370 = vrot.slane %v365, %v369
        %v404 = vunpack.c.l.b16 %v317
        %v405 = vunpack.c.l.b16 %v318
        %v406 = vunpack.c.l.b16 %v319
        %v407 = vunpack.c.l.b16 %v320
        %v408 = vunpack.c.l.b16 %v321
        %v409 = vunpack.c.l.b16 %v322
        %v410 = vunpack.c.l.b16 %v323
        %v411 = vunpack.c.l.b16 %v324
        %v412 = vunpack.c.l.b16 %v325
        %v413 = vunpack.c.l.b16 %v326
        %v414 = vunpack.c.l.b16 %v327
        %v415 = vunpack.c.l.b16 %v328
        %v416 = vunpack.c.l.b16 %v329
        %v417 = vunpack.c.l.b16 %v330
        %v418 = vunpack.c.l.b16 %v331
        %v419 = vunpack.c.l.b16 %v332
        %v420 = vunpack.c.l.b16 %v333
        %v421 = vunpack.c.l.b16 %v334
        %v422 = vunpack.c.l.b16 %v335
        %v423 = vunpack.c.l.b16 %v336
        %v424 = vunpack.c.l.b16 %v337
        %v425 = vunpack.c.l.b16 %v338
        %v426 = vunpack.c.l.b16 %v339
        %v427 = vunpack.c.l.b16 %v340
        %v428 = vunpack.c.l.b16 %v341
        %v429 = vunpack.c.l.b16 %v342
        %v430 = vunpack.c.l.b16 %v343
        %v431 = vunpack.c.l.b16 %v344
        %v432 = vunpack.c.l.b16 %v345
        %v433 = vunpack.c.l.b16 %v346
        %v434 = vunpack.c.l.b16 %v347
        %v435 = vunpack.c.l.b16 %v348
        %v436 = vpack.c.b16 %v405, %v404
        %v437 = vpack.c.b16 %v407, %v406
        %v438 = vpack.c.b16 %v409, %v408
        %v439 = vpack.c.b16 %v411, %v410
        %v440 = vpack.c.b16 %v413, %v412
        %v441 = vpack.c.b16 %v415, %v414
        %v442 = vpack.c.b16 %v417, %v416
        %v443 = vpack.c.b16 %v419, %v418
        %v444 = vpack.c.b16 %v421, %v420
        %v445 = vpack.c.b16 %v423, %v422
        %v446 = vpack.c.b16 %v425, %v424
        %v447 = vpack.c.b16 %v427, %v426
        %v448 = vpack.c.b16 %v429, %v428
        %v449 = vpack.c.b16 %v431, %v430
        %v450 = vpack.c.b16 %v433, %v432
        %v451 = vpack.c.b16 %v435, %v434
        %v484 = vunpack.c.l.b16 %v349
        %v485 = vunpack.c.l.b16 %v350
        %v486 = vunpack.c.l.b16 %v351
        %v487 = vunpack.c.l.b16 %v352
        %v488 = vunpack.c.l.b16 %v353
        %v489 = vunpack.c.l.b16 %v354
        %v490 = vunpack.c.l.b16 %v355
        %v491 = vunpack.c.l.b16 %v356
        %v492 = vunpack.c.l.b16 %v357
        %v493 = vunpack.c.l.b16 %v358
        %v494 = vunpack.c.l.b16 %v359
        %v495 = vunpack.c.l.b16 %v360
        %v496 = vunpack.c.l.b16 %v361
        %v497 = vunpack.c.l.b16 %v362
        %v498 = vunpack.c.l.b16 %v363
        %v499 = vunpack.c.l.b16 %v364
        %v500 = vpack.c.b16 %v485, %v484
        %v501 = vpack.c.b16 %v487, %v486
        %v502 = vpack.c.b16 %v489, %v488
        %v503 = vpack.c.b16 %v491, %v490
        %v504 = vpack.c.b16 %v493, %v492
        %v505 = vpack.c.b16 %v495, %v494
        %v506 = vpack.c.b16 %v497, %v496
        %v507 = vpack.c.b16 %v499, %v498
        %516 = vmatprep.subr.bf16.mxu0 0
        %517 = vmatpush1.bf16.msra.mxu0 %v500
        %518 = vmatprep.subr.bf16.mxu0 0
        %519 = vmatpush1.bf16.msra.mxu0 %v501
        %520 = vmatprep.subr.bf16.mxu0 0
        %521 = vmatpush1.bf16.msra.mxu0 %v502
        %522 = vmatprep.subr.bf16.mxu0 0
        %523 = vmatpush1.bf16.msra.mxu0 %v503
        %524 = vmatprep.subr.bf16.mxu0 0
        %525 = vmatpush1.bf16.msra.mxu0 %v504
        %526 = vmatprep.subr.bf16.mxu0 0
        %527 = vmatpush1.bf16.msra.mxu0 %v505
        %528 = vmatprep.subr.bf16.mxu0 0
        %529 = vmatpush1.bf16.msra.mxu0 %v506
        %530 = vmatprep.subr.bf16.mxu0 0
        %531 = vmatpush1.bf16.msra.mxu0 %v507
        %532 = vmatprep.subr.bf16.mxu0 0
        %533 = vmatpush1.bf16.msra.mxu0 0
        %534 = vmatprep.subr.bf16.mxu0 0
        %535 = vmatpush1.bf16.msra.mxu0 0
        %536 = vmatprep.subr.bf16.mxu0 0
        %537 = vmatpush1.bf16.msra.mxu0 0
        %538 = vmatprep.subr.bf16.mxu0 0
        %539 = vmatpush1.bf16.msra.mxu0 0
        %540 = vmatprep.subr.bf16.mxu0 0
        %541 = vmatpush1.bf16.msra.mxu0 0
        %542 = vmatprep.subr.bf16.mxu0 0
        %543 = vmatpush1.bf16.msra.mxu0 0
        %544 = vmatprep.subr.bf16.mxu0 0
        %545 = vmatpush1.bf16.msra.mxu0 0
        %546 = vmatprep.subr.bf16.mxu0 0
        %547 = vmatpush1.bf16.msra.mxu0 0
        %548 = vmatprep.mubr.bf16.mxu0 0
        %549 = vmatmul.mubr.bf16.gmra.mrb[0].mxu0 %v436
        %v550 = vpop.f32.mrb[0].mxu0
        %v551 = vadd.f32 %v370, %v550
        %v552 = vpop.f32.mrb[0].mxu0
        %v553 = vpop.f32.mrb[0].mxu0
        %v554 = vadd.f32 %v370, %v553
        %v555 = vpop.f32.mrb[0].mxu0
        %556 = vmatprep.mubr.bf16.mxu0 0
        %557 = vmatmul.mubr.bf16.gmra.mrb[0].mxu0 %v437
        %v558 = vpop.f32.mrb[0].mxu0
        %v559 = vadd.f32 %v370, %v558
        %v560 = vpop.f32.mrb[0].mxu0
        %v561 = vpop.f32.mrb[0].mxu0
        %v562 = vadd.f32 %v370, %v561
        %v563 = vpop.f32.mrb[0].mxu0
        %564 = vmatprep.mubr.bf16.mxu0 0
        %565 = vmatmul.mubr.bf16.gmra.mrb[0].mxu0 %v438
        %v566 = vpop.f32.mrb[0].mxu0
        %v567 = vadd.f32 %v370, %v566
        %v568 = vpop.f32.mrb[0].mxu0
        %v569 = vpop.f32.mrb[0].mxu0
        %v570 = vadd.f32 %v370, %v569
        %v571 = vpop.f32.mrb[0].mxu0
        %572 = vmatprep.mubr.bf16.mxu0 0
        %573 = vmatmul.mubr.bf16.gmra.mrb[0].mxu0 %v439
        %v574 = vpop.f32.mrb[0].mxu0
        %v575 = vadd.f32 %v370, %v574
        %v576 = vpop.f32.mrb[0].mxu0
        %v577 = vpop.f32.mrb[0].mxu0
        %v578 = vadd.f32 %v370, %v577
        %v579 = vpop.f32.mrb[0].mxu0
        %580 = vmatprep.mubr.bf16.mxu0 0
        %581 = vmatmul.mubr.bf16.gmra.mrb[0].mxu0 %v440
        %v582 = vpop.f32.mrb[0].mxu0
        %v583 = vadd.f32 %v370, %v582
        %v584 = vpop.f32.mrb[0].mxu0
        %v585 = vpop.f32.mrb[0].mxu0
        %v586 = vadd.f32 %v370, %v585
        %v587 = vpop.f32.mrb[0].mxu0
        %588 = vmatprep.mubr.bf16.mxu0 0
        %589 = vmatmul.mubr.bf16.gmra.mrb[0].mxu0 %v441
        %v590 = vpop.f32.mrb[0].mxu0
        %v591 = vadd.f32 %v370, %v590
        %v592 = vpop.f32.mrb[0].mxu0
        %v593 = vpop.f32.mrb[0].mxu0
        %v594 = vadd.f32 %v370, %v593
        %v595 = vpop.f32.mrb[0].mxu0
        %596 = vmatprep.mubr.bf16.mxu0 0
        %597 = vmatmul.mubr.bf16.gmra.mrb[0].mxu0 %v442
        %v598 = vpop.f32.mrb[0].mxu0
        %v599 = vadd.f32 %v370, %v598
        %v600 = vpop.f32.mrb[0].mxu0
        %v601 = vpop.f32.mrb[0].mxu0
        %v602 = vadd.f32 %v370, %v601
        %v603 = vpop.f32.mrb[0].mxu0
        %604 = vmatprep.mubr.bf16.mxu0 0
        %605 = vmatmul.mubr.bf16.gmra.mrb[0].mxu0 %v443
        %v606 = vpop.f32.mrb[0].mxu0
        %v607 = vadd.f32 %v370, %v606
        %v608 = vpop.f32.mrb[0].mxu0
        %v609 = vpop.f32.mrb[0].mxu0
        %v610 = vadd.f32 %v370, %v609
        %v611 = vpop.f32.mrb[0].mxu0
        %612 = vmatprep.mubr.bf16.mxu0 0
        %613 = vmatmul.mubr.bf16.gmra.mrb[0].mxu0 %v444
        %v614 = vpop.f32.mrb[0].mxu0
        %v615 = vadd.f32 %v370, %v614
        %v616 = vpop.f32.mrb[0].mxu0
        %v617 = vpop.f32.mrb[0].mxu0
        %v618 = vadd.f32 %v370, %v617
        %v619 = vpop.f32.mrb[0].mxu0
        %620 = vmatprep.mubr.bf16.mxu0 0
        %621 = vmatmul.mubr.bf16.gmra.mrb[0].mxu0 %v445
        %v622 = vpop.f32.mrb[0].mxu0
        %v623 = vadd.f32 %v370, %v622
        %v624 = vpop.f32.mrb[0].mxu0
        %v625 = vpop.f32.mrb[0].mxu0
        %v626 = vadd.f32 %v370, %v625
        %v627 = vpop.f32.mrb[0].mxu0
        %628 = vmatprep.mubr.bf16.mxu0 0
        %629 = vmatmul.mubr.bf16.gmra.mrb[0].mxu0 %v446
        %v630 = vpop.f32.mrb[0].mxu0
        %v631 = vadd.f32 %v370, %v630
        %v632 = vpop.f32.mrb[0].mxu0
        %v633 = vpop.f32.mrb[0].mxu0
        %v634 = vadd.f32 %v370, %v633
        %v635 = vpop.f32.mrb[0].mxu0
        %636 = vmatprep.mubr.bf16.mxu0 0
        %637 = vmatmul.mubr.bf16.gmra.mrb[0].mxu0 %v447
        %v638 = vpop.f32.mrb[0].mxu0
        %v639 = vadd.f32 %v370, %v638
        %v640 = vpop.f32.mrb[0].mxu0
        %v641 = vpop.f32.mrb[0].mxu0
        %v642 = vadd.f32 %v370, %v641
        %v643 = vpop.f32.mrb[0].mxu0
        %644 = vmatprep.mubr.bf16.mxu0 0
        %645 = vmatmul.mubr.bf16.gmra.mrb[0].mxu0 %v448
        %v646 = vpop.f32.mrb[0].mxu0
        %v647 = vadd.f32 %v370, %v646
        %v648 = vpop.f32.mrb[0].mxu0
        %v649 = vpop.f32.mrb[0].mxu0
        %v650 = vadd.f32 %v370, %v649
        %v651 = vpop.f32.mrb[0].mxu0
        %652 = vmatprep.mubr.bf16.mxu0 0
        %653 = vmatmul.mubr.bf16.gmra.mrb[0].mxu0 %v449
        %v654 = vpop.f32.mrb[0].mxu0
        %v655 = vadd.f32 %v370, %v654
        %v656 = vpop.f32.mrb[0].mxu0
        %v657 = vpop.f32.mrb[0].mxu0
        %v658 = vadd.f32 %v370, %v657
        %v659 = vpop.f32.mrb[0].mxu0
        %660 = vmatprep.mubr.bf16.mxu0 0
        %661 = vmatmul.mubr.bf16.gmra.mrb[0].mxu0 %v450
        %v662 = vpop.f32.mrb[0].mxu0
        %v663 = vadd.f32 %v370, %v662
        %v664 = vpop.f32.mrb[0].mxu0
        %v665 = vpop.f32.mrb[0].mxu0
        %v666 = vadd.f32 %v370, %v665
        %v667 = vpop.f32.mrb[0].mxu0
        %668 = vmatprep.mubr.bf16.mxu0 0
        %669 = vmatmul.mubr.bf16.gmra.mrb[0].mxu0 %v451
        %v670 = vpop.f32.mrb[0].mxu0
        %v671 = vadd.f32 %v370, %v670
        %v672 = vpop.f32.mrb[0].mxu0
        %v673 = vpop.f32.mrb[0].mxu0
        %v674 = vadd.f32 %v370, %v673
        %v675 = vpop.f32.mrb[0].mxu0
        %676 = vdwg.mxu0
        %v677 = vtanh.pop %v551
        %v678 = vtanh.pop %v554
        %v679 = vtanh.pop %v559
        %v680 = vtanh.pop %v562
        %v681 = vtanh.pop %v567
        %v682 = vtanh.pop %v570
        %v683 = vtanh.pop %v575
        %v684 = vtanh.pop %v578
        %v685 = vtanh.pop %v583
        %v686 = vtanh.pop %v586
        %v687 = vtanh.pop %v591
        %v688 = vtanh.pop %v594
        %v689 = vtanh.pop %v599
        %v690 = vtanh.pop %v602
        %v691 = vtanh.pop %v607
        %v692 = vtanh.pop %v610
        %v693 = vtanh.pop %v615
        %v694 = vtanh.pop %v618
        %v695 = vtanh.pop %v623
        %v696 = vtanh.pop %v626
        %v697 = vtanh.pop %v631
        %v698 = vtanh.pop %v634
        %v699 = vtanh.pop %v639
        %v700 = vtanh.pop %v642
        %v701 = vtanh.pop %v647
        %v702 = vtanh.pop %v650
        %v703 = vtanh.pop %v655
        %v704 = vtanh.pop %v658
        %v705 = vtanh.pop %v663
        %v706 = vtanh.pop %v666
        %v707 = vtanh.pop %v671
        %v708 = vtanh.pop %v674
        %v709 = vld [vmem:[%s3] sm:$0x1]
        %v711 = vlaneseq
        %v712 = vshrl.u32 %v711, 7
        %v713 = vsub.s32 0, %v712
        %v714 = vrot.slane %v709, %v713
        %v716 = vmul.f32 %v677, %v714
        %v717 = vmul.f32 %v678, %v714
        %v718 = vmul.f32 %v679, %v714
        %v719 = vmul.f32 %v680, %v714
        %v720 = vmul.f32 %v681, %v714
        %v721 = vmul.f32 %v682, %v714
        %v722 = vmul.f32 %v683, %v714
        %v723 = vmul.f32 %v684, %v714
        %v724 = vmul.f32 %v685, %v714
        %v725 = vmul.f32 %v686, %v714
        %v726 = vmul.f32 %v687, %v714
        %v727 = vmul.f32 %v688, %v714
        %v728 = vmul.f32 %v689, %v714
        %v729 = vmul.f32 %v690, %v714
        %v730 = vmul.f32 %v691, %v714
        %v731 = vmul.f32 %v692, %v714
        %v732 = vmul.f32 %v693, %v714
        %v733 = vmul.f32 %v694, %v714
        %v734 = vmul.f32 %v695, %v714
        %v735 = vmul.f32 %v696, %v714
        %v736 = vmul.f32 %v697, %v714
        %v737 = vmul.f32 %v698, %v714
        %v738 = vmul.f32 %v699, %v714
        %v739 = vmul.f32 %v700, %v714
        %v740 = vmul.f32 %v701, %v714
        %v741 = vmul.f32 %v702, %v714
        %v742 = vmul.f32 %v703, %v714
        %v743 = vmul.f32 %v704, %v714
        %v744 = vmul.f32 %v705, %v714
        %v745 = vmul.f32 %v706, %v714
        %v746 = vmul.f32 %v707, %v714
        %v747 = vmul.f32 %v708, %v714
        %748 = vadd.xlane.f32.xlu0 %v716
        %v749 = vpop.xlane.xlu0 %748
        %750 = vadd.xlane.f32.xlu0 %v717
        %v751 = vpop.xlane.xlu0 %750
        %752 = vadd.xlane.f32.xlu0 %v718
        %v753 = vpop.xlane.xlu0 %752
        %754 = vadd.xlane.f32.xlu0 %v719
        %v755 = vpop.xlane.xlu0 %754
        %756 = vadd.xlane.f32.xlu0 %v720
        %v757 = vpop.xlane.xlu0 %756
        %758 = vadd.xlane.f32.xlu0 %v721
        %v759 = vpop.xlane.xlu0 %758
        %760 = vadd.xlane.f32.xlu0 %v722
        %v761 = vpop.xlane.xlu0 %760
        %762 = vadd.xlane.f32.xlu0 %v723
        %v763 = vpop.xlane.xlu0 %762
        %764 = vadd.xlane.f32.xlu0 %v724
        %v765 = vpop.xlane.xlu0 %764
        %766 = vadd.xlane.f32.xlu0 %v725
        %v767 = vpop.xlane.xlu0 %766
        %768 = vadd.xlane.f32.xlu0 %v726
        %v769 = vpop.xlane.xlu0 %768
        %770 = vadd.xlane.f32.xlu0 %v727
        %v771 = vpop.xlane.xlu0 %770
        %772 = vadd.xlane.f32.xlu0 %v728
        %v773 = vpop.xlane.xlu0 %772
        %774 = vadd.xlane.f32.xlu0 %v729
        %v775 = vpop.xlane.xlu0 %774
        %776 = vadd.xlane.f32.xlu0 %v730
        %v777 = vpop.xlane.xlu0 %776
        %778 = vadd.xlane.f32.xlu0 %v731
        %v779 = vpop.xlane.xlu0 %778
        %780 = vadd.xlane.f32.xlu0 %v732
        %v781 = vpop.xlane.xlu0 %780
        %782 = vadd.xlane.f32.xlu0 %v733
        %v783 = vpop.xlane.xlu0 %782
        %784 = vadd.xlane.f32.xlu0 %v734
        %v785 = vpop.xlane.xlu0 %784
        %786 = vadd.xlane.f32.xlu0 %v735
        %v787 = vpop.xlane.xlu0 %786
        %788 = vadd.xlane.f32.xlu0 %v736
        %v789 = vpop.xlane.xlu0 %788
        %790 = vadd.xlane.f32.xlu0 %v737
        %v791 = vpop.xlane.xlu0 %790
        %792 = vadd.xlane.f32.xlu0 %v738
        %v793 = vpop.xlane.xlu0 %792
        %794 = vadd.xlane.f32.xlu0 %v739
        %v795 = vpop.xlane.xlu0 %794
        %796 = vadd.xlane.f32.xlu0 %v740
        %v797 = vpop.xlane.xlu0 %796
        %798 = vadd.xlane.f32.xlu0 %v741
        %v799 = vpop.xlane.xlu0 %798
        %800 = vadd.xlane.f32.xlu0 %v742
        %v801 = vpop.xlane.xlu0 %800
        %802 = vadd.xlane.f32.xlu0 %v743
        %v803 = vpop.xlane.xlu0 %802
        %804 = vadd.xlane.f32.xlu0 %v744
        %v805 = vpop.xlane.xlu0 %804
        %806 = vadd.xlane.f32.xlu0 %v745
        %v807 = vpop.xlane.xlu0 %806
        %808 = vadd.xlane.f32.xlu0 %v746
        %v809 = vpop.xlane.xlu0 %808
        %810 = vadd.xlane.f32.xlu0 %v747
        %v811 = vpop.xlane.xlu0 %810
        %v844 = vlaneseq
        %v845 = vand.u32 %v844, 127
        %v846 = vlaneseq
        %v847 = vshrl.u32 %v846, 7
        %v848 = vsub.s32 %v845, %v847
        %v849 = vrot.slane %v749, %v848
        %v850 = vadd.s32 %v845, 4294967288
        %v851 = vlaneseq
        %v852 = vshrl.u32 %v851, 7
        %v853 = vsub.s32 %v850, %v852
        %v854 = vrot.slane %v751, %v853
        %vm855 = vcmask 130112
        %v856 = vsel %vm855, %v854, %v849
        %v857 = vlaneseq
        %v858 = vshrl.u32 %v857, 7
        %v859 = vsub.s32 %v845, %v858
        %v860 = vrot.slane %v753, %v859
        %v861 = vlaneseq
        %v862 = vshrl.u32 %v861, 7
        %v863 = vsub.s32 %v850, %v862
        %v864 = vrot.slane %v755, %v863
        %v865 = vsel %vm855, %v864, %v860
        %v866 = vlaneseq
        %v867 = vshrl.u32 %v866, 7
        %v868 = vsub.s32 %v845, %v867
        %v869 = vrot.slane %v757, %v868
        %v870 = vlaneseq
        %v871 = vshrl.u32 %v870, 7
        %v872 = vsub.s32 %v850, %v871
        %v873 = vrot.slane %v759, %v872
        %v874 = vsel %vm855, %v873, %v869
        %v875 = vlaneseq
        %v876 = vshrl.u32 %v875, 7
        %v877 = vsub.s32 %v845, %v876
        %v878 = vrot.slane %v761, %v877
        %v879 = vlaneseq
        %v880 = vshrl.u32 %v879, 7
        %v881 = vsub.s32 %v850, %v880
        %v882 = vrot.slane %v763, %v881
        %v883 = vsel %vm855, %v882, %v878
        %v884 = vlaneseq
        %v885 = vshrl.u32 %v884, 7
        %v886 = vsub.s32 %v845, %v885
        %v887 = vrot.slane %v765, %v886
        %v888 = vlaneseq
        %v889 = vshrl.u32 %v888, 7
        %v890 = vsub.s32 %v850, %v889
        %v891 = vrot.slane %v767, %v890
        %v892 = vsel %vm855, %v891, %v887
        %v893 = vlaneseq
        %v894 = vshrl.u32 %v893, 7
        %v895 = vsub.s32 %v845, %v894
        %v896 = vrot.slane %v769, %v895
        %v897 = vlaneseq
        %v898 = vshrl.u32 %v897, 7
        %v899 = vsub.s32 %v850, %v898
        %v900 = vrot.slane %v771, %v899
        %v901 = vsel %vm855, %v900, %v896
        %v902 = vlaneseq
        %v903 = vshrl.u32 %v902, 7
        %v904 = vsub.s32 %v845, %v903
        %v905 = vrot.slane %v773, %v904
        %v906 = vlaneseq
        %v907 = vshrl.u32 %v906, 7
        %v908 = vsub.s32 %v850, %v907
        %v909 = vrot.slane %v775, %v908
        %v910 = vsel %vm855, %v909, %v905
        %v911 = vlaneseq
        %v912 = vshrl.u32 %v911, 7
        %v913 = vsub.s32 %v845, %v912
        %v914 = vrot.slane %v777, %v913
        %v915 = vlaneseq
        %v916 = vshrl.u32 %v915, 7
        %v917 = vsub.s32 %v850, %v916
        %v918 = vrot.slane %v779, %v917
        %v919 = vsel %vm855, %v918, %v914
        %v920 = vlaneseq
        %v921 = vshrl.u32 %v920, 7
        %v922 = vsub.s32 %v845, %v921
        %v923 = vrot.slane %v781, %v922
        %v924 = vlaneseq
        %v925 = vshrl.u32 %v924, 7
        %v926 = vsub.s32 %v850, %v925
        %v927 = vrot.slane %v783, %v926
        %v928 = vsel %vm855, %v927, %v923
        %v929 = vlaneseq
        %v930 = vshrl.u32 %v929, 7
        %v931 = vsub.s32 %v845, %v930
        %v932 = vrot.slane %v785, %v931
        %v933 = vlaneseq
        %v934 = vshrl.u32 %v933, 7
        %v935 = vsub.s32 %v850, %v934
        %v936 = vrot.slane %v787, %v935
        %v937 = vsel %vm855, %v936, %v932
        %v938 = vlaneseq
        %v939 = vshrl.u32 %v938, 7
        %v940 = vsub.s32 %v845, %v939
        %v941 = vrot.slane %v789, %v940
        %v942 = vlaneseq
        %v943 = vshrl.u32 %v942, 7
        %v944 = vsub.s32 %v850, %v943
        %v945 = vrot.slane %v791, %v944
        %v946 = vsel %vm855, %v945, %v941
        %v947 = vlaneseq
        %v948 = vshrl.u32 %v947, 7
        %v949 = vsub.s32 %v845, %v948
        %v950 = vrot.slane %v793, %v949
        %v951 = vlaneseq
        %v952 = vshrl.u32 %v951, 7
        %v953 = vsub.s32 %v850, %v952
        %v954 = vrot.slane %v795, %v953
        %v955 = vsel %vm855, %v954, %v950
        %v956 = vlaneseq
        %v957 = vshrl.u32 %v956, 7
        %v958 = vsub.s32 %v845, %v957
        %v959 = vrot.slane %v797, %v958
        %v960 = vlaneseq
        %v961 = vshrl.u32 %v960, 7
        %v962 = vsub.s32 %v850, %v961
        %v963 = vrot.slane %v799, %v962
        %v964 = vsel %vm855, %v963, %v959
        %v965 = vlaneseq
        %v966 = vshrl.u32 %v965, 7
        %v967 = vsub.s32 %v845, %v966
        %v968 = vrot.slane %v801, %v967
        %v969 = vlaneseq
        %v970 = vshrl.u32 %v969, 7
        %v971 = vsub.s32 %v850, %v970
        %v972 = vrot.slane %v803, %v971
        %v973 = vsel %vm855, %v972, %v968
        %v974 = vlaneseq
        %v975 = vshrl.u32 %v974, 7
        %v976 = vsub.s32 %v845, %v975
        %v977 = vrot.slane %v805, %v976
        %v978 = vlaneseq
        %v979 = vshrl.u32 %v978, 7
        %v980 = vsub.s32 %v850, %v979
        %v981 = vrot.slane %v807, %v980
        %v982 = vsel %vm855, %v981, %v977
        %v983 = vlaneseq
        %v984 = vshrl.u32 %v983, 7
        %v985 = vsub.s32 %v845, %v984
        %v986 = vrot.slane %v809, %v985
        %v987 = vlaneseq
        %v988 = vshrl.u32 %v987, 7
        %v989 = vsub.s32 %v850, %v988
        %v990 = vrot.slane %v811, %v989
        %v991 = vsel %vm855, %v990, %v986
        %vm992 = vcmask 1041409
        %v993 = vsel %vm992, %v865, %v856
        %vm994 = vcmask 1042434
        %v995 = vsel %vm994, %v874, %v993
        %vm996 = vcmask 1043459
        %v997 = vsel %vm996, %v883, %v995
        %vm998 = vcmask 1044484
        %v999 = vsel %vm998, %v892, %v997
        %vm1000 = vcmask 1045509
        %v1001 = vsel %vm1000, %v901, %v999
        %vm1002 = vcmask 1046534
        %v1003 = vsel %vm1002, %v910, %v1001
        %vm1004 = vcmask 1047559
        %v1005 = vsel %vm1004, %v919, %v1003
        %v1006 = vsel %vm992, %v937, %v928
        %v1007 = vsel %vm994, %v946, %v1006
        %v1008 = vsel %vm996, %v955, %v1007
        %v1009 = vsel %vm998, %v964, %v1008
        %v1010 = vsel %vm1000, %v973, %v1009
        %v1011 = vsel %vm1002, %v982, %v1010
        %v1012 = vsel %vm1004, %v991, %v1011
        %vm1015 = vcmask 130048
        %v1016 = vsel %vm1015, %v1005, -inf
        %1017 = vmax.xlane.f32.xlu0 %v1016
        %v1018 = vpop.xlane.xlu0 %1017
        %v1019 = vsel %vm1015, %v1012, -inf
        %1020 = vmax.xlane.f32.xlu0 %v1019
        %v1021 = vpop.xlane.xlu0 %1020
        %v1024 = vlaneseq
        %v1025 = vshrl.u32 %v1024, 7
        %v1026 = vsub.s32 0, %v1025
        %v1027 = vrot.slane %v1018, %v1026
        %v1028 = vlaneseq
        %v1029 = vshrl.u32 %v1028, 7
        %v1030 = vsub.s32 1, %v1029
        %v1031 = vrot.slane %v1018, %v1030
        %v1032 = vlaneseq
        %v1033 = vshrl.u32 %v1032, 7
        %v1034 = vsub.s32 2, %v1033
        %v1035 = vrot.slane %v1018, %v1034
        %v1036 = vlaneseq
        %v1037 = vshrl.u32 %v1036, 7
        %v1038 = vsub.s32 3, %v1037
        %v1039 = vrot.slane %v1018, %v1038
        %v1040 = vlaneseq
        %v1041 = vshrl.u32 %v1040, 7
        %v1042 = vsub.s32 4, %v1041
        %v1043 = vrot.slane %v1018, %v1042
        %v1044 = vlaneseq
        %v1045 = vshrl.u32 %v1044, 7
        %v1046 = vsub.s32 5, %v1045
        %v1047 = vrot.slane %v1018, %v1046
        %v1048 = vlaneseq
        %v1049 = vshrl.u32 %v1048, 7
        %v1050 = vsub.s32 6, %v1049
        %v1051 = vrot.slane %v1018, %v1050
        %v1052 = vlaneseq
        %v1053 = vshrl.u32 %v1052, 7
        %v1054 = vsub.s32 7, %v1053
        %v1055 = vrot.slane %v1018, %v1054
        %v1056 = vlaneseq
        %v1057 = vshrl.u32 %v1056, 7
        %v1058 = vsub.s32 0, %v1057
        %v1059 = vrot.slane %v1021, %v1058
        %v1060 = vlaneseq
        %v1061 = vshrl.u32 %v1060, 7
        %v1062 = vsub.s32 1, %v1061
        %v1063 = vrot.slane %v1021, %v1062
        %v1064 = vlaneseq
        %v1065 = vshrl.u32 %v1064, 7
        %v1066 = vsub.s32 2, %v1065
        %v1067 = vrot.slane %v1021, %v1066
        %v1068 = vlaneseq
        %v1069 = vshrl.u32 %v1068, 7
        %v1070 = vsub.s32 3, %v1069
        %v1071 = vrot.slane %v1021, %v1070
        %v1072 = vlaneseq
        %v1073 = vshrl.u32 %v1072, 7
        %v1074 = vsub.s32 4, %v1073
        %v1075 = vrot.slane %v1021, %v1074
        %v1076 = vlaneseq
        %v1077 = vshrl.u32 %v1076, 7
        %v1078 = vsub.s32 5, %v1077
        %v1079 = vrot.slane %v1021, %v1078
        %v1080 = vlaneseq
        %v1081 = vshrl.u32 %v1080, 7
        %v1082 = vsub.s32 6, %v1081
        %v1083 = vrot.slane %v1021, %v1082
        %v1084 = vlaneseq
        %v1085 = vshrl.u32 %v1084, 7
        %v1086 = vsub.s32 7, %v1085
        %v1087 = vrot.slane %v1021, %v1086
        %v1104 = vsub.f32 %v749, %v1027
        %v1105 = vsub.f32 %v751, %v1027
        %v1106 = vsub.f32 %v753, %v1031
        %v1107 = vsub.f32 %v755, %v1031
        %v1108 = vsub.f32 %v757, %v1035
        %v1109 = vsub.f32 %v759, %v1035
        %v1110 = vsub.f32 %v761, %v1039
        %v1111 = vsub.f32 %v763, %v1039
        %v1112 = vsub.f32 %v765, %v1043
        %v1113 = vsub.f32 %v767, %v1043
        %v1114 = vsub.f32 %v769, %v1047
        %v1115 = vsub.f32 %v771, %v1047
        %v1116 = vsub.f32 %v773, %v1051
        %v1117 = vsub.f32 %v775, %v1051
        %v1118 = vsub.f32 %v777, %v1055
        %v1119 = vsub.f32 %v779, %v1055
        %v1120 = vsub.f32 %v781, %v1059
        %v1121 = vsub.f32 %v783, %v1059
        %v1122 = vsub.f32 %v785, %v1063
        %v1123 = vsub.f32 %v787, %v1063
        %v1124 = vsub.f32 %v789, %v1067
        %v1125 = vsub.f32 %v791, %v1067
        %v1126 = vsub.f32 %v793, %v1071
        %v1127 = vsub.f32 %v795, %v1071
        %v1128 = vsub.f32 %v797, %v1075
        %v1129 = vsub.f32 %v799, %v1075
        %v1130 = vsub.f32 %v801, %v1079
        %v1131 = vsub.f32 %v803, %v1079
        %v1132 = vsub.f32 %v805, %v1083
        %v1133 = vsub.f32 %v807, %v1083
        %v1134 = vsub.f32 %v809, %v1087
        %v1135 = vsub.f32 %v811, %v1087
        %v1136 = vmul.f32 %v1104, 1.442695
        %v1137 = vpow.pop %v1136
        %v1138 = vmul.f32 %v1105, 1.442695
        %v1139 = vpow.pop %v1138
        %v1140 = vmul.f32 %v1106, 1.442695
        %v1141 = vpow.pop %v1140
        %v1142 = vmul.f32 %v1107, 1.442695
        %v1143 = vpow.pop %v1142
        %v1144 = vmul.f32 %v1108, 1.442695
        %v1145 = vpow.pop %v1144
        %v1146 = vmul.f32 %v1109, 1.442695
        %v1147 = vpow.pop %v1146
        %v1148 = vmul.f32 %v1110, 1.442695
        %v1149 = vpow.pop %v1148
        %v1150 = vmul.f32 %v1111, 1.442695
        %v1151 = vpow.pop %v1150
        %v1152 = vmul.f32 %v1112, 1.442695
        %v1153 = vpow.pop %v1152
        %v1154 = vmul.f32 %v1113, 1.442695
        %v1155 = vpow.pop %v1154
        %v1156 = vmul.f32 %v1114, 1.442695
        %v1157 = vpow.pop %v1156
        %v1158 = vmul.f32 %v1115, 1.442695
        %v1159 = vpow.pop %v1158
        %v1160 = vmul.f32 %v1116, 1.442695
        %v1161 = vpow.pop %v1160
        %v1162 = vmul.f32 %v1117, 1.442695
        %v1163 = vpow.pop %v1162
        %v1164 = vmul.f32 %v1118, 1.442695
        %v1165 = vpow.pop %v1164
        %v1166 = vmul.f32 %v1119, 1.442695
        %v1167 = vpow.pop %v1166
        %v1168 = vmul.f32 %v1120, 1.442695
        %v1169 = vpow.pop %v1168
        %v1170 = vmul.f32 %v1121, 1.442695
        %v1171 = vpow.pop %v1170
        %v1172 = vmul.f32 %v1122, 1.442695
        %v1173 = vpow.pop %v1172
        %v1174 = vmul.f32 %v1123, 1.442695
        %v1175 = vpow.pop %v1174
        %v1176 = vmul.f32 %v1124, 1.442695
        %v1177 = vpow.pop %v1176
        %v1178 = vmul.f32 %v1125, 1.442695
        %v1179 = vpow.pop %v1178
        %v1180 = vmul.f32 %v1126, 1.442695
        %v1181 = vpow.pop %v1180
        %v1182 = vmul.f32 %v1127, 1.442695
        %v1183 = vpow.pop %v1182
        %v1184 = vmul.f32 %v1128, 1.442695
        %v1185 = vpow.pop %v1184
        %v1186 = vmul.f32 %v1129, 1.442695
        %v1187 = vpow.pop %v1186
        %v1188 = vmul.f32 %v1130, 1.442695
        %v1189 = vpow.pop %v1188
        %v1190 = vmul.f32 %v1131, 1.442695
        %v1191 = vpow.pop %v1190
        %v1192 = vmul.f32 %v1132, 1.442695
        %v1193 = vpow.pop %v1192
        %v1194 = vmul.f32 %v1133, 1.442695
        %v1195 = vpow.pop %v1194
        %v1196 = vmul.f32 %v1134, 1.442695
        %v1197 = vpow.pop %v1196
        %v1198 = vmul.f32 %v1135, 1.442695
        %v1199 = vpow.pop %v1198
        %1232 = vset.pattern.permute.xlu0 0
        %1233 = vperm.xlu0 %1232, %v1137
        %v1234 = vpop.permute.xlu0 %1233
        %1235 = vset.pattern.permute.xlu0 0
        %1236 = vperm.xlu0 %1235, %v1139
        %v1237 = vpop.permute.xlu0 %1236
        %1238 = vset.pattern.permute.xlu0 0
        %1239 = vperm.xlu0 %1238, %v1141
        %v1240 = vpop.permute.xlu0 %1239
        %1241 = vset.pattern.permute.xlu0 0
        %1242 = vperm.xlu0 %1241, %v1143
        %v1243 = vpop.permute.xlu0 %1242
        %1244 = vset.pattern.permute.xlu0 0
        %1245 = vperm.xlu0 %1244, %v1145
        %v1246 = vpop.permute.xlu0 %1245
        %1247 = vset.pattern.permute.xlu0 0
        %1248 = vperm.xlu0 %1247, %v1147
        %v1249 = vpop.permute.xlu0 %1248
        %1250 = vset.pattern.permute.xlu0 0
        %1251 = vperm.xlu0 %1250, %v1149
        %v1252 = vpop.permute.xlu0 %1251
        %1253 = vset.pattern.permute.xlu0 0
        %1254 = vperm.xlu0 %1253, %v1151
        %v1255 = vpop.permute.xlu0 %1254
        %1256 = vset.pattern.permute.xlu0 0
        %1257 = vperm.xlu0 %1256, %v1153
        %v1258 = vpop.permute.xlu0 %1257
        %1259 = vset.pattern.permute.xlu0 0
        %1260 = vperm.xlu0 %1259, %v1155
        %v1261 = vpop.permute.xlu0 %1260
        %1262 = vset.pattern.permute.xlu0 0
        %1263 = vperm.xlu0 %1262, %v1157
        %v1264 = vpop.permute.xlu0 %1263
        %1265 = vset.pattern.permute.xlu0 0
        %1266 = vperm.xlu0 %1265, %v1159
        %v1267 = vpop.permute.xlu0 %1266
        %1268 = vset.pattern.permute.xlu0 0
        %1269 = vperm.xlu0 %1268, %v1161
        %v1270 = vpop.permute.xlu0 %1269
        %1271 = vset.pattern.permute.xlu0 0
        %1272 = vperm.xlu0 %1271, %v1163
        %v1273 = vpop.permute.xlu0 %1272
        %1274 = vset.pattern.permute.xlu0 0
        %1275 = vperm.xlu0 %1274, %v1165
        %v1276 = vpop.permute.xlu0 %1275
        %1277 = vset.pattern.permute.xlu0 0
        %1278 = vperm.xlu0 %1277, %v1167
        %v1279 = vpop.permute.xlu0 %1278
        %1280 = vset.pattern.permute.xlu0 0
        %1281 = vperm.xlu0 %1280, %v1169
        %v1282 = vpop.permute.xlu0 %1281
        %1283 = vset.pattern.permute.xlu0 0
        %1284 = vperm.xlu0 %1283, %v1171
        %v1285 = vpop.permute.xlu0 %1284
        %1286 = vset.pattern.permute.xlu0 0
        %1287 = vperm.xlu0 %1286, %v1173
        %v1288 = vpop.permute.xlu0 %1287
        %1289 = vset.pattern.permute.xlu0 0
        %1290 = vperm.xlu0 %1289, %v1175
        %v1291 = vpop.permute.xlu0 %1290
        %1292 = vset.pattern.permute.xlu0 0
        %1293 = vperm.xlu0 %1292, %v1177
        %v1294 = vpop.permute.xlu0 %1293
        %1295 = vset.pattern.permute.xlu0 0
        %1296 = vperm.xlu0 %1295, %v1179
        %v1297 = vpop.permute.xlu0 %1296
        %1298 = vset.pattern.permute.xlu0 0
        %1299 = vperm.xlu0 %1298, %v1181
        %v1300 = vpop.permute.xlu0 %1299
        %1301 = vset.pattern.permute.xlu0 0
        %1302 = vperm.xlu0 %1301, %v1183
        %v1303 = vpop.permute.xlu0 %1302
        %1304 = vset.pattern.permute.xlu0 0
        %1305 = vperm.xlu0 %1304, %v1185
        %v1306 = vpop.permute.xlu0 %1305
        %1307 = vset.pattern.permute.xlu0 0
        %1308 = vperm.xlu0 %1307, %v1187
        %v1309 = vpop.permute.xlu0 %1308
        %1310 = vset.pattern.permute.xlu0 0
        %1311 = vperm.xlu0 %1310, %v1189
        %v1312 = vpop.permute.xlu0 %1311
        %1313 = vset.pattern.permute.xlu0 0
        %1314 = vperm.xlu0 %1313, %v1191
        %v1315 = vpop.permute.xlu0 %1314
        %1316 = vset.pattern.permute.xlu0 0
        %1317 = vperm.xlu0 %1316, %v1193
        %v1318 = vpop.permute.xlu0 %1317
        %1319 = vset.pattern.permute.xlu0 0
        %1320 = vperm.xlu0 %1319, %v1195
        %v1321 = vpop.permute.xlu0 %1320
        %1322 = vset.pattern.permute.xlu0 0
        %1323 = vperm.xlu0 %1322, %v1197
        %v1324 = vpop.permute.xlu0 %1323
        %1325 = vset.pattern.permute.xlu0 0
        %1326 = vperm.xlu0 %1325, %v1199
        %v1327 = vpop.permute.xlu0 %1326
        %v1328 = vlaneseq
        %v1329 = vshrl.u32 %v1328, 7
        %v1330 = vsub.s32 %v845, %v1329
        %v1331 = vrot.slane %v1234, %v1330
        %v1332 = vlaneseq
        %v1333 = vshrl.u32 %v1332, 7
        %v1334 = vsub.s32 %v850, %v1333
        %v1335 = vrot.slane %v1237, %v1334
        %v1336 = vsel %vm855, %v1335, %v1331
        %v1337 = vlaneseq
        %v1338 = vshrl.u32 %v1337, 7
        %v1339 = vsub.s32 %v845, %v1338
        %v1340 = vrot.slane %v1240, %v1339
        %v1341 = vlaneseq
        %v1342 = vshrl.u32 %v1341, 7
        %v1343 = vsub.s32 %v850, %v1342
        %v1344 = vrot.slane %v1243, %v1343
        %v1345 = vsel %vm855, %v1344, %v1340
        %v1346 = vlaneseq
        %v1347 = vshrl.u32 %v1346, 7
        %v1348 = vsub.s32 %v845, %v1347
        %v1349 = vrot.slane %v1246, %v1348
        %v1350 = vlaneseq
        %v1351 = vshrl.u32 %v1350, 7
        %v1352 = vsub.s32 %v850, %v1351
        %v1353 = vrot.slane %v1249, %v1352
        %v1354 = vsel %vm855, %v1353, %v1349
        %v1355 = vlaneseq
        %v1356 = vshrl.u32 %v1355, 7
        %v1357 = vsub.s32 %v845, %v1356
        %v1358 = vrot.slane %v1252, %v1357
        %v1359 = vlaneseq
        %v1360 = vshrl.u32 %v1359, 7
        %v1361 = vsub.s32 %v850, %v1360
        %v1362 = vrot.slane %v1255, %v1361
        %v1363 = vsel %vm855, %v1362, %v1358
        %v1364 = vlaneseq
        %v1365 = vshrl.u32 %v1364, 7
        %v1366 = vsub.s32 %v845, %v1365
        %v1367 = vrot.slane %v1258, %v1366
        %v1368 = vlaneseq
        %v1369 = vshrl.u32 %v1368, 7
        %v1370 = vsub.s32 %v850, %v1369
        %v1371 = vrot.slane %v1261, %v1370
        %v1372 = vsel %vm855, %v1371, %v1367
        %v1373 = vlaneseq
        %v1374 = vshrl.u32 %v1373, 7
        %v1375 = vsub.s32 %v845, %v1374
        %v1376 = vrot.slane %v1264, %v1375
        %v1377 = vlaneseq
        %v1378 = vshrl.u32 %v1377, 7
        %v1379 = vsub.s32 %v850, %v1378
        %v1380 = vrot.slane %v1267, %v1379
        %v1381 = vsel %vm855, %v1380, %v1376
        %v1382 = vlaneseq
        %v1383 = vshrl.u32 %v1382, 7
        %v1384 = vsub.s32 %v845, %v1383
        %v1385 = vrot.slane %v1270, %v1384
        %v1386 = vlaneseq
        %v1387 = vshrl.u32 %v1386, 7
        %v1388 = vsub.s32 %v850, %v1387
        %v1389 = vrot.slane %v1273, %v1388
        %v1390 = vsel %vm855, %v1389, %v1385
        %v1391 = vlaneseq
        %v1392 = vshrl.u32 %v1391, 7
        %v1393 = vsub.s32 %v845, %v1392
        %v1394 = vrot.slane %v1276, %v1393
        %v1395 = vlaneseq
        %v1396 = vshrl.u32 %v1395, 7
        %v1397 = vsub.s32 %v850, %v1396
        %v1398 = vrot.slane %v1279, %v1397
        %v1399 = vsel %vm855, %v1398, %v1394
        %v1400 = vlaneseq
        %v1401 = vshrl.u32 %v1400, 7
        %v1402 = vsub.s32 %v845, %v1401
        %v1403 = vrot.slane %v1282, %v1402
        %v1404 = vlaneseq
        %v1405 = vshrl.u32 %v1404, 7
        %v1406 = vsub.s32 %v850, %v1405
        %v1407 = vrot.slane %v1285, %v1406
        %v1408 = vsel %vm855, %v1407, %v1403
        %v1409 = vlaneseq
        %v1410 = vshrl.u32 %v1409, 7
        %v1411 = vsub.s32 %v845, %v1410
        %v1412 = vrot.slane %v1288, %v1411
        %v1413 = vlaneseq
        %v1414 = vshrl.u32 %v1413, 7
        %v1415 = vsub.s32 %v850, %v1414
        %v1416 = vrot.slane %v1291, %v1415
        %v1417 = vsel %vm855, %v1416, %v1412
        %v1418 = vlaneseq
        %v1419 = vshrl.u32 %v1418, 7
        %v1420 = vsub.s32 %v845, %v1419
        %v1421 = vrot.slane %v1294, %v1420
        %v1422 = vlaneseq
        %v1423 = vshrl.u32 %v1422, 7
        %v1424 = vsub.s32 %v850, %v1423
        %v1425 = vrot.slane %v1297, %v1424
        %v1426 = vsel %vm855, %v1425, %v1421
        %v1427 = vlaneseq
        %v1428 = vshrl.u32 %v1427, 7
        %v1429 = vsub.s32 %v845, %v1428
        %v1430 = vrot.slane %v1300, %v1429
        %v1431 = vlaneseq
        %v1432 = vshrl.u32 %v1431, 7
        %v1433 = vsub.s32 %v850, %v1432
        %v1434 = vrot.slane %v1303, %v1433
        %v1435 = vsel %vm855, %v1434, %v1430
        %v1436 = vlaneseq
        %v1437 = vshrl.u32 %v1436, 7
        %v1438 = vsub.s32 %v845, %v1437
        %v1439 = vrot.slane %v1306, %v1438
        %v1440 = vlaneseq
        %v1441 = vshrl.u32 %v1440, 7
        %v1442 = vsub.s32 %v850, %v1441
        %v1443 = vrot.slane %v1309, %v1442
        %v1444 = vsel %vm855, %v1443, %v1439
        %v1445 = vlaneseq
        %v1446 = vshrl.u32 %v1445, 7
        %v1447 = vsub.s32 %v845, %v1446
        %v1448 = vrot.slane %v1312, %v1447
        %v1449 = vlaneseq
        %v1450 = vshrl.u32 %v1449, 7
        %v1451 = vsub.s32 %v850, %v1450
        %v1452 = vrot.slane %v1315, %v1451
        %v1453 = vsel %vm855, %v1452, %v1448
        %v1454 = vlaneseq
        %v1455 = vshrl.u32 %v1454, 7
        %v1456 = vsub.s32 %v845, %v1455
        %v1457 = vrot.slane %v1318, %v1456
        %v1458 = vlaneseq
        %v1459 = vshrl.u32 %v1458, 7
        %v1460 = vsub.s32 %v850, %v1459
        %v1461 = vrot.slane %v1321, %v1460
        %v1462 = vsel %vm855, %v1461, %v1457
        %v1463 = vlaneseq
        %v1464 = vshrl.u32 %v1463, 7
        %v1465 = vsub.s32 %v845, %v1464
        %v1466 = vrot.slane %v1324, %v1465
        %v1467 = vlaneseq
        %v1468 = vshrl.u32 %v1467, 7
        %v1469 = vsub.s32 %v850, %v1468
        %v1470 = vrot.slane %v1327, %v1469
        %v1471 = vsel %vm855, %v1470, %v1466
        %v1472 = vsel %vm992, %v1345, %v1336
        %v1473 = vsel %vm994, %v1354, %v1472
        %v1474 = vsel %vm996, %v1363, %v1473
        %v1475 = vsel %vm998, %v1372, %v1474
        %v1476 = vsel %vm1000, %v1381, %v1475
        %v1477 = vsel %vm1002, %v1390, %v1476
        %v1478 = vsel %vm1004, %v1399, %v1477
        %v1479 = vsel %vm992, %v1417, %v1408
        %v1480 = vsel %vm994, %v1426, %v1479
        %v1481 = vsel %vm996, %v1435, %v1480
        %v1482 = vsel %vm998, %v1444, %v1481
        %v1483 = vsel %vm1000, %v1453, %v1482
        %v1484 = vsel %vm1002, %v1462, %v1483
        %v1485 = vsel %vm1004, %v1471, %v1484
        %v1488 = vsel %vm1015, %v1478, 0.0
        %1489 = vadd.xlane.f32.xlu0 %v1488
        %v1490 = vpop.xlane.xlu0 %1489
        %v1491 = vsel %vm1015, %v1485, 0.0
        %1492 = vadd.xlane.f32.xlu0 %v1491
        %v1493 = vpop.xlane.xlu0 %1492
        %v1494 = vrcp.pop %v1490
        %v1495 = vrcp.pop %v1493
        %v1498 = vlaneseq
        %v1499 = vshrl.u32 %v1498, 7
        %v1500 = vsub.s32 0, %v1499
        %v1501 = vrot.slane %v1494, %v1500
        %v1502 = vlaneseq
        %v1503 = vshrl.u32 %v1502, 7
        %v1504 = vsub.s32 1, %v1503
        %v1505 = vrot.slane %v1494, %v1504
        %v1506 = vlaneseq
        %v1507 = vshrl.u32 %v1506, 7
        %v1508 = vsub.s32 2, %v1507
        %v1509 = vrot.slane %v1494, %v1508
        %v1510 = vlaneseq
        %v1511 = vshrl.u32 %v1510, 7
        %v1512 = vsub.s32 3, %v1511
        %v1513 = vrot.slane %v1494, %v1512
        %v1514 = vlaneseq
        %v1515 = vshrl.u32 %v1514, 7
        %v1516 = vsub.s32 4, %v1515
        %v1517 = vrot.slane %v1494, %v1516
        %v1518 = vlaneseq
        %v1519 = vshrl.u32 %v1518, 7
        %v1520 = vsub.s32 5, %v1519
        %v1521 = vrot.slane %v1494, %v1520
        %v1522 = vlaneseq
        %v1523 = vshrl.u32 %v1522, 7
        %v1524 = vsub.s32 6, %v1523
        %v1525 = vrot.slane %v1494, %v1524
        %v1526 = vlaneseq
        %v1527 = vshrl.u32 %v1526, 7
        %v1528 = vsub.s32 7, %v1527
        %v1529 = vrot.slane %v1494, %v1528
        %v1530 = vlaneseq
        %v1531 = vshrl.u32 %v1530, 7
        %v1532 = vsub.s32 0, %v1531
        %v1533 = vrot.slane %v1495, %v1532
        %v1534 = vlaneseq
        %v1535 = vshrl.u32 %v1534, 7
        %v1536 = vsub.s32 1, %v1535
        %v1537 = vrot.slane %v1495, %v1536
        %v1538 = vlaneseq
        %v1539 = vshrl.u32 %v1538, 7
        %v1540 = vsub.s32 2, %v1539
        %v1541 = vrot.slane %v1495, %v1540
        %v1542 = vlaneseq
        %v1543 = vshrl.u32 %v1542, 7
        %v1544 = vsub.s32 3, %v1543
        %v1545 = vrot.slane %v1495, %v1544
        %v1546 = vlaneseq
        %v1547 = vshrl.u32 %v1546, 7
        %v1548 = vsub.s32 4, %v1547
        %v1549 = vrot.slane %v1495, %v1548
        %v1550 = vlaneseq
        %v1551 = vshrl.u32 %v1550, 7
        %v1552 = vsub.s32 5, %v1551
        %v1553 = vrot.slane %v1495, %v1552
        %v1554 = vlaneseq
        %v1555 = vshrl.u32 %v1554, 7
        %v1556 = vsub.s32 6, %v1555
        %v1557 = vrot.slane %v1495, %v1556
        %v1558 = vlaneseq
        %v1559 = vshrl.u32 %v1558, 7
        %v1560 = vsub.s32 7, %v1559
        %v1561 = vrot.slane %v1495, %v1560
        %v1578 = vmul.f32 %v1137, %v1501
        %v1579 = vmul.f32 %v1139, %v1501
        %v1580 = vmul.f32 %v1141, %v1505
        %v1581 = vmul.f32 %v1143, %v1505
        %v1582 = vmul.f32 %v1145, %v1509
        %v1583 = vmul.f32 %v1147, %v1509
        %v1584 = vmul.f32 %v1149, %v1513
        %v1585 = vmul.f32 %v1151, %v1513
        %v1586 = vmul.f32 %v1153, %v1517
        %v1587 = vmul.f32 %v1155, %v1517
        %v1588 = vmul.f32 %v1157, %v1521
        %v1589 = vmul.f32 %v1159, %v1521
        %v1590 = vmul.f32 %v1161, %v1525
        %v1591 = vmul.f32 %v1163, %v1525
        %v1592 = vmul.f32 %v1165, %v1529
        %v1593 = vmul.f32 %v1167, %v1529
        %v1594 = vmul.f32 %v1169, %v1533
        %v1595 = vmul.f32 %v1171, %v1533
        %v1596 = vmul.f32 %v1173, %v1537
        %v1597 = vmul.f32 %v1175, %v1537
        %v1598 = vmul.f32 %v1177, %v1541
        %v1599 = vmul.f32 %v1179, %v1541
        %v1600 = vmul.f32 %v1181, %v1545
        %v1601 = vmul.f32 %v1183, %v1545
        %v1602 = vmul.f32 %v1185, %v1549
        %v1603 = vmul.f32 %v1187, %v1549
        %v1604 = vmul.f32 %v1189, %v1553
        %v1605 = vmul.f32 %v1191, %v1553
        %v1606 = vmul.f32 %v1193, %v1557
        %v1607 = vmul.f32 %v1195, %v1557
        %v1608 = vmul.f32 %v1197, %v1561
        %v1609 = vmul.f32 %v1199, %v1561
        %1642 = vset.pattern.permute.xlu0 0
        %1643 = vperm.xlu0 %1642, %v1578
        %v1644 = vpop.permute.xlu0 %1643
        %1645 = vset.pattern.permute.xlu0 0
        %1646 = vperm.xlu0 %1645, %v1579
        %v1647 = vpop.permute.xlu0 %1646
        %1648 = vset.pattern.permute.xlu0 0
        %1649 = vperm.xlu0 %1648, %v1580
        %v1650 = vpop.permute.xlu0 %1649
        %1651 = vset.pattern.permute.xlu0 0
        %1652 = vperm.xlu0 %1651, %v1581
        %v1653 = vpop.permute.xlu0 %1652
        %1654 = vset.pattern.permute.xlu0 0
        %1655 = vperm.xlu0 %1654, %v1582
        %v1656 = vpop.permute.xlu0 %1655
        %1657 = vset.pattern.permute.xlu0 0
        %1658 = vperm.xlu0 %1657, %v1583
        %v1659 = vpop.permute.xlu0 %1658
        %1660 = vset.pattern.permute.xlu0 0
        %1661 = vperm.xlu0 %1660, %v1584
        %v1662 = vpop.permute.xlu0 %1661
        %1663 = vset.pattern.permute.xlu0 0
        %1664 = vperm.xlu0 %1663, %v1585
        %v1665 = vpop.permute.xlu0 %1664
        %1666 = vset.pattern.permute.xlu0 0
        %1667 = vperm.xlu0 %1666, %v1586
        %v1668 = vpop.permute.xlu0 %1667
        %1669 = vset.pattern.permute.xlu0 0
        %1670 = vperm.xlu0 %1669, %v1587
        %v1671 = vpop.permute.xlu0 %1670
        %1672 = vset.pattern.permute.xlu0 0
        %1673 = vperm.xlu0 %1672, %v1588
        %v1674 = vpop.permute.xlu0 %1673
        %1675 = vset.pattern.permute.xlu0 0
        %1676 = vperm.xlu0 %1675, %v1589
        %v1677 = vpop.permute.xlu0 %1676
        %1678 = vset.pattern.permute.xlu0 0
        %1679 = vperm.xlu0 %1678, %v1590
        %v1680 = vpop.permute.xlu0 %1679
        %1681 = vset.pattern.permute.xlu0 0
        %1682 = vperm.xlu0 %1681, %v1591
        %v1683 = vpop.permute.xlu0 %1682
        %1684 = vset.pattern.permute.xlu0 0
        %1685 = vperm.xlu0 %1684, %v1592
        %v1686 = vpop.permute.xlu0 %1685
        %1687 = vset.pattern.permute.xlu0 0
        %1688 = vperm.xlu0 %1687, %v1593
        %v1689 = vpop.permute.xlu0 %1688
        %1690 = vset.pattern.permute.xlu0 0
        %1691 = vperm.xlu0 %1690, %v1594
        %v1692 = vpop.permute.xlu0 %1691
        %1693 = vset.pattern.permute.xlu0 0
        %1694 = vperm.xlu0 %1693, %v1595
        %v1695 = vpop.permute.xlu0 %1694
        %1696 = vset.pattern.permute.xlu0 0
        %1697 = vperm.xlu0 %1696, %v1596
        %v1698 = vpop.permute.xlu0 %1697
        %1699 = vset.pattern.permute.xlu0 0
        %1700 = vperm.xlu0 %1699, %v1597
        %v1701 = vpop.permute.xlu0 %1700
        %1702 = vset.pattern.permute.xlu0 0
        %1703 = vperm.xlu0 %1702, %v1598
        %v1704 = vpop.permute.xlu0 %1703
        %1705 = vset.pattern.permute.xlu0 0
        %1706 = vperm.xlu0 %1705, %v1599
        %v1707 = vpop.permute.xlu0 %1706
        %1708 = vset.pattern.permute.xlu0 0
        %1709 = vperm.xlu0 %1708, %v1600
        %v1710 = vpop.permute.xlu0 %1709
        %1711 = vset.pattern.permute.xlu0 0
        %1712 = vperm.xlu0 %1711, %v1601
        %v1713 = vpop.permute.xlu0 %1712
        %1714 = vset.pattern.permute.xlu0 0
        %1715 = vperm.xlu0 %1714, %v1602
        %v1716 = vpop.permute.xlu0 %1715
        %1717 = vset.pattern.permute.xlu0 0
        %1718 = vperm.xlu0 %1717, %v1603
        %v1719 = vpop.permute.xlu0 %1718
        %1720 = vset.pattern.permute.xlu0 0
        %1721 = vperm.xlu0 %1720, %v1604
        %v1722 = vpop.permute.xlu0 %1721
        %1723 = vset.pattern.permute.xlu0 0
        %1724 = vperm.xlu0 %1723, %v1605
        %v1725 = vpop.permute.xlu0 %1724
        %1726 = vset.pattern.permute.xlu0 0
        %1727 = vperm.xlu0 %1726, %v1606
        %v1728 = vpop.permute.xlu0 %1727
        %1729 = vset.pattern.permute.xlu0 0
        %1730 = vperm.xlu0 %1729, %v1607
        %v1731 = vpop.permute.xlu0 %1730
        %1732 = vset.pattern.permute.xlu0 0
        %1733 = vperm.xlu0 %1732, %v1608
        %v1734 = vpop.permute.xlu0 %1733
        %1735 = vset.pattern.permute.xlu0 0
        %1736 = vperm.xlu0 %1735, %v1609
        %v1737 = vpop.permute.xlu0 %1736
        %v1738 = vlaneseq
        %v1739 = vshrl.u32 %v1738, 7
        %v1740 = vsub.s32 %v845, %v1739
        %v1741 = vrot.slane %v1644, %v1740
        %v1742 = vlaneseq
        %v1743 = vshrl.u32 %v1742, 7
        %v1744 = vsub.s32 %v850, %v1743
        %v1745 = vrot.slane %v1647, %v1744
        %v1746 = vsel %vm855, %v1745, %v1741
        %v1747 = vlaneseq
        %v1748 = vshrl.u32 %v1747, 7
        %v1749 = vsub.s32 %v845, %v1748
        %v1750 = vrot.slane %v1650, %v1749
        %v1751 = vlaneseq
        %v1752 = vshrl.u32 %v1751, 7
        %v1753 = vsub.s32 %v850, %v1752
        %v1754 = vrot.slane %v1653, %v1753
        %v1755 = vsel %vm855, %v1754, %v1750
        %v1756 = vlaneseq
        %v1757 = vshrl.u32 %v1756, 7
        %v1758 = vsub.s32 %v845, %v1757
        %v1759 = vrot.slane %v1656, %v1758
        %v1760 = vlaneseq
        %v1761 = vshrl.u32 %v1760, 7
        %v1762 = vsub.s32 %v850, %v1761
        %v1763 = vrot.slane %v1659, %v1762
        %v1764 = vsel %vm855, %v1763, %v1759
        %v1765 = vlaneseq
        %v1766 = vshrl.u32 %v1765, 7
        %v1767 = vsub.s32 %v845, %v1766
        %v1768 = vrot.slane %v1662, %v1767
        %v1769 = vlaneseq
        %v1770 = vshrl.u32 %v1769, 7
        %v1771 = vsub.s32 %v850, %v1770
        %v1772 = vrot.slane %v1665, %v1771
        %v1773 = vsel %vm855, %v1772, %v1768
        %v1774 = vlaneseq
        %v1775 = vshrl.u32 %v1774, 7
        %v1776 = vsub.s32 %v845, %v1775
        %v1777 = vrot.slane %v1668, %v1776
        %v1778 = vlaneseq
        %v1779 = vshrl.u32 %v1778, 7
        %v1780 = vsub.s32 %v850, %v1779
        %v1781 = vrot.slane %v1671, %v1780
        %v1782 = vsel %vm855, %v1781, %v1777
        %v1783 = vlaneseq
        %v1784 = vshrl.u32 %v1783, 7
        %v1785 = vsub.s32 %v845, %v1784
        %v1786 = vrot.slane %v1674, %v1785
        %v1787 = vlaneseq
        %v1788 = vshrl.u32 %v1787, 7
        %v1789 = vsub.s32 %v850, %v1788
        %v1790 = vrot.slane %v1677, %v1789
        %v1791 = vsel %vm855, %v1790, %v1786
        %v1792 = vlaneseq
        %v1793 = vshrl.u32 %v1792, 7
        %v1794 = vsub.s32 %v845, %v1793
        %v1795 = vrot.slane %v1680, %v1794
        %v1796 = vlaneseq
        %v1797 = vshrl.u32 %v1796, 7
        %v1798 = vsub.s32 %v850, %v1797
        %v1799 = vrot.slane %v1683, %v1798
        %v1800 = vsel %vm855, %v1799, %v1795
        %v1801 = vlaneseq
        %v1802 = vshrl.u32 %v1801, 7
        %v1803 = vsub.s32 %v845, %v1802
        %v1804 = vrot.slane %v1686, %v1803
        %v1805 = vlaneseq
        %v1806 = vshrl.u32 %v1805, 7
        %v1807 = vsub.s32 %v850, %v1806
        %v1808 = vrot.slane %v1689, %v1807
        %v1809 = vsel %vm855, %v1808, %v1804
        %v1810 = vlaneseq
        %v1811 = vshrl.u32 %v1810, 7
        %v1812 = vsub.s32 %v845, %v1811
        %v1813 = vrot.slane %v1692, %v1812
        %v1814 = vlaneseq
        %v1815 = vshrl.u32 %v1814, 7
        %v1816 = vsub.s32 %v850, %v1815
        %v1817 = vrot.slane %v1695, %v1816
        %v1818 = vsel %vm855, %v1817, %v1813
        %v1819 = vlaneseq
        %v1820 = vshrl.u32 %v1819, 7
        %v1821 = vsub.s32 %v845, %v1820
        %v1822 = vrot.slane %v1698, %v1821
        %v1823 = vlaneseq
        %v1824 = vshrl.u32 %v1823, 7
        %v1825 = vsub.s32 %v850, %v1824
        %v1826 = vrot.slane %v1701, %v1825
        %v1827 = vsel %vm855, %v1826, %v1822
        %v1828 = vlaneseq
        %v1829 = vshrl.u32 %v1828, 7
        %v1830 = vsub.s32 %v845, %v1829
        %v1831 = vrot.slane %v1704, %v1830
        %v1832 = vlaneseq
        %v1833 = vshrl.u32 %v1832, 7
        %v1834 = vsub.s32 %v850, %v1833
        %v1835 = vrot.slane %v1707, %v1834
        %v1836 = vsel %vm855, %v1835, %v1831
        %v1837 = vlaneseq
        %v1838 = vshrl.u32 %v1837, 7
        %v1839 = vsub.s32 %v845, %v1838
        %v1840 = vrot.slane %v1710, %v1839
        %v1841 = vlaneseq
        %v1842 = vshrl.u32 %v1841, 7
        %v1843 = vsub.s32 %v850, %v1842
        %v1844 = vrot.slane %v1713, %v1843
        %v1845 = vsel %vm855, %v1844, %v1840
        %v1846 = vlaneseq
        %v1847 = vshrl.u32 %v1846, 7
        %v1848 = vsub.s32 %v845, %v1847
        %v1849 = vrot.slane %v1716, %v1848
        %v1850 = vlaneseq
        %v1851 = vshrl.u32 %v1850, 7
        %v1852 = vsub.s32 %v850, %v1851
        %v1853 = vrot.slane %v1719, %v1852
        %v1854 = vsel %vm855, %v1853, %v1849
        %v1855 = vlaneseq
        %v1856 = vshrl.u32 %v1855, 7
        %v1857 = vsub.s32 %v845, %v1856
        %v1858 = vrot.slane %v1722, %v1857
        %v1859 = vlaneseq
        %v1860 = vshrl.u32 %v1859, 7
        %v1861 = vsub.s32 %v850, %v1860
        %v1862 = vrot.slane %v1725, %v1861
        %v1863 = vsel %vm855, %v1862, %v1858
        %v1864 = vlaneseq
        %v1865 = vshrl.u32 %v1864, 7
        %v1866 = vsub.s32 %v845, %v1865
        %v1867 = vrot.slane %v1728, %v1866
        %v1868 = vlaneseq
        %v1869 = vshrl.u32 %v1868, 7
        %v1870 = vsub.s32 %v850, %v1869
        %v1871 = vrot.slane %v1731, %v1870
        %v1872 = vsel %vm855, %v1871, %v1867
        %v1873 = vlaneseq
        %v1874 = vshrl.u32 %v1873, 7
        %v1875 = vsub.s32 %v845, %v1874
        %v1876 = vrot.slane %v1734, %v1875
        %v1877 = vlaneseq
        %v1878 = vshrl.u32 %v1877, 7
        %v1879 = vsub.s32 %v850, %v1878
        %v1880 = vrot.slane %v1737, %v1879
        %v1881 = vsel %vm855, %v1880, %v1876
        %v1882 = vsel %vm992, %v1755, %v1746
        %v1883 = vsel %vm994, %v1764, %v1882
        %v1884 = vsel %vm996, %v1773, %v1883
        %v1885 = vsel %vm998, %v1782, %v1884
        %v1886 = vsel %vm1000, %v1791, %v1885
        %v1887 = vsel %vm1002, %v1800, %v1886
        %v1888 = vsel %vm1004, %v1809, %v1887
        %v1889 = vsel %vm992, %v1827, %v1818
        %v1890 = vsel %vm994, %v1836, %v1889
        %v1891 = vsel %vm996, %v1845, %v1890
        %v1892 = vsel %vm998, %v1854, %v1891
        %v1893 = vsel %vm1000, %v1863, %v1892
        %v1894 = vsel %vm1002, %v1872, %v1893
        %v1895 = vsel %vm1004, %v1881, %v1894
        %1898 = vst.msk [vmem:[%s308] sm:$0xff] %vm1015, %v1888
        %1899 = vst.msk [vmem:[%s308 + $0x8] sm:$0xff] %vm1015, %v1895
        %v1900 = vunpack.c.l.bf16 %v317
        %v1901 = vunpack.c.l.bf16 %v318
        %v1902 = vunpack.c.l.bf16 %v319
        %v1903 = vunpack.c.l.bf16 %v320
        %v1904 = vunpack.c.l.bf16 %v321
        %v1905 = vunpack.c.l.bf16 %v322
        %v1906 = vunpack.c.l.bf16 %v323
        %v1907 = vunpack.c.l.bf16 %v324
        %v1908 = vunpack.c.l.bf16 %v325
        %v1909 = vunpack.c.l.bf16 %v326
        %v1910 = vunpack.c.l.bf16 %v327
        %v1911 = vunpack.c.l.bf16 %v328
        %v1912 = vunpack.c.l.bf16 %v329
        %v1913 = vunpack.c.l.bf16 %v330
        %v1914 = vunpack.c.l.bf16 %v331
        %v1915 = vunpack.c.l.bf16 %v332
        %v1916 = vunpack.c.l.bf16 %v333
        %v1917 = vunpack.c.l.bf16 %v334
        %v1918 = vunpack.c.l.bf16 %v335
        %v1919 = vunpack.c.l.bf16 %v336
        %v1920 = vunpack.c.l.bf16 %v337
        %v1921 = vunpack.c.l.bf16 %v338
        %v1922 = vunpack.c.l.bf16 %v339
        %v1923 = vunpack.c.l.bf16 %v340
        %v1924 = vunpack.c.l.bf16 %v341
        %v1925 = vunpack.c.l.bf16 %v342
        %v1926 = vunpack.c.l.bf16 %v343
        %v1927 = vunpack.c.l.bf16 %v344
        %v1928 = vunpack.c.l.bf16 %v345
        %v1929 = vunpack.c.l.bf16 %v346
        %v1930 = vunpack.c.l.bf16 %v347
        %v1931 = vunpack.c.l.bf16 %v348
        %v1964 = vmul.f32 %v1900, %v1644
        %v1965 = vmul.f32 %v1901, %v1647
        %v1966 = vmul.f32 %v1902, %v1650
        %v1967 = vmul.f32 %v1903, %v1653
        %v1968 = vmul.f32 %v1904, %v1656
        %v1969 = vmul.f32 %v1905, %v1659
        %v1970 = vmul.f32 %v1906, %v1662
        %v1971 = vmul.f32 %v1907, %v1665
        %v1972 = vmul.f32 %v1908, %v1668
        %v1973 = vmul.f32 %v1909, %v1671
        %v1974 = vmul.f32 %v1910, %v1674
        %v1975 = vmul.f32 %v1911, %v1677
        %v1976 = vmul.f32 %v1912, %v1680
        %v1977 = vmul.f32 %v1913, %v1683
        %v1978 = vmul.f32 %v1914, %v1686
        %v1979 = vmul.f32 %v1915, %v1689
        %v1980 = vmul.f32 %v1916, %v1692
        %v1981 = vmul.f32 %v1917, %v1695
        %v1982 = vmul.f32 %v1918, %v1698
        %v1983 = vmul.f32 %v1919, %v1701
        %v1984 = vmul.f32 %v1920, %v1704
        %v1985 = vmul.f32 %v1921, %v1707
        %v1986 = vmul.f32 %v1922, %v1710
        %v1987 = vmul.f32 %v1923, %v1713
        %v1988 = vmul.f32 %v1924, %v1716
        %v1989 = vmul.f32 %v1925, %v1719
        %v1990 = vmul.f32 %v1926, %v1722
        %v1991 = vmul.f32 %v1927, %v1725
        %v1992 = vmul.f32 %v1928, %v1728
        %v1993 = vmul.f32 %v1929, %v1731
        %v1994 = vmul.f32 %v1930, %v1734
        %v1995 = vmul.f32 %v1931, %v1737
        %v1996 = vadd.f32 %v1964, %v1965
        %v1997 = vrot.slane %v1996, 4
        %v1998 = vadd.f32 %v1996, %v1997
        %v1999 = vrot.slane %v1998, 2
        %v2000 = vadd.f32 %v1998, %v1999
        %v2001 = vrot.slane %v2000, 1
        %v2002 = vadd.f32 %v2000, %v2001
        %v2003 = vadd.f32 %v1966, %v1967
        %v2004 = vrot.slane %v2003, 4
        %v2005 = vadd.f32 %v2003, %v2004
        %v2006 = vrot.slane %v2005, 2
        %v2007 = vadd.f32 %v2005, %v2006
        %v2008 = vrot.slane %v2007, 1
        %v2009 = vadd.f32 %v2007, %v2008
        %v2010 = vadd.f32 %v1968, %v1969
        %v2011 = vrot.slane %v2010, 4
        %v2012 = vadd.f32 %v2010, %v2011
        %v2013 = vrot.slane %v2012, 2
        %v2014 = vadd.f32 %v2012, %v2013
        %v2015 = vrot.slane %v2014, 1
        %v2016 = vadd.f32 %v2014, %v2015
        %v2017 = vadd.f32 %v1970, %v1971
        %v2018 = vrot.slane %v2017, 4
        %v2019 = vadd.f32 %v2017, %v2018
        %v2020 = vrot.slane %v2019, 2
        %v2021 = vadd.f32 %v2019, %v2020
        %v2022 = vrot.slane %v2021, 1
        %v2023 = vadd.f32 %v2021, %v2022
        %v2024 = vadd.f32 %v1972, %v1973
        %v2025 = vrot.slane %v2024, 4
        %v2026 = vadd.f32 %v2024, %v2025
        %v2027 = vrot.slane %v2026, 2
        %v2028 = vadd.f32 %v2026, %v2027
        %v2029 = vrot.slane %v2028, 1
        %v2030 = vadd.f32 %v2028, %v2029
        %v2031 = vadd.f32 %v1974, %v1975
        %v2032 = vrot.slane %v2031, 4
        %v2033 = vadd.f32 %v2031, %v2032
        %v2034 = vrot.slane %v2033, 2
        %v2035 = vadd.f32 %v2033, %v2034
        %v2036 = vrot.slane %v2035, 1
        %v2037 = vadd.f32 %v2035, %v2036
        %v2038 = vadd.f32 %v1976, %v1977
        %v2039 = vrot.slane %v2038, 4
        %v2040 = vadd.f32 %v2038, %v2039
        %v2041 = vrot.slane %v2040, 2
        %v2042 = vadd.f32 %v2040, %v2041
        %v2043 = vrot.slane %v2042, 1
        %v2044 = vadd.f32 %v2042, %v2043
        %v2045 = vadd.f32 %v1978, %v1979
        %v2046 = vrot.slane %v2045, 4
        %v2047 = vadd.f32 %v2045, %v2046
        %v2048 = vrot.slane %v2047, 2
        %v2049 = vadd.f32 %v2047, %v2048
        %v2050 = vrot.slane %v2049, 1
        %v2051 = vadd.f32 %v2049, %v2050
        %v2052 = vadd.f32 %v1980, %v1981
        %v2053 = vrot.slane %v2052, 4
        %v2054 = vadd.f32 %v2052, %v2053
        %v2055 = vrot.slane %v2054, 2
        %v2056 = vadd.f32 %v2054, %v2055
        %v2057 = vrot.slane %v2056, 1
        %v2058 = vadd.f32 %v2056, %v2057
        %v2059 = vadd.f32 %v1982, %v1983
        %v2060 = vrot.slane %v2059, 4
        %v2061 = vadd.f32 %v2059, %v2060
        %v2062 = vrot.slane %v2061, 2
        %v2063 = vadd.f32 %v2061, %v2062
        %v2064 = vrot.slane %v2063, 1
        %v2065 = vadd.f32 %v2063, %v2064
        %v2066 = vadd.f32 %v1984, %v1985
        %v2067 = vrot.slane %v2066, 4
        %v2068 = vadd.f32 %v2066, %v2067
        %v2069 = vrot.slane %v2068, 2
        %v2070 = vadd.f32 %v2068, %v2069
        %v2071 = vrot.slane %v2070, 1
        %v2072 = vadd.f32 %v2070, %v2071
        %v2073 = vadd.f32 %v1986, %v1987
        %v2074 = vrot.slane %v2073, 4
        %v2075 = vadd.f32 %v2073, %v2074
        %v2076 = vrot.slane %v2075, 2
        %v2077 = vadd.f32 %v2075, %v2076
        %v2078 = vrot.slane %v2077, 1
        %v2079 = vadd.f32 %v2077, %v2078
        %v2080 = vadd.f32 %v1988, %v1989
        %v2081 = vrot.slane %v2080, 4
        %v2082 = vadd.f32 %v2080, %v2081
        %v2083 = vrot.slane %v2082, 2
        %v2084 = vadd.f32 %v2082, %v2083
        %v2085 = vrot.slane %v2084, 1
        %v2086 = vadd.f32 %v2084, %v2085
        %v2087 = vadd.f32 %v1990, %v1991
        %v2088 = vrot.slane %v2087, 4
        %v2089 = vadd.f32 %v2087, %v2088
        %v2090 = vrot.slane %v2089, 2
        %v2091 = vadd.f32 %v2089, %v2090
        %v2092 = vrot.slane %v2091, 1
        %v2093 = vadd.f32 %v2091, %v2092
        %v2094 = vadd.f32 %v1992, %v1993
        %v2095 = vrot.slane %v2094, 4
        %v2096 = vadd.f32 %v2094, %v2095
        %v2097 = vrot.slane %v2096, 2
        %v2098 = vadd.f32 %v2096, %v2097
        %v2099 = vrot.slane %v2098, 1
        %v2100 = vadd.f32 %v2098, %v2099
        %v2101 = vadd.f32 %v1994, %v1995
        %v2102 = vrot.slane %v2101, 4
        %v2103 = vadd.f32 %v2101, %v2102
        %v2104 = vrot.slane %v2103, 2
        %v2105 = vadd.f32 %v2103, %v2104
        %v2106 = vrot.slane %v2105, 1
        %v2107 = vadd.f32 %v2105, %v2106
        %v2108 = vpack.c.bf16 %v2002, %v2002
        %v2109 = vpack.c.bf16 %v2009, %v2009
        %v2110 = vpack.c.bf16 %v2016, %v2016
        %v2111 = vpack.c.bf16 %v2023, %v2023
        %v2112 = vpack.c.bf16 %v2030, %v2030
        %v2113 = vpack.c.bf16 %v2037, %v2037
        %v2114 = vpack.c.bf16 %v2044, %v2044
        %v2115 = vpack.c.bf16 %v2051, %v2051
        %v2116 = vpack.c.bf16 %v2058, %v2058
        %v2117 = vpack.c.bf16 %v2065, %v2065
        %v2118 = vpack.c.bf16 %v2072, %v2072
        %v2119 = vpack.c.bf16 %v2079, %v2079
        %v2120 = vpack.c.bf16 %v2086, %v2086
        %v2121 = vpack.c.bf16 %v2093, %v2093
        %v2122 = vpack.c.bf16 %v2100, %v2100
        %v2123 = vpack.c.bf16 %v2107, %v2107
        %v2124 = vld [vmem:[%s4] sm:$0xf]
        %v2125 = vld [vmem:[%s4 + $0x4] sm:$0xf]
        %v2126 = vld [vmem:[%s4 + $0x8] sm:$0xf]
        %v2127 = vld [vmem:[%s4 + $0xc] sm:$0xf]
        %v2128 = vld [vmem:[%s4 + $0x10] sm:$0xf]
        %v2129 = vld [vmem:[%s4 + $0x14] sm:$0xf]
        %v2130 = vld [vmem:[%s4 + $0x18] sm:$0xf]
        %v2131 = vld [vmem:[%s4 + $0x1c] sm:$0xf]
        %v2132 = vld [vmem:[%s4 + $0x20] sm:$0xf]
        %v2133 = vld [vmem:[%s4 + $0x24] sm:$0xf]
        %v2134 = vld [vmem:[%s4 + $0x28] sm:$0xf]
        %v2135 = vld [vmem:[%s4 + $0x2c] sm:$0xf]
        %v2136 = vld [vmem:[%s4 + $0x30] sm:$0xf]
        %v2137 = vld [vmem:[%s4 + $0x34] sm:$0xf]
        %v2138 = vld [vmem:[%s4 + $0x38] sm:$0xf]
        %v2139 = vld [vmem:[%s4 + $0x3c] sm:$0xf]
        %v2140 = vld [vmem:[%s5] sm:$0x1]
        %v2142 = vlaneseq
        %v2143 = vshrl.u32 %v2142, 7
        %v2144 = vsub.s32 0, %v2143
        %v2145 = vrot.slane %v2140, %v2144
        %v2163 = vunpack.c.l.b16 %v2108
        %v2164 = vunpack.c.l.b16 %v2109
        %v2165 = vunpack.c.l.b16 %v2110
        %v2166 = vunpack.c.l.b16 %v2111
        %v2167 = vunpack.c.l.b16 %v2112
        %v2168 = vunpack.c.l.b16 %v2113
        %v2169 = vunpack.c.l.b16 %v2114
        %v2170 = vunpack.c.l.b16 %v2115
        %v2171 = vunpack.c.l.b16 %v2116
        %v2172 = vunpack.c.l.b16 %v2117
        %v2173 = vunpack.c.l.b16 %v2118
        %v2174 = vunpack.c.l.b16 %v2119
        %v2175 = vunpack.c.l.b16 %v2120
        %v2176 = vunpack.c.l.b16 %v2121
        %v2177 = vunpack.c.l.b16 %v2122
        %v2178 = vunpack.c.l.b16 %v2123
        %v2179 = vsel %vm992, %v2164, %v2163
        %v2180 = vsel %vm994, %v2165, %v2179
        %v2181 = vsel %vm996, %v2166, %v2180
        %v2182 = vsel %vm998, %v2167, %v2181
        %v2183 = vsel %vm1000, %v2168, %v2182
        %v2184 = vsel %vm1002, %v2169, %v2183
        %v2185 = vsel %vm1004, %v2170, %v2184
        %v2186 = vsel %vm992, %v2172, %v2171
        %v2187 = vsel %vm994, %v2173, %v2186
        %v2188 = vsel %vm996, %v2174, %v2187
        %v2189 = vsel %vm998, %v2175, %v2188
        %v2190 = vsel %vm1000, %v2176, %v2189
        %v2191 = vsel %vm1002, %v2177, %v2190
        %v2192 = vsel %vm1004, %v2178, %v2191
        %v2193 = vpack.c.b16 %v2192, %v2185
        %v2211 = vunpack.c.l.b16 %v2124
        %v2212 = vunpack.c.l.b16 %v2125
        %v2213 = vunpack.c.l.b16 %v2126
        %v2214 = vunpack.c.l.b16 %v2127
        %v2215 = vunpack.c.l.b16 %v2128
        %v2216 = vunpack.c.l.b16 %v2129
        %v2217 = vunpack.c.l.b16 %v2130
        %v2218 = vunpack.c.l.b16 %v2131
        %v2219 = vunpack.c.l.b16 %v2132
        %v2220 = vunpack.c.l.b16 %v2133
        %v2221 = vunpack.c.l.b16 %v2134
        %v2222 = vunpack.c.l.b16 %v2135
        %v2223 = vunpack.c.l.b16 %v2136
        %v2224 = vunpack.c.l.b16 %v2137
        %v2225 = vunpack.c.l.b16 %v2138
        %v2226 = vunpack.c.l.b16 %v2139
        %v2227 = vpack.c.b16 %v2212, %v2211
        %v2228 = vpack.c.b16 %v2214, %v2213
        %v2229 = vpack.c.b16 %v2216, %v2215
        %v2230 = vpack.c.b16 %v2218, %v2217
        %v2231 = vpack.c.b16 %v2220, %v2219
        %v2232 = vpack.c.b16 %v2222, %v2221
        %v2233 = vpack.c.b16 %v2224, %v2223
        %v2234 = vpack.c.b16 %v2226, %v2225
        %2243 = vmatprep.subr.bf16.mxu0 0
        %2244 = vmatpush1.bf16.msra.mxu0 %v2227
        %2245 = vmatprep.subr.bf16.mxu0 0
        %2246 = vmatpush1.bf16.msra.mxu0 %v2228
        %2247 = vmatprep.subr.bf16.mxu0 0
        %2248 = vmatpush1.bf16.msra.mxu0 %v2229
        %2249 = vmatprep.subr.bf16.mxu0 0
        %2250 = vmatpush1.bf16.msra.mxu0 %v2230
        %2251 = vmatprep.subr.bf16.mxu0 0
        %2252 = vmatpush1.bf16.msra.mxu0 %v2231
        %2253 = vmatprep.subr.bf16.mxu0 0
        %2254 = vmatpush1.bf16.msra.mxu0 %v2232
        %2255 = vmatprep.subr.bf16.mxu0 0
        %2256 = vmatpush1.bf16.msra.mxu0 %v2233
        %2257 = vmatprep.subr.bf16.mxu0 0
        %2258 = vmatpush1.bf16.msra.mxu0 %v2234
        %2259 = vmatprep.subr.bf16.mxu0 0
        %2260 = vmatpush1.bf16.msra.mxu0 0
        %2261 = vmatprep.subr.bf16.mxu0 0
        %2262 = vmatpush1.bf16.msra.mxu0 0
        %2263 = vmatprep.subr.bf16.mxu0 0
        %2264 = vmatpush1.bf16.msra.mxu0 0
        %2265 = vmatprep.subr.bf16.mxu0 0
        %2266 = vmatpush1.bf16.msra.mxu0 0
        %2267 = vmatprep.subr.bf16.mxu0 0
        %2268 = vmatpush1.bf16.msra.mxu0 0
        %2269 = vmatprep.subr.bf16.mxu0 0
        %2270 = vmatpush1.bf16.msra.mxu0 0
        %2271 = vmatprep.subr.bf16.mxu0 0
        %2272 = vmatpush1.bf16.msra.mxu0 0
        %2273 = vmatprep.subr.bf16.mxu0 0
        %2274 = vmatpush1.bf16.msra.mxu0 0
        %2275 = vmatprep.mubr.bf16.mxu0 0
        %2276 = vmatmul.mubr.bf16.gmra.mrb[0].mxu0 %v2193
        %v2277 = vpop.f32.mrb[0].mxu0
        %v2278 = vadd.f32 %v2145, %v2277
        %v2279 = vpop.f32.mrb[0].mxu0
        %v2280 = vpop.f32.mrb[0].mxu0
        %v2281 = vadd.f32 %v2145, %v2280
        %v2282 = vpop.f32.mrb[0].mxu0
        %2283 = vdwg.mxu0
        %vm2284 = vcmask 64512
        %2285 = vst.msk [vmem:[%s314] sm:$0xff] %vm2284, %v2278
        %2286 = vst.msk [vmem:[%s314 + $0x8] sm:$0xff] %vm2284, %v2281
        %s2287 = smul.u32 2, %s22
        %p2288 = scmp.lt.s32.totalorder %s2287, 3
        %s2289 = scalar_select %p2288, %s2287, 3
        %s2290 = smul.addr %s2289, 8
        %s2291 = scalar_lea.vmem %s6, %s2290
        %s2292 = smul.u32 2, %s22
        %p2293 = scmp.lt.s32.totalorder %s2292, 3
        %s2294 = scalar_select %p2293, %s2292, 3
        %s2295 = smul.addr %s2294, 8
        %s2296 = scalar_lea.vmem %s7, %s2295
        // Predicated region
        $region49: #{tpu_custom_call.1} parent=43 // pred_check
          %p2297 = pneg %p171
        $region50: #{tpu_custom_call.1} parent=43 // pred_check_branch
          %2299 = sbr.rel (%p2297) target = $region52
        $region51: #{tpu_custom_call.1} parent=43 // pred_region
          %s2300 = smul.u32 2, %s22
        $region52: #{tpu_custom_call.1} parent=43 // pred_fallthru
          _
        // Predicated region
        $region53: #{tpu_custom_call.1} parent=43 // pred_check
          %p2301 = pneg %p197
        $region54: #{tpu_custom_call.1} parent=43 // pred_check_branch
          %2303 = sbr.rel (%p2301) target = $region56
        $region55: #{tpu_custom_call.1} parent=43 // pred_region
          %s2304 = smul.u32 2, %s22
        $region56: #{tpu_custom_call.1} parent=43 // pred_fallthru
          _
      $region44: #{tpu_custom_call.1} parent=5 // pred_fallthru
        _
      %p2305 = scmp.le.s32.totalorder 2, %s17
      // Predicated region
      $region57: #{tpu_custom_call.1} parent=5 // pred_check
        %p2306 = pneg %p2305
      $region58: #{tpu_custom_call.1} parent=5 // pred_check_branch
        %2308 = sbr.rel (%p2306) target = $region60
      $region59: #{tpu_custom_call.1} parent=5 // pred_region
        %s2309 = ssub.s32 %s17, 2
        // Predicated region
        $region61: #{tpu_custom_call.1} parent=59 // pred_check
          %p2310 = pneg %p177
        $region62: #{tpu_custom_call.1} parent=59 // pred_check_branch
          %2312 = sbr.rel (%p2310) target = $region64
        $region63: #{tpu_custom_call.1} parent=59 // pred_region
          %s2313 = smul.u32 2, %s23
          %p2314 = scmp.lt.s32.totalorder %s2313, 3
          %s2315 = scalar_select %p2314, %s2313, 3
          %s2316 = smul.addr %s2315, 8
          %s2317 = scalar_lea.vmem %s6, %s2316
        $region64: #{tpu_custom_call.1} parent=59 // pred_fallthru
          _
        // Predicated region
        $region65: #{tpu_custom_call.1} parent=59 // pred_check
          %p2318 = pneg %p203
        $region66: #{tpu_custom_call.1} parent=59 // pred_check_branch
          %2320 = sbr.rel (%p2318) target = $region68
        $region67: #{tpu_custom_call.1} parent=59 // pred_region
          %s2321 = smul.u32 2, %s23
          %p2322 = scmp.lt.s32.totalorder %s2321, 3
          %s2323 = scalar_select %p2322, %s2321, 3
          %s2324 = smul.addr %s2323, 8
          %s2325 = scalar_lea.vmem %s7, %s2324
        $region68: #{tpu_custom_call.1} parent=59 // pred_fallthru
          _
      $region60: #{tpu_custom_call.1} parent=5 // pred_fallthru
        _
    $region6: #{tpu_custom_call.1} parent=1 // loop_footer
      %s21 = sadd.s32 1, %s17
    $region7: #{tpu_custom_call.1} parent=1 // loop_footer_branch
      %16 = sbr.rel target = $region3
    $region8: #{tpu_custom_call.1} parent=1 // loop_exit
      _
    %2326 = vsyncpa [#allocation3], 1
    %s2327 = scalar_lea.sflag [#allocation3], 1
    %2328 = vsyncpa %s2327, 1

</llo_original>
